<compile_context>
chip_gen: v7x
topology: tpu7x:2x2x1
jax: 0.10.0
libtpu: 0.0.40
codegen_flags: <defaults>
</compile_context>

<pallas_src>
import functools

import jax
import jax.numpy as jnp
from jax.experimental import pallas as pl
from jax.experimental.pallas import tpu as pltpu


_LANE = 128               # lane width: feature dims padded to multiples of this
_ROW_TILE = 128           # row tile of the large-subgraph (tiled) fallback path
_FUSED_MAX_NODES = 2048   # single fused whole-stack kernel when n_pad <= this


def _rup(x, m):
    return (x + m - 1) // m * m


def _nbytes(arrays):
    return sum(int(a.size) * a.dtype.itemsize for a in arrays)


def _vmem_limit(nbytes):
    # Review item: set the scoped-VMEM limit explicitly.  Clamp to a range that
    # is safe from v5e (16 MiB scoped default, 128 MiB phys) to v7x (64 MiB phys).
    return int(min(max(3 * nbytes, 16 * 2**20), 48 * 2**20))


# ----------------------------------------------------------------------------
# Shared in-kernel math
# ----------------------------------------------------------------------------
def _hop_norm(hk, sk, ok, h_valid):
    """bias=='norm' of HighOrderAggregator: per-node mean / biased variance
    (torch.var(dim=1, unbiased=False)) over the valid channels of one hop.

    Channels >= h_valid are padding: hk is exactly 0 there and sk/ok are 0, so
    padded lanes stay exactly 0 in the output."""
    h_pad = hk.shape[-1]
    inv_h = 1.0 / float(h_valid)
    m = jnp.sum(hk, axis=1, keepdims=True) * inv_h            # padded channels are 0
    d = hk - m
    if h_valid != h_pad:                                      # mask pad out of the 2-pass var
        col = jax.lax.broadcasted_iota(jnp.int32, hk.shape, 1)
        d = jnp.where(col < h_valid, d, 0.0)
    var = jnp.sum(d * d, axis=1, keepdims=True) * inv_h + 1e-9
    return (hk - m) * sk * jax.lax.rsqrt(var) + ok


def _l2norm_classify(e0, e1, wc0, wc1, bc):
    """F.normalize(emb, p=2, dim=1) + order-0 classifier (act='I', bias='bias').

    emb = concat([e0, e1]) is never materialized: the classifier weight is
    split by hop halves instead (no lane concat)."""
    sumsq = (jnp.sum(e0 * e0, axis=1, keepdims=True)
             + jnp.sum(e1 * e1, axis=1, keepdims=True))
    inv = jax.lax.rsqrt(jnp.maximum(sumsq, 1e-24))            # == x / max(||x||, 1e-12)
    en0 = (e0 * inv).astype(jnp.bfloat16)
    en1 = (e1 * inv).astype(jnp.bfloat16)
    return (jnp.dot(en0, wc0, preferred_element_type=jnp.float32)
            + jnp.dot(en1, wc1, preferred_element_type=jnp.float32)
            + bc)


# ----------------------------------------------------------------------------
# Fused whole-stack kernel (small / medium subgraphs): one pallas_call,
# adjacency + intermediate activations stay resident in VMEM.
# ----------------------------------------------------------------------------
def _fused_stack_kernel(*refs, h_valids, h_pads):
    nl = len(h_valids)
    adj_ref, x_ref = refs[0], refs[1]
    wc_ref, bc_ref = refs[2 + 8 * nl], refs[3 + 8 * nl]
    out_ref = refs[4 + 8 * nl]

    adj = adj_ref[...]                       # bf16 (Np, Np); loaded once, reused per layer
    h = x_ref[...]                           # bf16 (Np, D0p)
    e0 = e1 = None
    for li in range(nl):
        (w0_ref, w1_ref, b0_ref, s0_ref, o0_ref,
         b1_ref, s1_ref, o1_ref) = refs[2 + 8 * li: 2 + 8 * (li + 1)]
        # hop-1 dense SpMM on the MXU (bf16 in, f32 accumulate)
        ah = jnp.dot(adj, h, preferred_element_type=jnp.float32).astype(jnp.bfloat16)
        # split per-hop matmuls (no block-diag zero blocks, no lhs lane concat)
        h0 = jnp.maximum(jnp.dot(h, w0_ref[...],
                                 preferred_element_type=jnp.float32) + b0_ref[...], 0.0)
        h1 = jnp.maximum(jnp.dot(ah, w1_ref[...],
                                 preferred_element_type=jnp.float32) + b1_ref[...], 0.0)
        n0 = _hop_norm(h0, s0_ref[...], o0_ref[...], h_valids[li])
        n1 = _hop_norm(h1, s1_ref[...], o1_ref[...], h_valids[li])
        if li + 1 < nl:
            # next layer's hop-0 input is concat([hop0, hop1]); one in-VMEM
            # relayout per layer, never an HBM round trip.
            h = jnp.concatenate([n0, n1], axis=1).astype(jnp.bfloat16)
        else:
            e0, e1 = n0, n1

    hp = h_pads[-1]
    out_ref[...] = _l2norm_classify(e0, e1,
                                    wc_ref[0:hp, :], wc_ref[hp:2 * hp, :],
                                    bc_ref[...])


def _run_fused(adj, x, layer_params, cls_params):
    n_pad = adj.shape[0]
    wc, bc = cls_params
    c_pad = wc.shape[1]

    args = [adj, x]
    for p in layer_params:
        args += [p["w0"], p["w1"], p["b0"], p["s0"], p["o0"],
                 p["b1"], p["s1"], p["o1"]]
    args += [wc, bc]

    kern = functools.partial(
        _fused_stack_kernel,
        h_valids=tuple(p["h_valid"] for p in layer_params),
        h_pads=tuple(p["h_pad"] for p in layer_params))

    return pl.pallas_call(
        kern,
        out_shape=jax.ShapeDtypeStruct((n_pad, c_pad), jnp.float32),
        grid_spec=pltpu.PrefetchScalarGridSpec(
            num_scalar_prefetch=0,
            grid=(1,),
            in_specs=[pl.BlockSpec(a.shape, lambda i: (0, 0)) for a in args],
            out_specs=pl.BlockSpec((n_pad, c_pad), lambda i: (0, 0)),
        ),
        compiler_params=pltpu.CompilerParams(
            dimension_semantics=("arbitrary",),
            vmem_limit_bytes=_vmem_limit(_nbytes(args) + n_pad * c_pad * 4),
        ),
    )(*args)


# ----------------------------------------------------------------------------
# Row-tiled per-layer kernels (large-subgraph fallback)
# ----------------------------------------------------------------------------
def _tiled_layer_body(adj_ref, x_ref, w0_ref, w1_ref, b0_ref, s0_ref, o0_ref,
                      b1_ref, s1_ref, o1_ref, *, tn, h_valid):
    i = pl.program_id(0)
    row0 = pl.multiple_of(i * tn, tn)
    x_tile = x_ref[pl.ds(row0, tn), :]                         # hop-0 rows of resident X
    ax = jnp.dot(adj_ref[...], x_ref[...],
                 preferred_element_type=jnp.float32).astype(jnp.bfloat16)
    h0 = jnp.maximum(jnp.dot(x_tile, w0_ref[...],
                             preferred_element_type=jnp.float32) + b0_ref[...], 0.0)
    h1 = jnp.maximum(jnp.dot(ax, w1_ref[...],
                             preferred_element_type=jnp.float32) + b1_ref[...], 0.0)
    n0 = _hop_norm(h0, s0_ref[...], o0_ref[...], h_valid)
    n1 = _hop_norm(h1, s1_ref[...], o1_ref[...], h_valid)
    return n0, n1


def _tiled_layer_kernel(adj_ref, x_ref, w0_ref, w1_ref, b0_ref, s0_ref, o0_ref,
                        b1_ref, s1_ref, o1_ref, out_ref, *, tn, h_pad, h_valid):
    n0, n1 = _tiled_layer_body(adj_ref, x_ref, w0_ref, w1_ref, b0_ref, s0_ref,
                               o0_ref, b1_ref, s1_ref, o1_ref,
                               tn=tn, h_valid=h_valid)
    # store halves directly (both 128-lane aligned -> unmasked vst); no lane concat
    out_ref[:, 0:h_pad] = n0.astype(out_ref.dtype)
    out_ref[:, h_pad:2 * h_pad] = n1.astype(out_ref.dtype)


def _tiled_layer_cls_kernel(adj_ref, x_ref, w0_ref, w1_ref, b0_ref, s0_ref, o0_ref,
                            b1_ref, s1_ref, o1_ref, wc_ref, bc_ref, out_ref,
                            *, tn, h_pad, h_valid):
    """Last aggregator layer fused with F.normalize + classifier."""
    n0, n1 = _tiled_layer_body(adj_ref, x_ref, w0_ref, w1_ref, b0_ref, s0_ref,
                               o0_ref, b1_ref, s1_ref, o1_ref,
                               tn=tn, h_valid=h_valid)
    out_ref[...] = _l2norm_classify(n0, n1,
                                    wc_ref[0:h_pad, :], wc_ref[h_pad:2 * h_pad, :],
                                    bc_ref[...])


def _run_tiled_layer(adj, x, p, *, tn, classifier=None):
    n_pad, dp = x.shape
    hp, hv = p["h_pad"], p["h_valid"]
    grid = (n_pad // tn,)

    def cspec(a):
        # grid-invariant full block
        # TODO(synk): pipeline_mode=pl.Buffered(1) on these invariant blocks would
        # reclaim the pointless double buffer (matters on v7x's 64 MiB VMEM).
        return pl.BlockSpec(a.shape, lambda i: (0, 0))

    consts = [x, p["w0"], p["w1"], p["b0"], p["s0"], p["o0"],
              p["b1"], p["s1"], p["o1"]]
    in_specs = ([pl.BlockSpec((tn, n_pad), lambda i: (i, 0))]     # adjacency row tile
                + [cspec(a) for a in consts])
    args = [adj] + consts

    if classifier is None:
        kern = functools.partial(_tiled_layer_kernel, tn=tn, h_pad=hp, h_valid=hv)
        out_dim, out_dtype = 2 * hp, jnp.bfloat16
    else:
        wc, bc = classifier
        in_specs += [cspec(wc), cspec(bc)]
        args += [wc, bc]
        kern = functools.partial(_tiled_layer_cls_kernel, tn=tn, h_pad=hp, h_valid=hv)
        out_dim, out_dtype = wc.shape[1], jnp.float32

    out_item = 2 if out_dtype == jnp.bfloat16 else 4
    step_bytes = (2 * tn * n_pad * adj.dtype.itemsize            # double-buffered adj tile
                  + _nbytes(args[1:])                            # resident consts (+Wc/bc)
                  + 2 * tn * out_dim * out_item)                 # double-buffered out tile

    return pl.pallas_call(
        kern,
        out_shape=jax.ShapeDtypeStruct((n_pad, out_dim), out_dtype),
        grid_spec=pltpu.PrefetchScalarGridSpec(
            num_scalar_prefetch=0,
            grid=grid,
            in_specs=in_specs,
            out_specs=pl.BlockSpec((tn, out_dim), lambda i: (i, 0)),
        ),
        compiler_params=pltpu.CompilerParams(
            dimension_semantics=("parallel",),
            vmem_limit_bytes=_vmem_limit(step_bytes),
        ),
    )(*args)


# ----------------------------------------------------------------------------
# Forward wrapper
# ----------------------------------------------------------------------------
def graphsaint_forward(node_subgraph, adj_subgraph, feat_full, label_full,
                       layer_params, cls_params, force_path=None):
    # Gather subgraph features / labels (glue).
    feat_subg = jnp.take(feat_full, node_subgraph, axis=0)
    label_subg = jnp.take(label_full, node_subgraph, axis=0)
    label_subg_converted = label_subg          # sigmoid loss -> labels unchanged

    n, din = feat_subg.shape
    din_pad = layer_params[0]["din_pad"]
    n_pad = _rup(n, _LANE)                     # lane-dense adj columns, tiled grid divides

    # Pad to lane-aligned shapes; matmul inputs in bf16 (accumulation stays f32).
    x = jnp.zeros((n_pad, din_pad), jnp.bfloat16)
    x = x.at[:n, :din].set(feat_subg.astype(jnp.bfloat16))
    # TODO(synk): at realistic subgraph sizes, densify/pad the adjacency outside the
    # per-minibatch jitted path (or mask the ragged edge in-kernel), stream it as
    # int8/fp8 0-1 with 1/deg folded into the norm scale, or go block-CSR via
    # scalar prefetch -- all review items not needed at demo shapes.
    adj = jnp.zeros((n_pad, n_pad), jnp.bfloat16)
    adj = adj.at[:n, :n].set(adj_subgraph.astype(jnp.bfloat16))

    if force_path is None:
        use_fused = n_pad <= _FUSED_MAX_NODES
    else:
        use_fused = (force_path == "fused")

    if use_fused:
        # Whole stack (all aggregator layers + L2 normalize + classifier) in one
        # pallas_call: adjacency and intermediate activations never leave VMEM.
        pred_pad = _run_fused(adj, x, layer_params, cls_params)
    else:
        # Large-subgraph fallback: one row-tiled pallas_call per layer.
        # TODO(synk): add a K-reduction grid axis over adjacency columns (VMEM
        # accumulator) instead of the resident full-X block for very large
        # subgraphs on v7x's 64 MiB VMEM.
        h = x
        for p in layer_params[:-1]:
            h = _run_tiled_layer(adj, h, p, tn=_ROW_TILE)
        pred_pad = _run_tiled_layer(adj, h, layer_params[-1], tn=_ROW_TILE,
                                    classifier=cls_params)

    num_classes = label_full.shape[1]
    return pred_pad[:n, :num_classes], label_subg, label_subg_converted


# ----------------------------------------------------------------------------
# Deterministic parameter init (xavier-uniform weights), lane-padded layout.
# Padded weight/bias/scale/offset entries are zero so padded lanes stay exactly
# zero through relu / norm / L2-normalize / classifier.
# ----------------------------------------------------------------------------
def _xavier(key, fan_in, fan_out):
    a = (6.0 / (fan_in + fan_out)) ** 0.5
    return jax.random.uniform(key, (fan_in, fan_out), jnp.float32, -a, a)


def make_params(key, feat_dim, dims_weight, num_classes):
    layer_params = []
    # segments: (logical_row_start, padded_row_start, length) of valid input rows
    in_segments = [(0, 0, feat_dim)]
    din_pad = _rup(feat_dim, _LANE)

    for (din, h) in dims_weight:
        key, k0, k1 = jax.random.split(key, 3)
        h_pad = _rup(h, _LANE)

        def scatter_rows(w):
            wp = jnp.zeros((din_pad, h_pad), jnp.float32)
            for (lo, po, ln) in in_segments:
                wp = wp.at[po:po + ln, :h].set(w[lo:lo + ln, :])
            return wp.astype(jnp.bfloat16)

        def pad_vec(v):
            return jnp.zeros((1, h_pad), jnp.float32).at[0, :h].set(v)

        layer_params.append(dict(
            w0=scatter_rows(_xavier(k0, din, h)),
            w1=scatter_rows(_xavier(k1, din, h)),
            b0=pad_vec(jnp.zeros((h,), jnp.float32)),
            s0=pad_vec(jnp.ones((h,), jnp.float32)),
            o0=pad_vec(jnp.zeros((h,), jnp.float32)),
            b1=pad_vec(jnp.zeros((h,), jnp.float32)),
            s1=pad_vec(jnp.ones((h,), jnp.float32)),
            o1=pad_vec(jnp.zeros((h,), jnp.float32)),
            h_valid=h, h_pad=h_pad, din_pad=din_pad,
        ))
        # next layer consumes concat([hop0, hop1]) in padded layout
        in_segments = [(0, 0, h), (h, h_pad, h)]
        din_pad = 2 * h_pad

    # classifier: order=0 / act='I' / bias='bias' on the L2-normalized embedding
    key, kc = jax.random.split(key)
    final_dim = 2 * dims_weight[-1][1]       # 'concat' with order=1 doubles dims
    wc = _xavier(kc, final_dim, num_classes)
    c_pad = _rup(num_classes, _LANE)
    wcp = jnp.zeros((din_pad, c_pad), jnp.float32)
    for (lo, po, ln) in in_segments:
        wcp = wcp.at[po:po + ln, :num_classes].set(wc[lo:lo + ln, :])
    bcp = jnp.zeros((1, c_pad), jnp.float32)
    return layer_params, (wcp.astype(jnp.bfloat16), bcp)


# ----------------------------------------------------------------------------
if __name__ == "__main__":
    key = jax.random.PRNGKey(0)

    num_nodes_full = 512      # full-graph node count
    feat_dim = 32             # input feature dim
    hidden = 32               # hidden dim per hop
    num_classes = 8
    n_sub = 200               # subgraph size (pads to 256 -> tiled grid has 2 steps)

    # arch: two HighOrderAggregator layers, order=1 / concat / relu / norm.
    # dims_feat = [32, 64, 64]; dims_weight = [(32, 32), (64, 32)]
    dims_weight = [(feat_dim, hidden), (2 * hidden, hidden)]

    k_feat, k_lab, k_adj, k_par = jax.random.split(key, 4)
    feat_full = jax.random.normal(k_feat, (num_nodes_full, feat_dim), jnp.float32)
    label_full = (jax.random.uniform(k_lab, (num_nodes_full, num_classes)) > 0.5
                  ).astype(jnp.float32)

    node_subgraph = jnp.arange(n_sub, dtype=jnp.int32)

    # Dense row-normalized adjacency for the subgraph (self-loops included).
    a = (jax.random.uniform(k_adj, (n_sub, n_sub)) > 0.9).astype(jnp.float32)
    a = a + jnp.eye(n_sub, dtype=jnp.float32)
    adj_subgraph = a / jnp.sum(a, axis=1, keepdims=True)

    layer_params, cls_params = make_params(k_par, feat_dim, dims_weight, num_classes)

    fwd_fused = jax.jit(functools.partial(
        graphsaint_forward,
        feat_full=feat_full, label_full=label_full,
        layer_params=layer_params, cls_params=cls_params, force_path="fused"))
    fwd_tiled = jax.jit(functools.partial(
        graphsaint_forward,
        feat_full=feat_full, label_full=label_full,
        layer_params=layer_params, cls_params=cls_params, force_path="tiled"))

    # primary (fused whole-stack) path
    pred, label_subg, label_conv = fwd_fused(node_subgraph, adj_subgraph)
    jax.block_until_ready((pred, label_subg, label_conv))

    # large-subgraph fallback path, used here as a self-consistency check
    pred_t, _, _ = fwd_tiled(node_subgraph, adj_subgraph)
    jax.block_until_ready(pred_t)

    assert pred.shape == (n_sub, num_classes)
    assert label_subg.shape == (n_sub, num_classes)
    assert bool(jnp.all(jnp.isfinite(pred)))
    assert bool(jnp.allclose(pred, pred_t, atol=1e-3, rtol=1e-3))
    print("KERNEL_OK")
</pallas_src>

<mosaic_0001>
module attributes {stable_mosaic.version = 11 : i64} {
  func.func @_fused_stack_kernel(%arg0: i32, %arg1: memref<256x256xbf16, #tpu.memory_space<vmem>>, %arg2: memref<256x128xbf16, #tpu.memory_space<vmem>>, %arg3: memref<128x128xbf16, #tpu.memory_space<vmem>>, %arg4: memref<128x128xbf16, #tpu.memory_space<vmem>>, %arg5: memref<1x128xf32, #tpu.memory_space<vmem>>, %arg6: memref<1x128xf32, #tpu.memory_space<vmem>>, %arg7: memref<1x128xf32, #tpu.memory_space<vmem>>, %arg8: memref<1x128xf32, #tpu.memory_space<vmem>>, %arg9: memref<1x128xf32, #tpu.memory_space<vmem>>, %arg10: memref<1x128xf32, #tpu.memory_space<vmem>>, %arg11: memref<256x128xbf16, #tpu.memory_space<vmem>>, %arg12: memref<256x128xbf16, #tpu.memory_space<vmem>>, %arg13: memref<1x128xf32, #tpu.memory_space<vmem>>, %arg14: memref<1x128xf32, #tpu.memory_space<vmem>>, %arg15: memref<1x128xf32, #tpu.memory_space<vmem>>, %arg16: memref<1x128xf32, #tpu.memory_space<vmem>>, %arg17: memref<1x128xf32, #tpu.memory_space<vmem>>, %arg18: memref<1x128xf32, #tpu.memory_space<vmem>>, %arg19: memref<256x128xbf16, #tpu.memory_space<vmem>>, %arg20: memref<1x128xf32, #tpu.memory_space<vmem>>, %arg21: memref<256x128xf32, #tpu.memory_space<vmem>>) attributes {dimension_semantics = [#tpu.dimension_semantics<arbitrary>], iteration_bounds = array<i64: 1>, scalar_prefetch = 0 : i64, scratch_operands = 0 : i64, tpu.core_type = #tpu.core_type<tc>, window_params = [{pipeline_mode = #tpu.pipeline_mode<synchronous>, transform_indices = @transform_0, window_bounds = array<i64: 256, 256>}, {pipeline_mode = #tpu.pipeline_mode<synchronous>, transform_indices = @transform_1, window_bounds = array<i64: 256, 128>}, {pipeline_mode = #tpu.pipeline_mode<synchronous>, transform_indices = @transform_2, window_bounds = array<i64: 128, 128>}, {pipeline_mode = #tpu.pipeline_mode<synchronous>, transform_indices = @transform_3, window_bounds = array<i64: 128, 128>}, {pipeline_mode = #tpu.pipeline_mode<synchronous>, transform_indices = @transform_4, window_bounds = array<i64: 1, 128>}, {pipeline_mode = #tpu.pipeline_mode<synchronous>, transform_indices = @transform_5, window_bounds = array<i64: 1, 128>}, {pipeline_mode = #tpu.pipeline_mode<synchronous>, transform_indices = @transform_6, window_bounds = array<i64: 1, 128>}, {pipeline_mode = #tpu.pipeline_mode<synchronous>, transform_indices = @transform_7, window_bounds = array<i64: 1, 128>}, {pipeline_mode = #tpu.pipeline_mode<synchronous>, transform_indices = @transform_8, window_bounds = array<i64: 1, 128>}, {pipeline_mode = #tpu.pipeline_mode<synchronous>, transform_indices = @transform_9, window_bounds = array<i64: 1, 128>}, {pipeline_mode = #tpu.pipeline_mode<synchronous>, transform_indices = @transform_10, window_bounds = array<i64: 256, 128>}, {pipeline_mode = #tpu.pipeline_mode<synchronous>, transform_indices = @transform_11, window_bounds = array<i64: 256, 128>}, {pipeline_mode = #tpu.pipeline_mode<synchronous>, transform_indices = @transform_12, window_bounds = array<i64: 1, 128>}, {pipeline_mode = #tpu.pipeline_mode<synchronous>, transform_indices = @transform_13, window_bounds = array<i64: 1, 128>}, {pipeline_mode = #tpu.pipeline_mode<synchronous>, transform_indices = @transform_14, window_bounds = array<i64: 1, 128>}, {pipeline_mode = #tpu.pipeline_mode<synchronous>, transform_indices = @transform_15, window_bounds = array<i64: 1, 128>}, {pipeline_mode = #tpu.pipeline_mode<synchronous>, transform_indices = @transform_16, window_bounds = array<i64: 1, 128>}, {pipeline_mode = #tpu.pipeline_mode<synchronous>, transform_indices = @transform_17, window_bounds = array<i64: 1, 128>}, {pipeline_mode = #tpu.pipeline_mode<synchronous>, transform_indices = @transform_18, window_bounds = array<i64: 256, 128>}, {pipeline_mode = #tpu.pipeline_mode<synchronous>, transform_indices = @transform_19, window_bounds = array<i64: 1, 128>}, {pipeline_mode = #tpu.pipeline_mode<synchronous>, transform_indices = @transform_20, window_bounds = array<i64: 256, 128>}]} {
    %c0 = arith.constant 0 : index
    %c0_0 = arith.constant 0 : index
    %0 = vector.load %arg1[%c0, %c0_0] : memref<256x256xbf16, #tpu.memory_space<vmem>>, vector<256x256xbf16>
    %c0_1 = arith.constant 0 : index
    %c0_2 = arith.constant 0 : index
    %1 = vector.load %arg2[%c0_1, %c0_2] : memref<256x128xbf16, #tpu.memory_space<vmem>>, vector<256x128xbf16>
    %cst = arith.constant dense<0.000000e+00> : vector<256x128xf32>
    %2 = tpu.matmul %0, %1, %cst {dimension_numbers = #tpu.dot_dimension_numbers<[1], [0], [0], [1], [0, 0, 1, 1], [], []>} : vector<256x256xbf16>, vector<256x128xbf16>, vector<256x128xf32> -> vector<256x128xf32>
    %3 = arith.truncf %2 : vector<256x128xf32> to vector<256x128xbf16>
    %c0_3 = arith.constant 0 : index
    %c0_4 = arith.constant 0 : index
    %4 = vector.load %arg3[%c0_3, %c0_4] : memref<128x128xbf16, #tpu.memory_space<vmem>>, vector<128x128xbf16>
    %cst_5 = arith.constant dense<0.000000e+00> : vector<256x128xf32>
    %5 = tpu.matmul %1, %4, %cst_5 {dimension_numbers = #tpu.dot_dimension_numbers<[1], [0], [0], [1], [0, 0, 1, 1], [], []>} : vector<256x128xbf16>, vector<128x128xbf16>, vector<256x128xf32> -> vector<256x128xf32>
    %c0_6 = arith.constant 0 : index
    %c0_7 = arith.constant 0 : index
    %6 = vector.load %arg5[%c0_6, %c0_7] : memref<1x128xf32, #tpu.memory_space<vmem>>, vector<1x128xf32>
    %7 = vector.broadcast %6 : vector<1x128xf32> to vector<256x128xf32>
    %8 = arith.addf %5, %7 : vector<256x128xf32>
    %cst_8 = arith.constant 0.000000e+00 : f32
    %9 = vector.broadcast %cst_8 : f32 to vector<256x128xf32>
    %10 = arith.maximumf %8, %9 : vector<256x128xf32>
    %c0_9 = arith.constant 0 : index
    %c0_10 = arith.constant 0 : index
    %11 = vector.load %arg4[%c0_9, %c0_10] : memref<128x128xbf16, #tpu.memory_space<vmem>>, vector<128x128xbf16>
    %cst_11 = arith.constant dense<0.000000e+00> : vector<256x128xf32>
    %12 = tpu.matmul %3, %11, %cst_11 {dimension_numbers = #tpu.dot_dimension_numbers<[1], [0], [0], [1], [0, 0, 1, 1], [], []>} : vector<256x128xbf16>, vector<128x128xbf16>, vector<256x128xf32> -> vector<256x128xf32>
    %c0_12 = arith.constant 0 : index
    %c0_13 = arith.constant 0 : index
    %13 = vector.load %arg8[%c0_12, %c0_13] : memref<1x128xf32, #tpu.memory_space<vmem>>, vector<1x128xf32>
    %14 = vector.broadcast %13 : vector<1x128xf32> to vector<256x128xf32>
    %15 = arith.addf %12, %14 : vector<256x128xf32>
    %cst_14 = arith.constant 0.000000e+00 : f32
    %16 = vector.broadcast %cst_14 : f32 to vector<256x128xf32>
    %17 = arith.maximumf %15, %16 : vector<256x128xf32>
    %c0_15 = arith.constant 0 : index
    %c0_16 = arith.constant 0 : index
    %18 = vector.load %arg6[%c0_15, %c0_16] : memref<1x128xf32, #tpu.memory_space<vmem>>, vector<1x128xf32>
    %c0_17 = arith.constant 0 : index
    %c0_18 = arith.constant 0 : index
    %19 = vector.load %arg7[%c0_17, %c0_18] : memref<1x128xf32, #tpu.memory_space<vmem>>, vector<1x128xf32>
    %cst_19 = arith.constant dense<0.000000e+00> : vector<256xf32>
    %20 = vector.multi_reduction <add>, %10, %cst_19 [1] : vector<256x128xf32> to vector<256xf32>
    %21 = vector.shape_cast %20 : vector<256xf32> to vector<256x1xf32>
    %cst_20 = arith.constant 3.125000e-02 : f32
    %22 = vector.broadcast %cst_20 : f32 to vector<256x1xf32>
    %23 = arith.mulf %21, %22 : vector<256x1xf32>
    %24 = vector.broadcast %23 : vector<256x1xf32> to vector<256x128xf32>
    %25 = arith.subf %10, %24 : vector<256x128xf32>
    %26 = tpu.iota {dimensions = array<i32: 1>} : vector<256x128xi32>
    %c32_i32 = arith.constant 32 : i32
    %27 = vector.broadcast %c32_i32 : i32 to vector<256x128xi32>
    %28 = arith.cmpi slt, %26, %27 : vector<256x128xi32>
    %cst_21 = arith.constant 0.000000e+00 : f32
    %29 = vector.broadcast %cst_21 : f32 to vector<256x128xf32>
    %30 = arith.select %28, %25, %29 : vector<256x128xi1>, vector<256x128xf32>
    %31 = arith.mulf %30, %30 : vector<256x128xf32>
    %cst_22 = arith.constant dense<0.000000e+00> : vector<256xf32>
    %32 = vector.multi_reduction <add>, %31, %cst_22 [1] : vector<256x128xf32> to vector<256xf32>
    %33 = vector.shape_cast %32 : vector<256xf32> to vector<256x1xf32>
    %cst_23 = arith.constant 3.125000e-02 : f32
    %34 = vector.broadcast %cst_23 : f32 to vector<256x1xf32>
    %35 = arith.mulf %33, %34 : vector<256x1xf32>
    %cst_24 = arith.constant 9.99999971E-10 : f32
    %36 = vector.broadcast %cst_24 : f32 to vector<256x1xf32>
    %37 = arith.addf %35, %36 : vector<256x1xf32>
    %38 = vector.broadcast %23 : vector<256x1xf32> to vector<256x128xf32>
    %39 = arith.subf %10, %38 : vector<256x128xf32>
    %40 = vector.broadcast %18 : vector<1x128xf32> to vector<256x128xf32>
    %41 = arith.mulf %39, %40 : vector<256x128xf32>
    %42 = math.rsqrt %37 : vector<256x1xf32>
    %43 = vector.broadcast %42 : vector<256x1xf32> to vector<256x128xf32>
    %44 = arith.mulf %41, %43 : vector<256x128xf32>
    %45 = vector.broadcast %19 : vector<1x128xf32> to vector<256x128xf32>
    %46 = arith.addf %44, %45 : vector<256x128xf32>
    %c0_25 = arith.constant 0 : index
    %c0_26 = arith.constant 0 : index
    %47 = vector.load %arg9[%c0_25, %c0_26] : memref<1x128xf32, #tpu.memory_space<vmem>>, vector<1x128xf32>
    %c0_27 = arith.constant 0 : index
    %c0_28 = arith.constant 0 : index
    %48 = vector.load %arg10[%c0_27, %c0_28] : memref<1x128xf32, #tpu.memory_space<vmem>>, vector<1x128xf32>
    %cst_29 = arith.constant dense<0.000000e+00> : vector<256xf32>
    %49 = vector.multi_reduction <add>, %17, %cst_29 [1] : vector<256x128xf32> to vector<256xf32>
    %50 = vector.shape_cast %49 : vector<256xf32> to vector<256x1xf32>
    %cst_30 = arith.constant 3.125000e-02 : f32
    %51 = vector.broadcast %cst_30 : f32 to vector<256x1xf32>
    %52 = arith.mulf %50, %51 : vector<256x1xf32>
    %53 = vector.broadcast %52 : vector<256x1xf32> to vector<256x128xf32>
    %54 = arith.subf %17, %53 : vector<256x128xf32>
    %55 = tpu.iota {dimensions = array<i32: 1>} : vector<256x128xi32>
    %c32_i32_31 = arith.constant 32 : i32
    %56 = vector.broadcast %c32_i32_31 : i32 to vector<256x128xi32>
    %57 = arith.cmpi slt, %55, %56 : vector<256x128xi32>
    %cst_32 = arith.constant 0.000000e+00 : f32
    %58 = vector.broadcast %cst_32 : f32 to vector<256x128xf32>
    %59 = arith.select %57, %54, %58 : vector<256x128xi1>, vector<256x128xf32>
    %60 = arith.mulf %59, %59 : vector<256x128xf32>
    %cst_33 = arith.constant dense<0.000000e+00> : vector<256xf32>
    %61 = vector.multi_reduction <add>, %60, %cst_33 [1] : vector<256x128xf32> to vector<256xf32>
    %62 = vector.shape_cast %61 : vector<256xf32> to vector<256x1xf32>
    %cst_34 = arith.constant 3.125000e-02 : f32
    %63 = vector.broadcast %cst_34 : f32 to vector<256x1xf32>
    %64 = arith.mulf %62, %63 : vector<256x1xf32>
    %cst_35 = arith.constant 9.99999971E-10 : f32
    %65 = vector.broadcast %cst_35 : f32 to vector<256x1xf32>
    %66 = arith.addf %64, %65 : vector<256x1xf32>
    %67 = vector.broadcast %52 : vector<256x1xf32> to vector<256x128xf32>
    %68 = arith.subf %17, %67 : vector<256x128xf32>
    %69 = vector.broadcast %47 : vector<1x128xf32> to vector<256x128xf32>
    %70 = arith.mulf %68, %69 : vector<256x128xf32>
    %71 = math.rsqrt %66 : vector<256x1xf32>
    %72 = vector.broadcast %71 : vector<256x1xf32> to vector<256x128xf32>
    %73 = arith.mulf %70, %72 : vector<256x128xf32>
    %74 = vector.broadcast %48 : vector<1x128xf32> to vector<256x128xf32>
    %75 = arith.addf %73, %74 : vector<256x128xf32>
    %76 = tpu.concatenate %46, %75 in 1 : vector<256x128xf32>, vector<256x128xf32> -> vector<256x256xf32>
    %77 = arith.truncf %76 : vector<256x256xf32> to vector<256x256xbf16>
    %cst_36 = arith.constant dense<0.000000e+00> : vector<256x256xf32>
    %78 = tpu.matmul %0, %77, %cst_36 {dimension_numbers = #tpu.dot_dimension_numbers<[1], [0], [0], [1], [0, 0, 1, 1], [], []>} : vector<256x256xbf16>, vector<256x256xbf16>, vector<256x256xf32> -> vector<256x256xf32>
    %79 = arith.truncf %78 : vector<256x256xf32> to vector<256x256xbf16>
    %c0_37 = arith.constant 0 : index
    %c0_38 = arith.constant 0 : index
    %80 = vector.load %arg11[%c0_37, %c0_38] : memref<256x128xbf16, #tpu.memory_space<vmem>>, vector<256x128xbf16>
    %cst_39 = arith.constant dense<0.000000e+00> : vector<256x128xf32>
    %81 = tpu.matmul %77, %80, %cst_39 {dimension_numbers = #tpu.dot_dimension_numbers<[1], [0], [0], [1], [0, 0, 1, 1], [], []>} : vector<256x256xbf16>, vector<256x128xbf16>, vector<256x128xf32> -> vector<256x128xf32>
    %c0_40 = arith.constant 0 : index
    %c0_41 = arith.constant 0 : index
    %82 = vector.load %arg13[%c0_40, %c0_41] : memref<1x128xf32, #tpu.memory_space<vmem>>, vector<1x128xf32>
    %83 = vector.broadcast %82 : vector<1x128xf32> to vector<256x128xf32>
    %84 = arith.addf %81, %83 : vector<256x128xf32>
    %cst_42 = arith.constant 0.000000e+00 : f32
    %85 = vector.broadcast %cst_42 : f32 to vector<256x128xf32>
    %86 = arith.maximumf %84, %85 : vector<256x128xf32>
    %c0_43 = arith.constant 0 : index
    %c0_44 = arith.constant 0 : index
    %87 = vector.load %arg12[%c0_43, %c0_44] : memref<256x128xbf16, #tpu.memory_space<vmem>>, vector<256x128xbf16>
    %cst_45 = arith.constant dense<0.000000e+00> : vector<256x128xf32>
    %88 = tpu.matmul %79, %87, %cst_45 {dimension_numbers = #tpu.dot_dimension_numbers<[1], [0], [0], [1], [0, 0, 1, 1], [], []>} : vector<256x256xbf16>, vector<256x128xbf16>, vector<256x128xf32> -> vector<256x128xf32>
    %c0_46 = arith.constant 0 : index
    %c0_47 = arith.constant 0 : index
    %89 = vector.load %arg16[%c0_46, %c0_47] : memref<1x128xf32, #tpu.memory_space<vmem>>, vector<1x128xf32>
    %90 = vector.broadcast %89 : vector<1x128xf32> to vector<256x128xf32>
    %91 = arith.addf %88, %90 : vector<256x128xf32>
    %cst_48 = arith.constant 0.000000e+00 : f32
    %92 = vector.broadcast %cst_48 : f32 to vector<256x128xf32>
    %93 = arith.maximumf %91, %92 : vector<256x128xf32>
    %c0_49 = arith.constant 0 : index
    %c0_50 = arith.constant 0 : index
    %94 = vector.load %arg14[%c0_49, %c0_50] : memref<1x128xf32, #tpu.memory_space<vmem>>, vector<1x128xf32>
    %c0_51 = arith.constant 0 : index
    %c0_52 = arith.constant 0 : index
    %95 = vector.load %arg15[%c0_51, %c0_52] : memref<1x128xf32, #tpu.memory_space<vmem>>, vector<1x128xf32>
    %cst_53 = arith.constant dense<0.000000e+00> : vector<256xf32>
    %96 = vector.multi_reduction <add>, %86, %cst_53 [1] : vector<256x128xf32> to vector<256xf32>
    %97 = vector.shape_cast %96 : vector<256xf32> to vector<256x1xf32>
    %cst_54 = arith.constant 3.125000e-02 : f32
    %98 = vector.broadcast %cst_54 : f32 to vector<256x1xf32>
    %99 = arith.mulf %97, %98 : vector<256x1xf32>
    %100 = vector.broadcast %99 : vector<256x1xf32> to vector<256x128xf32>
    %101 = arith.subf %86, %100 : vector<256x128xf32>
    %102 = tpu.iota {dimensions = array<i32: 1>} : vector<256x128xi32>
    %c32_i32_55 = arith.constant 32 : i32
    %103 = vector.broadcast %c32_i32_55 : i32 to vector<256x128xi32>
    %104 = arith.cmpi slt, %102, %103 : vector<256x128xi32>
    %cst_56 = arith.constant 0.000000e+00 : f32
    %105 = vector.broadcast %cst_56 : f32 to vector<256x128xf32>
    %106 = arith.select %104, %101, %105 : vector<256x128xi1>, vector<256x128xf32>
    %107 = arith.mulf %106, %106 : vector<256x128xf32>
    %cst_57 = arith.constant dense<0.000000e+00> : vector<256xf32>
    %108 = vector.multi_reduction <add>, %107, %cst_57 [1] : vector<256x128xf32> to vector<256xf32>
    %109 = vector.shape_cast %108 : vector<256xf32> to vector<256x1xf32>
    %cst_58 = arith.constant 3.125000e-02 : f32
    %110 = vector.broadcast %cst_58 : f32 to vector<256x1xf32>
    %111 = arith.mulf %109, %110 : vector<256x1xf32>
    %cst_59 = arith.constant 9.99999971E-10 : f32
    %112 = vector.broadcast %cst_59 : f32 to vector<256x1xf32>
    %113 = arith.addf %111, %112 : vector<256x1xf32>
    %114 = vector.broadcast %99 : vector<256x1xf32> to vector<256x128xf32>
    %115 = arith.subf %86, %114 : vector<256x128xf32>
    %116 = vector.broadcast %94 : vector<1x128xf32> to vector<256x128xf32>
    %117 = arith.mulf %115, %116 : vector<256x128xf32>
    %118 = math.rsqrt %113 : vector<256x1xf32>
    %119 = vector.broadcast %118 : vector<256x1xf32> to vector<256x128xf32>
    %120 = arith.mulf %117, %119 : vector<256x128xf32>
    %121 = vector.broadcast %95 : vector<1x128xf32> to vector<256x128xf32>
    %122 = arith.addf %120, %121 : vector<256x128xf32>
    %c0_60 = arith.constant 0 : index
    %c0_61 = arith.constant 0 : index
    %123 = vector.load %arg17[%c0_60, %c0_61] : memref<1x128xf32, #tpu.memory_space<vmem>>, vector<1x128xf32>
    %c0_62 = arith.constant 0 : index
    %c0_63 = arith.constant 0 : index
    %124 = vector.load %arg18[%c0_62, %c0_63] : memref<1x128xf32, #tpu.memory_space<vmem>>, vector<1x128xf32>
    %cst_64 = arith.constant dense<0.000000e+00> : vector<256xf32>
    %125 = vector.multi_reduction <add>, %93, %cst_64 [1] : vector<256x128xf32> to vector<256xf32>
    %126 = vector.shape_cast %125 : vector<256xf32> to vector<256x1xf32>
    %cst_65 = arith.constant 3.125000e-02 : f32
    %127 = vector.broadcast %cst_65 : f32 to vector<256x1xf32>
    %128 = arith.mulf %126, %127 : vector<256x1xf32>
    %129 = vector.broadcast %128 : vector<256x1xf32> to vector<256x128xf32>
    %130 = arith.subf %93, %129 : vector<256x128xf32>
    %131 = tpu.iota {dimensions = array<i32: 1>} : vector<256x128xi32>
    %c32_i32_66 = arith.constant 32 : i32
    %132 = vector.broadcast %c32_i32_66 : i32 to vector<256x128xi32>
    %133 = arith.cmpi slt, %131, %132 : vector<256x128xi32>
    %cst_67 = arith.constant 0.000000e+00 : f32
    %134 = vector.broadcast %cst_67 : f32 to vector<256x128xf32>
    %135 = arith.select %133, %130, %134 : vector<256x128xi1>, vector<256x128xf32>
    %136 = arith.mulf %135, %135 : vector<256x128xf32>
    %cst_68 = arith.constant dense<0.000000e+00> : vector<256xf32>
    %137 = vector.multi_reduction <add>, %136, %cst_68 [1] : vector<256x128xf32> to vector<256xf32>
    %138 = vector.shape_cast %137 : vector<256xf32> to vector<256x1xf32>
    %cst_69 = arith.constant 3.125000e-02 : f32
    %139 = vector.broadcast %cst_69 : f32 to vector<256x1xf32>
    %140 = arith.mulf %138, %139 : vector<256x1xf32>
    %cst_70 = arith.constant 9.99999971E-10 : f32
    %141 = vector.broadcast %cst_70 : f32 to vector<256x1xf32>
    %142 = arith.addf %140, %141 : vector<256x1xf32>
    %143 = vector.broadcast %128 : vector<256x1xf32> to vector<256x128xf32>
    %144 = arith.subf %93, %143 : vector<256x128xf32>
    %145 = vector.broadcast %123 : vector<1x128xf32> to vector<256x128xf32>
    %146 = arith.mulf %144, %145 : vector<256x128xf32>
    %147 = math.rsqrt %142 : vector<256x1xf32>
    %148 = vector.broadcast %147 : vector<256x1xf32> to vector<256x128xf32>
    %149 = arith.mulf %146, %148 : vector<256x128xf32>
    %150 = vector.broadcast %124 : vector<1x128xf32> to vector<256x128xf32>
    %151 = arith.addf %149, %150 : vector<256x128xf32>
    %c0_71 = arith.constant 0 : index
    %c0_72 = arith.constant 0 : index
    %152 = vector.load %arg19[%c0_71, %c0_72] : memref<256x128xbf16, #tpu.memory_space<vmem>>, vector<128x128xbf16>
    %c128 = arith.constant 128 : index
    %c0_73 = arith.constant 0 : index
    %153 = vector.load %arg19[%c128, %c0_73] : memref<256x128xbf16, #tpu.memory_space<vmem>>, vector<128x128xbf16>
    %c0_74 = arith.constant 0 : index
    %c0_75 = arith.constant 0 : index
    %154 = vector.load %arg20[%c0_74, %c0_75] : memref<1x128xf32, #tpu.memory_space<vmem>>, vector<1x128xf32>
    %155 = arith.mulf %122, %122 : vector<256x128xf32>
    %cst_76 = arith.constant dense<0.000000e+00> : vector<256xf32>
    %156 = vector.multi_reduction <add>, %155, %cst_76 [1] : vector<256x128xf32> to vector<256xf32>
    %157 = vector.shape_cast %156 : vector<256xf32> to vector<256x1xf32>
    %158 = arith.mulf %151, %151 : vector<256x128xf32>
    %cst_77 = arith.constant dense<0.000000e+00> : vector<256xf32>
    %159 = vector.multi_reduction <add>, %158, %cst_77 [1] : vector<256x128xf32> to vector<256xf32>
    %160 = vector.shape_cast %159 : vector<256xf32> to vector<256x1xf32>
    %161 = arith.addf %157, %160 : vector<256x1xf32>
    %cst_78 = arith.constant 1.000000e-24 : f32
    %162 = vector.broadcast %cst_78 : f32 to vector<256x1xf32>
    %163 = arith.maximumf %161, %162 : vector<256x1xf32>
    %164 = math.rsqrt %163 : vector<256x1xf32>
    %165 = vector.broadcast %164 : vector<256x1xf32> to vector<256x128xf32>
    %166 = arith.mulf %122, %165 : vector<256x128xf32>
    %167 = arith.truncf %166 : vector<256x128xf32> to vector<256x128xbf16>
    %168 = vector.broadcast %164 : vector<256x1xf32> to vector<256x128xf32>
    %169 = arith.mulf %151, %168 : vector<256x128xf32>
    %170 = arith.truncf %169 : vector<256x128xf32> to vector<256x128xbf16>
    %cst_79 = arith.constant dense<0.000000e+00> : vector<256x128xf32>
    %171 = tpu.matmul %167, %152, %cst_79 {dimension_numbers = #tpu.dot_dimension_numbers<[1], [0], [0], [1], [0, 0, 1, 1], [], []>} : vector<256x128xbf16>, vector<128x128xbf16>, vector<256x128xf32> -> vector<256x128xf32>
    %cst_80 = arith.constant dense<0.000000e+00> : vector<256x128xf32>
    %172 = tpu.matmul %170, %153, %cst_80 {dimension_numbers = #tpu.dot_dimension_numbers<[1], [0], [0], [1], [0, 0, 1, 1], [], []>} : vector<256x128xbf16>, vector<128x128xbf16>, vector<256x128xf32> -> vector<256x128xf32>
    %173 = arith.addf %171, %172 : vector<256x128xf32>
    %174 = vector.broadcast %154 : vector<1x128xf32> to vector<256x128xf32>
    %175 = arith.addf %173, %174 : vector<256x128xf32>
    %c0_81 = arith.constant 0 : index
    %c0_82 = arith.constant 0 : index
    %176 = vector.load %arg21[%c0_81, %c0_82] : memref<256x128xf32, #tpu.memory_space<vmem>>, vector<256x128xf32>
    tpu.vector_store %arg21[%c0_81, %c0_82], %175 {strides = array<i32>} : memref<256x128xf32, #tpu.memory_space<vmem>>, vector<256x128xf32>,
    return
  }
  func.func @transform_0(%arg0: i32) -> (i32, i32) {
    %c0_i32 = arith.constant 0 : i32
    %c0_i32_0 = arith.constant 0 : i32
    %c0_i32_1 = arith.constant 0 : i32
    return %c0_i32, %c0_i32_0 : i32, i32
  }
  func.func @transform_1(%arg0: i32) -> (i32, i32) {
    %c0_i32 = arith.constant 0 : i32
    %c0_i32_0 = arith.constant 0 : i32
    %c0_i32_1 = arith.constant 0 : i32
    return %c0_i32, %c0_i32_0 : i32, i32
  }
  func.func @transform_2(%arg0: i32) -> (i32, i32) {
    %c0_i32 = arith.constant 0 : i32
    %c0_i32_0 = arith.constant 0 : i32
    %c0_i32_1 = arith.constant 0 : i32
    return %c0_i32, %c0_i32_0 : i32, i32
  }
  func.func @transform_3(%arg0: i32) -> (i32, i32) {
    %c0_i32 = arith.constant 0 : i32
    %c0_i32_0 = arith.constant 0 : i32
    %c0_i32_1 = arith.constant 0 : i32
    return %c0_i32, %c0_i32_0 : i32, i32
  }
  func.func @transform_4(%arg0: i32) -> (i32, i32) {
    %c0_i32 = arith.constant 0 : i32
    %c0_i32_0 = arith.constant 0 : i32
    %c0_i32_1 = arith.constant 0 : i32
    return %c0_i32, %c0_i32_0 : i32, i32
  }
  func.func @transform_5(%arg0: i32) -> (i32, i32) {
    %c0_i32 = arith.constant 0 : i32
    %c0_i32_0 = arith.constant 0 : i32
    %c0_i32_1 = arith.constant 0 : i32
    return %c0_i32, %c0_i32_0 : i32, i32
  }
  func.func @transform_6(%arg0: i32) -> (i32, i32) {
    %c0_i32 = arith.constant 0 : i32
    %c0_i32_0 = arith.constant 0 : i32
    %c0_i32_1 = arith.constant 0 : i32
    return %c0_i32, %c0_i32_0 : i32, i32
  }
  func.func @transform_7(%arg0: i32) -> (i32, i32) {
    %c0_i32 = arith.constant 0 : i32
    %c0_i32_0 = arith.constant 0 : i32
    %c0_i32_1 = arith.constant 0 : i32
    return %c0_i32, %c0_i32_0 : i32, i32
  }
  func.func @transform_8(%arg0: i32) -> (i32, i32) {
    %c0_i32 = arith.constant 0 : i32
    %c0_i32_0 = arith.constant 0 : i32
    %c0_i32_1 = arith.constant 0 : i32
    return %c0_i32, %c0_i32_0 : i32, i32
  }
  func.func @transform_9(%arg0: i32) -> (i32, i32) {
    %c0_i32 = arith.constant 0 : i32
    %c0_i32_0 = arith.constant 0 : i32
    %c0_i32_1 = arith.constant 0 : i32
    return %c0_i32, %c0_i32_0 : i32, i32
  }
  func.func @transform_10(%arg0: i32) -> (i32, i32) {
    %c0_i32 = arith.constant 0 : i32
    %c0_i32_0 = arith.constant 0 : i32
    %c0_i32_1 = arith.constant 0 : i32
    return %c0_i32, %c0_i32_0 : i32, i32
  }
  func.func @transform_11(%arg0: i32) -> (i32, i32) {
    %c0_i32 = arith.constant 0 : i32
    %c0_i32_0 = arith.constant 0 : i32
    %c0_i32_1 = arith.constant 0 : i32
    return %c0_i32, %c0_i32_0 : i32, i32
  }
  func.func @transform_12(%arg0: i32) -> (i32, i32) {
    %c0_i32 = arith.constant 0 : i32
    %c0_i32_0 = arith.constant 0 : i32
    %c0_i32_1 = arith.constant 0 : i32
    return %c0_i32, %c0_i32_0 : i32, i32
  }
  func.func @transform_13(%arg0: i32) -> (i32, i32) {
    %c0_i32 = arith.constant 0 : i32
    %c0_i32_0 = arith.constant 0 : i32
    %c0_i32_1 = arith.constant 0 : i32
    return %c0_i32, %c0_i32_0 : i32, i32
  }
  func.func @transform_14(%arg0: i32) -> (i32, i32) {
    %c0_i32 = arith.constant 0 : i32
    %c0_i32_0 = arith.constant 0 : i32
    %c0_i32_1 = arith.constant 0 : i32
    return %c0_i32, %c0_i32_0 : i32, i32
  }
  func.func @transform_15(%arg0: i32) -> (i32, i32) {
    %c0_i32 = arith.constant 0 : i32
    %c0_i32_0 = arith.constant 0 : i32
    %c0_i32_1 = arith.constant 0 : i32
    return %c0_i32, %c0_i32_0 : i32, i32
  }
  func.func @transform_16(%arg0: i32) -> (i32, i32) {
    %c0_i32 = arith.constant 0 : i32
    %c0_i32_0 = arith.constant 0 : i32
    %c0_i32_1 = arith.constant 0 : i32
    return %c0_i32, %c0_i32_0 : i32, i32
  }
  func.func @transform_17(%arg0: i32) -> (i32, i32) {
    %c0_i32 = arith.constant 0 : i32
    %c0_i32_0 = arith.constant 0 : i32
    %c0_i32_1 = arith.constant 0 : i32
    return %c0_i32, %c0_i32_0 : i32, i32
  }
  func.func @transform_18(%arg0: i32) -> (i32, i32) {
    %c0_i32 = arith.constant 0 : i32
    %c0_i32_0 = arith.constant 0 : i32
    %c0_i32_1 = arith.constant 0 : i32
    return %c0_i32, %c0_i32_0 : i32, i32
  }
  func.func @transform_19(%arg0: i32) -> (i32, i32) {
    %c0_i32 = arith.constant 0 : i32
    %c0_i32_0 = arith.constant 0 : i32
    %c0_i32_1 = arith.constant 0 : i32
    return %c0_i32, %c0_i32_0 : i32, i32
  }
  func.func @transform_20(%arg0: i32) -> (i32, i32) {
    %c0_i32 = arith.constant 0 : i32
    %c0_i32_0 = arith.constant 0 : i32
    %c0_i32_1 = arith.constant 0 : i32
    return %c0_i32, %c0_i32_0 : i32, i32
  }
}

</mosaic_0001>

<llo_original>
// kernel: graphsaint_forward.1
$region0: #{graphsaint_forward.1}
  #allocation0 [shape = 'u32[]', space=smem, size = 0x4, offset = 0x4, fixed_abs, tag = 'smem constant byte address 0x4 - core index']
  #allocation1 [shape = 'u32[144,128]{1,0:T(1,128)}', space=vmem, size = 0x12000, scoped, tag = 'internal scratch']
  %s0 = inlined_call_operand.vmem [shape: bf16[256,256], index: 0, kind: input, shape index: {}]
  %s1 = inlined_call_operand.vmem [shape: bf16[256,128], index: 1, kind: input, shape index: {}]
  %s2 = inlined_call_operand.vmem [shape: bf16[128,128], index: 2, kind: input, shape index: {}]
  %s3 = inlined_call_operand.vmem [shape: bf16[128,128], index: 3, kind: input, shape index: {}]
  %s4 = inlined_call_operand.vmem [shape: f32[1,128], index: 4, kind: input, shape index: {}, may-alias: {4,6,7,9,12,14,15,17,19}]
  %s5 = inlined_call_operand.vmem [shape: f32[1,128], index: 5, kind: input, shape index: {}, may-alias: {5,8,13,16}]
  %s6 = inlined_call_operand.vmem [shape: f32[1,128], index: 6, kind: input, shape index: {}, may-alias: {4,6,7,9,12,14,15,17,19}]
  %s7 = inlined_call_operand.vmem [shape: f32[1,128], index: 7, kind: input, shape index: {}, may-alias: {4,6,7,9,12,14,15,17,19}]
  %s8 = inlined_call_operand.vmem [shape: f32[1,128], index: 8, kind: input, shape index: {}, may-alias: {5,8,13,16}]
  %s9 = inlined_call_operand.vmem [shape: f32[1,128], index: 9, kind: input, shape index: {}, may-alias: {4,6,7,9,12,14,15,17,19}]
  %s10 = inlined_call_operand.vmem [shape: bf16[256,128], index: 10, kind: input, shape index: {}]
  %s11 = inlined_call_operand.vmem [shape: bf16[256,128], index: 11, kind: input, shape index: {}]
  %s12 = inlined_call_operand.vmem [shape: f32[1,128], index: 12, kind: input, shape index: {}, may-alias: {4,6,7,9,12,14,15,17,19}]
  %s13 = inlined_call_operand.vmem [shape: f32[1,128], index: 13, kind: input, shape index: {}, may-alias: {5,8,13,16}]
  %s14 = inlined_call_operand.vmem [shape: f32[1,128], index: 14, kind: input, shape index: {}, may-alias: {4,6,7,9,12,14,15,17,19}]
  %s15 = inlined_call_operand.vmem [shape: f32[1,128], index: 15, kind: input, shape index: {}, may-alias: {4,6,7,9,12,14,15,17,19}]
  %s16 = inlined_call_operand.vmem [shape: f32[1,128], index: 16, kind: input, shape index: {}, may-alias: {5,8,13,16}]
  %s17 = inlined_call_operand.vmem [shape: f32[1,128], index: 17, kind: input, shape index: {}, may-alias: {4,6,7,9,12,14,15,17,19}]
  %s18 = inlined_call_operand.vmem [shape: bf16[256,128], index: 18, kind: input, shape index: {}]
  %s19 = inlined_call_operand.vmem [shape: f32[1,128], index: 19, kind: input, shape index: {}, may-alias: {4,6,7,9,12,14,15,17,19}]
  %s20 = inlined_call_operand.vmem [shape: f32[256,128], index: 20, kind: output, shape index: {}]
  %s21 = sld [smem:[#allocation0]]
  $region90: #{graphsaint_forward.1} parent=0
    _
  %s23 = ssub.s32 1, %s21
  %s24 = scalar_select 0, %s23, %s21
  // Predicated region
  $region2: #{graphsaint_forward.1} parent=0 // pred_check
    _
  $region3: #{graphsaint_forward.1} parent=0 // pred_check_branch
    %26 = sbr.rel (0) target = $region5
  $region4: #{graphsaint_forward.1} parent=0 // pred_region
    _
  $region5: #{graphsaint_forward.1} parent=0 // pred_fallthru
    _
  // Predicated region
  $region6: #{graphsaint_forward.1} parent=0 // pred_check
    _
  $region7: #{graphsaint_forward.1} parent=0 // pred_check_branch
    %28 = sbr.rel (0) target = $region9
  $region8: #{graphsaint_forward.1} parent=0 // pred_region
    _
  $region9: #{graphsaint_forward.1} parent=0 // pred_fallthru
    _
  // Predicated region
  $region10: #{graphsaint_forward.1} parent=0 // pred_check
    _
  $region11: #{graphsaint_forward.1} parent=0 // pred_check_branch
    %30 = sbr.rel (0) target = $region13
  $region12: #{graphsaint_forward.1} parent=0 // pred_region
    _
  $region13: #{graphsaint_forward.1} parent=0 // pred_fallthru
    _
  // Predicated region
  $region14: #{graphsaint_forward.1} parent=0 // pred_check
    _
  $region15: #{graphsaint_forward.1} parent=0 // pred_check_branch
    %32 = sbr.rel (0) target = $region17
  $region16: #{graphsaint_forward.1} parent=0 // pred_region
    _
  $region17: #{graphsaint_forward.1} parent=0 // pred_fallthru
    _
  // Predicated region
  $region18: #{graphsaint_forward.1} parent=0 // pred_check
    _
  $region19: #{graphsaint_forward.1} parent=0 // pred_check_branch
    %34 = sbr.rel (0) target = $region21
  $region20: #{graphsaint_forward.1} parent=0 // pred_region
    _
  $region21: #{graphsaint_forward.1} parent=0 // pred_fallthru
    _
  // Predicated region
  $region22: #{graphsaint_forward.1} parent=0 // pred_check
    _
  $region23: #{graphsaint_forward.1} parent=0 // pred_check_branch
    %36 = sbr.rel (0) target = $region25
  $region24: #{graphsaint_forward.1} parent=0 // pred_region
    _
  $region25: #{graphsaint_forward.1} parent=0 // pred_fallthru
    _
  // Predicated region
  $region26: #{graphsaint_forward.1} parent=0 // pred_check
    _
  $region27: #{graphsaint_forward.1} parent=0 // pred_check_branch
    %38 = sbr.rel (0) target = $region29
  $region28: #{graphsaint_forward.1} parent=0 // pred_region
    _
  $region29: #{graphsaint_forward.1} parent=0 // pred_fallthru
    _
  // Predicated region
  $region30: #{graphsaint_forward.1} parent=0 // pred_check
    _
  $region31: #{graphsaint_forward.1} parent=0 // pred_check_branch
    %40 = sbr.rel (0) target = $region33
  $region32: #{graphsaint_forward.1} parent=0 // pred_region
    _
  $region33: #{graphsaint_forward.1} parent=0 // pred_fallthru
    _
  // Predicated region
  $region34: #{graphsaint_forward.1} parent=0 // pred_check
    _
  $region35: #{graphsaint_forward.1} parent=0 // pred_check_branch
    %42 = sbr.rel (0) target = $region37
  $region36: #{graphsaint_forward.1} parent=0 // pred_region
    _
  $region37: #{graphsaint_forward.1} parent=0 // pred_fallthru
    _
  // Predicated region
  $region38: #{graphsaint_forward.1} parent=0 // pred_check
    _
  $region39: #{graphsaint_forward.1} parent=0 // pred_check_branch
    %44 = sbr.rel (0) target = $region41
  $region40: #{graphsaint_forward.1} parent=0 // pred_region
    _
  $region41: #{graphsaint_forward.1} parent=0 // pred_fallthru
    _
  // Predicated region
  $region42: #{graphsaint_forward.1} parent=0 // pred_check
    _
  $region43: #{graphsaint_forward.1} parent=0 // pred_check_branch
    %46 = sbr.rel (0) target = $region45
  $region44: #{graphsaint_forward.1} parent=0 // pred_region
    _
  $region45: #{graphsaint_forward.1} parent=0 // pred_fallthru
    _
  // Predicated region
  $region46: #{graphsaint_forward.1} parent=0 // pred_check
    _
  $region47: #{graphsaint_forward.1} parent=0 // pred_check_branch
    %48 = sbr.rel (0) target = $region49
  $region48: #{graphsaint_forward.1} parent=0 // pred_region
    _
  $region49: #{graphsaint_forward.1} parent=0 // pred_fallthru
    _
  // Predicated region
  $region50: #{graphsaint_forward.1} parent=0 // pred_check
    _
  $region51: #{graphsaint_forward.1} parent=0 // pred_check_branch
    %50 = sbr.rel (0) target = $region53
  $region52: #{graphsaint_forward.1} parent=0 // pred_region
    _
  $region53: #{graphsaint_forward.1} parent=0 // pred_fallthru
    _
  // Predicated region
  $region54: #{graphsaint_forward.1} parent=0 // pred_check
    _
  $region55: #{graphsaint_forward.1} parent=0 // pred_check_branch
    %52 = sbr.rel (0) target = $region57
  $region56: #{graphsaint_forward.1} parent=0 // pred_region
    _
  $region57: #{graphsaint_forward.1} parent=0 // pred_fallthru
    _
  // Predicated region
  $region58: #{graphsaint_forward.1} parent=0 // pred_check
    _
  $region59: #{graphsaint_forward.1} parent=0 // pred_check_branch
    %54 = sbr.rel (0) target = $region61
  $region60: #{graphsaint_forward.1} parent=0 // pred_region
    _
  $region61: #{graphsaint_forward.1} parent=0 // pred_fallthru
    _
  // Predicated region
  $region62: #{graphsaint_forward.1} parent=0 // pred_check
    _
  $region63: #{graphsaint_forward.1} parent=0 // pred_check_branch
    %56 = sbr.rel (0) target = $region65
  $region64: #{graphsaint_forward.1} parent=0 // pred_region
    _
  $region65: #{graphsaint_forward.1} parent=0 // pred_fallthru
    _
  // Predicated region
  $region66: #{graphsaint_forward.1} parent=0 // pred_check
    _
  $region67: #{graphsaint_forward.1} parent=0 // pred_check_branch
    %58 = sbr.rel (0) target = $region69
  $region68: #{graphsaint_forward.1} parent=0 // pred_region
    _
  $region69: #{graphsaint_forward.1} parent=0 // pred_fallthru
    _
  // Predicated region
  $region70: #{graphsaint_forward.1} parent=0 // pred_check
    _
  $region71: #{graphsaint_forward.1} parent=0 // pred_check_branch
    %60 = sbr.rel (0) target = $region73
  $region72: #{graphsaint_forward.1} parent=0 // pred_region
    _
  $region73: #{graphsaint_forward.1} parent=0 // pred_fallthru
    _
  // Predicated region
  $region74: #{graphsaint_forward.1} parent=0 // pred_check
    _
  $region75: #{graphsaint_forward.1} parent=0 // pred_check_branch
    %62 = sbr.rel (0) target = $region77
  $region76: #{graphsaint_forward.1} parent=0 // pred_region
    _
  $region77: #{graphsaint_forward.1} parent=0 // pred_fallthru
    _
  // Predicated region
  $region78: #{graphsaint_forward.1} parent=0 // pred_check
    _
  $region79: #{graphsaint_forward.1} parent=0 // pred_check_branch
    %64 = sbr.rel (0) target = $region81
  $region80: #{graphsaint_forward.1} parent=0 // pred_region
    _
  $region81: #{graphsaint_forward.1} parent=0 // pred_fallthru
    _
  %v66 = vld [vmem:[%s0] sm:$0xff]
  %v67 = vld [vmem:[%s0 + $0x8] sm:$0xff]
  %v68 = vld [vmem:[%s0 + $0x10] sm:$0xff]
  %v69 = vld [vmem:[%s0 + $0x18] sm:$0xff]
  %v70 = vld [vmem:[%s0 + $0x20] sm:$0xff]
  %v71 = vld [vmem:[%s0 + $0x28] sm:$0xff]
  %v72 = vld [vmem:[%s0 + $0x30] sm:$0xff]
  %v73 = vld [vmem:[%s0 + $0x38] sm:$0xff]
  %v74 = vld [vmem:[%s0 + $0x40] sm:$0xff]
  %v75 = vld [vmem:[%s0 + $0x48] sm:$0xff]
  %v76 = vld [vmem:[%s0 + $0x50] sm:$0xff]
  %v77 = vld [vmem:[%s0 + $0x58] sm:$0xff]
  %v78 = vld [vmem:[%s0 + $0x60] sm:$0xff]
  %v79 = vld [vmem:[%s0 + $0x68] sm:$0xff]
  %v80 = vld [vmem:[%s0 + $0x70] sm:$0xff]
  %v81 = vld [vmem:[%s0 + $0x78] sm:$0xff]
  %v82 = vld [vmem:[%s0 + $0x80] sm:$0xff]
  %v83 = vld [vmem:[%s0 + $0x88] sm:$0xff]
  %v84 = vld [vmem:[%s0 + $0x90] sm:$0xff]
  %v85 = vld [vmem:[%s0 + $0x98] sm:$0xff]
  %v86 = vld [vmem:[%s0 + $0xa0] sm:$0xff]
  %v87 = vld [vmem:[%s0 + $0xa8] sm:$0xff]
  %v88 = vld [vmem:[%s0 + $0xb0] sm:$0xff]
  %v89 = vld [vmem:[%s0 + $0xb8] sm:$0xff]
  %v90 = vld [vmem:[%s0 + $0xc0] sm:$0xff]
  %v91 = vld [vmem:[%s0 + $0xc8] sm:$0xff]
  %v92 = vld [vmem:[%s0 + $0xd0] sm:$0xff]
  %v93 = vld [vmem:[%s0 + $0xd8] sm:$0xff]
  %v94 = vld [vmem:[%s0 + $0xe0] sm:$0xff]
  %v95 = vld [vmem:[%s0 + $0xe8] sm:$0xff]
  %v96 = vld [vmem:[%s0 + $0xf0] sm:$0xff]
  %v97 = vld [vmem:[%s0 + $0xf8] sm:$0xff]
  %v98 = vld [vmem:[%s1] sm:$0xf]
  %v99 = vld [vmem:[%s1 + $0x4] sm:$0xf]
  %v100 = vld [vmem:[%s1 + $0x8] sm:$0xf]
  %v101 = vld [vmem:[%s1 + $0xc] sm:$0xf]
  %v102 = vld [vmem:[%s1 + $0x10] sm:$0xf]
  %v103 = vld [vmem:[%s1 + $0x14] sm:$0xf]
  %v104 = vld [vmem:[%s1 + $0x18] sm:$0xf]
  %v105 = vld [vmem:[%s1 + $0x1c] sm:$0xf]
  %v106 = vld [vmem:[%s1 + $0x20] sm:$0xf]
  %v107 = vld [vmem:[%s1 + $0x24] sm:$0xf]
  %v108 = vld [vmem:[%s1 + $0x28] sm:$0xf]
  %v109 = vld [vmem:[%s1 + $0x2c] sm:$0xf]
  %v110 = vld [vmem:[%s1 + $0x30] sm:$0xf]
  %v111 = vld [vmem:[%s1 + $0x34] sm:$0xf]
  %v112 = vld [vmem:[%s1 + $0x38] sm:$0xf]
  %v113 = vld [vmem:[%s1 + $0x3c] sm:$0xf]
  %v114 = vld [vmem:[%s1 + $0x40] sm:$0xf]
  %v115 = vld [vmem:[%s1 + $0x44] sm:$0xf]
  %v116 = vld [vmem:[%s1 + $0x48] sm:$0xf]
  %v117 = vld [vmem:[%s1 + $0x4c] sm:$0xf]
  %v118 = vld [vmem:[%s1 + $0x50] sm:$0xf]
  %v119 = vld [vmem:[%s1 + $0x54] sm:$0xf]
  %v120 = vld [vmem:[%s1 + $0x58] sm:$0xf]
  %v121 = vld [vmem:[%s1 + $0x5c] sm:$0xf]
  %v122 = vld [vmem:[%s1 + $0x60] sm:$0xf]
  %v123 = vld [vmem:[%s1 + $0x64] sm:$0xf]
  %v124 = vld [vmem:[%s1 + $0x68] sm:$0xf]
  %v125 = vld [vmem:[%s1 + $0x6c] sm:$0xf]
  %v126 = vld [vmem:[%s1 + $0x70] sm:$0xf]
  %v127 = vld [vmem:[%s1 + $0x74] sm:$0xf]
  %v128 = vld [vmem:[%s1 + $0x78] sm:$0xf]
  %v129 = vld [vmem:[%s1 + $0x7c] sm:$0xf]
  %v162 = vunpack.c.l.b16 %v66
  %v163 = vunpack.c.h.b16 %v66
  %v164 = vunpack.c.l.b16 %v67
  %v165 = vunpack.c.h.b16 %v67
  %v166 = vunpack.c.l.b16 %v68
  %v167 = vunpack.c.h.b16 %v68
  %v168 = vunpack.c.l.b16 %v69
  %v169 = vunpack.c.h.b16 %v69
  %v170 = vunpack.c.l.b16 %v70
  %v171 = vunpack.c.h.b16 %v70
  %v172 = vunpack.c.l.b16 %v71
  %v173 = vunpack.c.h.b16 %v71
  %v174 = vunpack.c.l.b16 %v72
  %v175 = vunpack.c.h.b16 %v72
  %v176 = vunpack.c.l.b16 %v73
  %v177 = vunpack.c.h.b16 %v73
  %v178 = vunpack.c.l.b16 %v74
  %v179 = vunpack.c.h.b16 %v74
  %v180 = vunpack.c.l.b16 %v75
  %v181 = vunpack.c.h.b16 %v75
  %v182 = vunpack.c.l.b16 %v76
  %v183 = vunpack.c.h.b16 %v76
  %v184 = vunpack.c.l.b16 %v77
  %v185 = vunpack.c.h.b16 %v77
  %v186 = vunpack.c.l.b16 %v78
  %v187 = vunpack.c.h.b16 %v78
  %v188 = vunpack.c.l.b16 %v79
  %v189 = vunpack.c.h.b16 %v79
  %v190 = vunpack.c.l.b16 %v80
  %v191 = vunpack.c.h.b16 %v80
  %v192 = vunpack.c.l.b16 %v81
  %v193 = vunpack.c.h.b16 %v81
  %v194 = vunpack.c.l.b16 %v82
  %v195 = vunpack.c.h.b16 %v82
  %v196 = vunpack.c.l.b16 %v83
  %v197 = vunpack.c.h.b16 %v83
  %v198 = vunpack.c.l.b16 %v84
  %v199 = vunpack.c.h.b16 %v84
  %v200 = vunpack.c.l.b16 %v85
  %v201 = vunpack.c.h.b16 %v85
  %v202 = vunpack.c.l.b16 %v86
  %v203 = vunpack.c.h.b16 %v86
  %v204 = vunpack.c.l.b16 %v87
  %v205 = vunpack.c.h.b16 %v87
  %v206 = vunpack.c.l.b16 %v88
  %v207 = vunpack.c.h.b16 %v88
  %v208 = vunpack.c.l.b16 %v89
  %v209 = vunpack.c.h.b16 %v89
  %v210 = vunpack.c.l.b16 %v90
  %v211 = vunpack.c.h.b16 %v90
  %v212 = vunpack.c.l.b16 %v91
  %v213 = vunpack.c.h.b16 %v91
  %v214 = vunpack.c.l.b16 %v92
  %v215 = vunpack.c.h.b16 %v92
  %v216 = vunpack.c.l.b16 %v93
  %v217 = vunpack.c.h.b16 %v93
  %v218 = vunpack.c.l.b16 %v94
  %v219 = vunpack.c.h.b16 %v94
  %v220 = vunpack.c.l.b16 %v95
  %v221 = vunpack.c.h.b16 %v95
  %v222 = vunpack.c.l.b16 %v96
  %v223 = vunpack.c.h.b16 %v96
  %v224 = vunpack.c.l.b16 %v97
  %v225 = vunpack.c.h.b16 %v97
  %v226 = vpack.c.b16 %v164, %v162
  %v227 = vpack.c.b16 %v165, %v163
  %v228 = vpack.c.b16 %v168, %v166
  %v229 = vpack.c.b16 %v169, %v167
  %v230 = vpack.c.b16 %v172, %v170
  %v231 = vpack.c.b16 %v173, %v171
  %v232 = vpack.c.b16 %v176, %v174
  %v233 = vpack.c.b16 %v177, %v175
  %v234 = vpack.c.b16 %v180, %v178
  %v235 = vpack.c.b16 %v181, %v179
  %v236 = vpack.c.b16 %v184, %v182
  %v237 = vpack.c.b16 %v185, %v183
  %v238 = vpack.c.b16 %v188, %v186
  %v239 = vpack.c.b16 %v189, %v187
  %v240 = vpack.c.b16 %v192, %v190
  %v241 = vpack.c.b16 %v193, %v191
  %v242 = vpack.c.b16 %v196, %v194
  %v243 = vpack.c.b16 %v197, %v195
  %v244 = vpack.c.b16 %v200, %v198
  %v245 = vpack.c.b16 %v201, %v199
  %v246 = vpack.c.b16 %v204, %v202
  %v247 = vpack.c.b16 %v205, %v203
  %v248 = vpack.c.b16 %v208, %v206
  %v249 = vpack.c.b16 %v209, %v207
  %v250 = vpack.c.b16 %v212, %v210
  %v251 = vpack.c.b16 %v213, %v211
  %v252 = vpack.c.b16 %v216, %v214
  %v253 = vpack.c.b16 %v217, %v215
  %v254 = vpack.c.b16 %v220, %v218
  %v255 = vpack.c.b16 %v221, %v219
  %v256 = vpack.c.b16 %v224, %v222
  %v257 = vpack.c.b16 %v225, %v223
  %v322 = vunpack.c.l.b16 %v98
  %v323 = vunpack.c.l.b16 %v99
  %v324 = vunpack.c.l.b16 %v100
  %v325 = vunpack.c.l.b16 %v101
  %v326 = vunpack.c.l.b16 %v102
  %v327 = vunpack.c.l.b16 %v103
  %v328 = vunpack.c.l.b16 %v104
  %v329 = vunpack.c.l.b16 %v105
  %v330 = vunpack.c.l.b16 %v106
  %v331 = vunpack.c.l.b16 %v107
  %v332 = vunpack.c.l.b16 %v108
  %v333 = vunpack.c.l.b16 %v109
  %v334 = vunpack.c.l.b16 %v110
  %v335 = vunpack.c.l.b16 %v111
  %v336 = vunpack.c.l.b16 %v112
  %v337 = vunpack.c.l.b16 %v113
  %v338 = vunpack.c.l.b16 %v114
  %v339 = vunpack.c.l.b16 %v115
  %v340 = vunpack.c.l.b16 %v116
  %v341 = vunpack.c.l.b16 %v117
  %v342 = vunpack.c.l.b16 %v118
  %v343 = vunpack.c.l.b16 %v119
  %v344 = vunpack.c.l.b16 %v120
  %v345 = vunpack.c.l.b16 %v121
  %v346 = vunpack.c.l.b16 %v122
  %v347 = vunpack.c.l.b16 %v123
  %v348 = vunpack.c.l.b16 %v124
  %v349 = vunpack.c.l.b16 %v125
  %v350 = vunpack.c.l.b16 %v126
  %v351 = vunpack.c.l.b16 %v127
  %v352 = vunpack.c.l.b16 %v128
  %v353 = vunpack.c.l.b16 %v129
  %v354 = vpack.c.b16 %v323, %v322
  %v355 = vpack.c.b16 %v325, %v324
  %v356 = vpack.c.b16 %v327, %v326
  %v357 = vpack.c.b16 %v329, %v328
  %v358 = vpack.c.b16 %v331, %v330
  %v359 = vpack.c.b16 %v333, %v332
  %v360 = vpack.c.b16 %v335, %v334
  %v361 = vpack.c.b16 %v337, %v336
  %v362 = vpack.c.b16 %v339, %v338
  %v363 = vpack.c.b16 %v341, %v340
  %v364 = vpack.c.b16 %v343, %v342
  %v365 = vpack.c.b16 %v345, %v344
  %v366 = vpack.c.b16 %v347, %v346
  %v367 = vpack.c.b16 %v349, %v348
  %v368 = vpack.c.b16 %v351, %v350
  %v369 = vpack.c.b16 %v353, %v352
  %386 = vmatprep.subr.bf16.mxu0 0
  %387 = vmatpush1.bf16.msra.mxu0 %v354
  %388 = vmatprep.subr.bf16.mxu0 0
  %389 = vmatpush1.bf16.msra.mxu0 %v355
  %390 = vmatprep.subr.bf16.mxu0 0
  %391 = vmatpush1.bf16.msra.mxu0 %v356
  %392 = vmatprep.subr.bf16.mxu0 0
  %393 = vmatpush1.bf16.msra.mxu0 %v357
  %394 = vmatprep.subr.bf16.mxu0 0
  %395 = vmatpush1.bf16.msra.mxu0 %v358
  %396 = vmatprep.subr.bf16.mxu0 0
  %397 = vmatpush1.bf16.msra.mxu0 %v359
  %398 = vmatprep.subr.bf16.mxu0 0
  %399 = vmatpush1.bf16.msra.mxu0 %v360
  %400 = vmatprep.subr.bf16.mxu0 0
  %401 = vmatpush1.bf16.msra.mxu0 %v361
  %402 = vmatprep.subr.bf16.mxu0 0
  %403 = vmatpush1.bf16.msra.mxu0 %v362
  %404 = vmatprep.subr.bf16.mxu0 0
  %405 = vmatpush1.bf16.msra.mxu0 %v363
  %406 = vmatprep.subr.bf16.mxu0 0
  %407 = vmatpush1.bf16.msra.mxu0 %v364
  %408 = vmatprep.subr.bf16.mxu0 0
  %409 = vmatpush1.bf16.msra.mxu0 %v365
  %410 = vmatprep.subr.bf16.mxu0 0
  %411 = vmatpush1.bf16.msra.mxu0 %v366
  %412 = vmatprep.subr.bf16.mxu0 0
  %413 = vmatpush1.bf16.msra.mxu0 %v367
  %414 = vmatprep.subr.bf16.mxu0 0
  %415 = vmatpush1.bf16.msra.mxu0 %v368
  %416 = vmatprep.subr.bf16.mxu0 0
  %417 = vmatpush1.bf16.msra.mxu0 %v369
  %418 = vmatprep.mubr.bf16.mxu0 %v227
  %419 = vmatmul.mubr.bf16.gmra.mrb[0].mxu0 %v226
  %v420 = vpop.f32.mrb[0].mxu0
  %v421 = vadd.f32 0.0, %v420
  %v422 = vpop.f32.mrb[0].mxu0
  %v423 = vpop.f32.mrb[0].mxu0
  %v424 = vadd.f32 0.0, %v423
  %v425 = vpop.f32.mrb[0].mxu0
  %426 = vmatprep.mubr.bf16.mxu0 %v229
  %427 = vmatmul.mubr.bf16.gmra.mrb[0].mxu0 %v228
  %v428 = vpop.f32.mrb[0].mxu0
  %v429 = vadd.f32 0.0, %v428
  %v430 = vpop.f32.mrb[0].mxu0
  %v431 = vpop.f32.mrb[0].mxu0
  %v432 = vadd.f32 0.0, %v431
  %v433 = vpop.f32.mrb[0].mxu0
  %434 = vmatprep.mubr.bf16.mxu0 %v231
  %435 = vmatmul.mubr.bf16.gmra.mrb[0].mxu0 %v230
  %v436 = vpop.f32.mrb[0].mxu0
  %v437 = vadd.f32 0.0, %v436
  %v438 = vpop.f32.mrb[0].mxu0
  %v439 = vpop.f32.mrb[0].mxu0
  %v440 = vadd.f32 0.0, %v439
  %v441 = vpop.f32.mrb[0].mxu0
  %442 = vmatprep.mubr.bf16.mxu0 %v233
  %443 = vmatmul.mubr.bf16.gmra.mrb[0].mxu0 %v232
  %v444 = vpop.f32.mrb[0].mxu0
  %v445 = vadd.f32 0.0, %v444
  %v446 = vpop.f32.mrb[0].mxu0
  %v447 = vpop.f32.mrb[0].mxu0
  %v448 = vadd.f32 0.0, %v447
  %v449 = vpop.f32.mrb[0].mxu0
  %450 = vmatprep.mubr.bf16.mxu0 %v235
  %451 = vmatmul.mubr.bf16.gmra.mrb[0].mxu0 %v234
  %v452 = vpop.f32.mrb[0].mxu0
  %v453 = vadd.f32 0.0, %v452
  %v454 = vpop.f32.mrb[0].mxu0
  %v455 = vpop.f32.mrb[0].mxu0
  %v456 = vadd.f32 0.0, %v455
  %v457 = vpop.f32.mrb[0].mxu0
  %458 = vmatprep.mubr.bf16.mxu0 %v237
  %459 = vmatmul.mubr.bf16.gmra.mrb[0].mxu0 %v236
  %v460 = vpop.f32.mrb[0].mxu0
  %v461 = vadd.f32 0.0, %v460
  %v462 = vpop.f32.mrb[0].mxu0
  %v463 = vpop.f32.mrb[0].mxu0
  %v464 = vadd.f32 0.0, %v463
  %v465 = vpop.f32.mrb[0].mxu0
  %466 = vmatprep.mubr.bf16.mxu0 %v239
  %467 = vmatmul.mubr.bf16.gmra.mrb[0].mxu0 %v238
  %v468 = vpop.f32.mrb[0].mxu0
  %v469 = vadd.f32 0.0, %v468
  %v470 = vpop.f32.mrb[0].mxu0
  %v471 = vpop.f32.mrb[0].mxu0
  %v472 = vadd.f32 0.0, %v471
  %v473 = vpop.f32.mrb[0].mxu0
  %474 = vmatprep.mubr.bf16.mxu0 %v241
  %475 = vmatmul.mubr.bf16.gmra.mrb[0].mxu0 %v240
  %v476 = vpop.f32.mrb[0].mxu0
  %v477 = vadd.f32 0.0, %v476
  %v478 = vpop.f32.mrb[0].mxu0
  %v479 = vpop.f32.mrb[0].mxu0
  %v480 = vadd.f32 0.0, %v479
  %v481 = vpop.f32.mrb[0].mxu0
  %482 = vmatprep.mubr.bf16.mxu0 %v243
  %483 = vmatmul.mubr.bf16.gmra.mrb[0].mxu0 %v242
  %v484 = vpop.f32.mrb[0].mxu0
  %v485 = vadd.f32 0.0, %v484
  %v486 = vpop.f32.mrb[0].mxu0
  %v487 = vpop.f32.mrb[0].mxu0
  %v488 = vadd.f32 0.0, %v487
  %v489 = vpop.f32.mrb[0].mxu0
  %490 = vmatprep.mubr.bf16.mxu0 %v245
  %491 = vmatmul.mubr.bf16.gmra.mrb[0].mxu0 %v244
  %v492 = vpop.f32.mrb[0].mxu0
  %v493 = vadd.f32 0.0, %v492
  %v494 = vpop.f32.mrb[0].mxu0
  %v495 = vpop.f32.mrb[0].mxu0
  %v496 = vadd.f32 0.0, %v495
  %v497 = vpop.f32.mrb[0].mxu0
  %498 = vmatprep.mubr.bf16.mxu0 %v247
  %499 = vmatmul.mubr.bf16.gmra.mrb[0].mxu0 %v246
  %v500 = vpop.f32.mrb[0].mxu0
  %v501 = vadd.f32 0.0, %v500
  %v502 = vpop.f32.mrb[0].mxu0
  %v503 = vpop.f32.mrb[0].mxu0
  %v504 = vadd.f32 0.0, %v503
  %v505 = vpop.f32.mrb[0].mxu0
  %506 = vmatprep.mubr.bf16.mxu0 %v249
  %507 = vmatmul.mubr.bf16.gmra.mrb[0].mxu0 %v248
  %v508 = vpop.f32.mrb[0].mxu0
  %v509 = vadd.f32 0.0, %v508
  %v510 = vpop.f32.mrb[0].mxu0
  %v511 = vpop.f32.mrb[0].mxu0
  %v512 = vadd.f32 0.0, %v511
  %v513 = vpop.f32.mrb[0].mxu0
  %514 = vmatprep.mubr.bf16.mxu0 %v251
  %515 = vmatmul.mubr.bf16.gmra.mrb[0].mxu0 %v250
  %v516 = vpop.f32.mrb[0].mxu0
  %v517 = vadd.f32 0.0, %v516
  %v518 = vpop.f32.mrb[0].mxu0
  %v519 = vpop.f32.mrb[0].mxu0
  %v520 = vadd.f32 0.0, %v519
  %v521 = vpop.f32.mrb[0].mxu0
  %522 = vmatprep.mubr.bf16.mxu0 %v253
  %523 = vmatmul.mubr.bf16.gmra.mrb[0].mxu0 %v252
  %v524 = vpop.f32.mrb[0].mxu0
  %v525 = vadd.f32 0.0, %v524
  %v526 = vpop.f32.mrb[0].mxu0
  %v527 = vpop.f32.mrb[0].mxu0
  %v528 = vadd.f32 0.0, %v527
  %v529 = vpop.f32.mrb[0].mxu0
  %530 = vmatprep.mubr.bf16.mxu0 %v255
  %531 = vmatmul.mubr.bf16.gmra.mrb[0].mxu0 %v254
  %v532 = vpop.f32.mrb[0].mxu0
  %v533 = vadd.f32 0.0, %v532
  %v534 = vpop.f32.mrb[0].mxu0
  %v535 = vpop.f32.mrb[0].mxu0
  %v536 = vadd.f32 0.0, %v535
  %v537 = vpop.f32.mrb[0].mxu0
  %538 = vmatprep.mubr.bf16.mxu0 %v257
  %539 = vmatmul.mubr.bf16.gmra.mrb[0].mxu0 %v256
  %v540 = vpop.f32.mrb[0].mxu0
  %v541 = vadd.f32 0.0, %v540
  %v542 = vpop.f32.mrb[0].mxu0
  %v543 = vpop.f32.mrb[0].mxu0
  %v544 = vadd.f32 0.0, %v543
  %v545 = vpop.f32.mrb[0].mxu0
  %546 = vdwg.mxu0
  %v547 = vpack.c.bf16 %v424, %v421
  %v548 = vpack.c.bf16 %v432, %v429
  %v549 = vpack.c.bf16 %v440, %v437
  %v550 = vpack.c.bf16 %v448, %v445
  %v551 = vpack.c.bf16 %v456, %v453
  %v552 = vpack.c.bf16 %v464, %v461
  %v553 = vpack.c.bf16 %v472, %v469
  %v554 = vpack.c.bf16 %v480, %v477
  %v555 = vpack.c.bf16 %v488, %v485
  %v556 = vpack.c.bf16 %v496, %v493
  %v557 = vpack.c.bf16 %v504, %v501
  %v558 = vpack.c.bf16 %v512, %v509
  %v559 = vpack.c.bf16 %v520, %v517
  %v560 = vpack.c.bf16 %v528, %v525
  %v561 = vpack.c.bf16 %v536, %v533
  %v562 = vpack.c.bf16 %v544, %v541
  %v563 = vld [vmem:[%s2] sm:$0xf]
  %v564 = vld [vmem:[%s2 + $0x4] sm:$0xf]
  %v565 = vld [vmem:[%s2 + $0x8] sm:$0xf]
  %v566 = vld [vmem:[%s2 + $0xc] sm:$0xf]
  %v567 = vld [vmem:[%s2 + $0x10] sm:$0xf]
  %v568 = vld [vmem:[%s2 + $0x14] sm:$0xf]
  %v569 = vld [vmem:[%s2 + $0x18] sm:$0xf]
  %v570 = vld [vmem:[%s2 + $0x1c] sm:$0xf]
  %v571 = vld [vmem:[%s2 + $0x20] sm:$0xf]
  %v572 = vld [vmem:[%s2 + $0x24] sm:$0xf]
  %v573 = vld [vmem:[%s2 + $0x28] sm:$0xf]
  %v574 = vld [vmem:[%s2 + $0x2c] sm:$0xf]
  %v575 = vld [vmem:[%s2 + $0x30] sm:$0xf]
  %v576 = vld [vmem:[%s2 + $0x34] sm:$0xf]
  %v577 = vld [vmem:[%s2 + $0x38] sm:$0xf]
  %v578 = vld [vmem:[%s2 + $0x3c] sm:$0xf]
  %v579 = vld [vmem:[%s4] sm:$0x1]
  %v581 = vlaneseq
  %v582 = vshrl.u32 %v581, 7
  %v583 = vsub.s32 0, %v582
  %v584 = vrot.slane %v579, %v583
  %v602 = vunpack.c.l.b16 %v563
  %v603 = vunpack.c.l.b16 %v564
  %v604 = vunpack.c.l.b16 %v565
  %v605 = vunpack.c.l.b16 %v566
  %v606 = vunpack.c.l.b16 %v567
  %v607 = vunpack.c.l.b16 %v568
  %v608 = vunpack.c.l.b16 %v569
  %v609 = vunpack.c.l.b16 %v570
  %v610 = vunpack.c.l.b16 %v571
  %v611 = vunpack.c.l.b16 %v572
  %v612 = vunpack.c.l.b16 %v573
  %v613 = vunpack.c.l.b16 %v574
  %v614 = vunpack.c.l.b16 %v575
  %v615 = vunpack.c.l.b16 %v576
  %v616 = vunpack.c.l.b16 %v577
  %v617 = vunpack.c.l.b16 %v578
  %v618 = vpack.c.b16 %v603, %v602
  %v619 = vpack.c.b16 %v605, %v604
  %v620 = vpack.c.b16 %v607, %v606
  %v621 = vpack.c.b16 %v609, %v608
  %v622 = vpack.c.b16 %v611, %v610
  %v623 = vpack.c.b16 %v613, %v612
  %v624 = vpack.c.b16 %v615, %v614
  %v625 = vpack.c.b16 %v617, %v616
  %634 = vmatprep.subr.bf16.mxu0 0
  %635 = vmatpush1.bf16.msra.mxu0 %v618
  %636 = vmatprep.subr.bf16.mxu0 0
  %637 = vmatpush1.bf16.msra.mxu0 %v619
  %638 = vmatprep.subr.bf16.mxu0 0
  %639 = vmatpush1.bf16.msra.mxu0 %v620
  %640 = vmatprep.subr.bf16.mxu0 0
  %641 = vmatpush1.bf16.msra.mxu0 %v621
  %642 = vmatprep.subr.bf16.mxu0 0
  %643 = vmatpush1.bf16.msra.mxu0 %v622
  %644 = vmatprep.subr.bf16.mxu0 0
  %645 = vmatpush1.bf16.msra.mxu0 %v623
  %646 = vmatprep.subr.bf16.mxu0 0
  %647 = vmatpush1.bf16.msra.mxu0 %v624
  %648 = vmatprep.subr.bf16.mxu0 0
  %649 = vmatpush1.bf16.msra.mxu0 %v625
  %650 = vmatprep.subr.bf16.mxu0 0
  %651 = vmatpush1.bf16.msra.mxu0 0
  %652 = vmatprep.subr.bf16.mxu0 0
  %653 = vmatpush1.bf16.msra.mxu0 0
  %654 = vmatprep.subr.bf16.mxu0 0
  %655 = vmatpush1.bf16.msra.mxu0 0
  %656 = vmatprep.subr.bf16.mxu0 0
  %657 = vmatpush1.bf16.msra.mxu0 0
  %658 = vmatprep.subr.bf16.mxu0 0
  %659 = vmatpush1.bf16.msra.mxu0 0
  %660 = vmatprep.subr.bf16.mxu0 0
  %661 = vmatpush1.bf16.msra.mxu0 0
  %662 = vmatprep.subr.bf16.mxu0 0
  %663 = vmatpush1.bf16.msra.mxu0 0
  %664 = vmatprep.subr.bf16.mxu0 0
  %665 = vmatpush1.bf16.msra.mxu0 0
  %666 = vmatprep.mubr.bf16.mxu0 0
  %667 = vmatmul.mubr.bf16.gmra.mrb[0].mxu0 %v354
  %v668 = vpop.f32.mrb[0].mxu0
  %v669 = vadd.f32 %v584, %v668
  %v670 = vpop.f32.mrb[0].mxu0
  %v671 = vpop.f32.mrb[0].mxu0
  %v672 = vadd.f32 %v584, %v671
  %v673 = vpop.f32.mrb[0].mxu0
  %674 = vmatprep.mubr.bf16.mxu0 0
  %675 = vmatmul.mubr.bf16.gmra.mrb[0].mxu0 %v355
  %v676 = vpop.f32.mrb[0].mxu0
  %v677 = vadd.f32 %v584, %v676
  %v678 = vpop.f32.mrb[0].mxu0
  %v679 = vpop.f32.mrb[0].mxu0
  %v680 = vadd.f32 %v584, %v679
  %v681 = vpop.f32.mrb[0].mxu0
  %682 = vmatprep.mubr.bf16.mxu0 0
  %683 = vmatmul.mubr.bf16.gmra.mrb[0].mxu0 %v356
  %v684 = vpop.f32.mrb[0].mxu0
  %v685 = vadd.f32 %v584, %v684
  %v686 = vpop.f32.mrb[0].mxu0
  %v687 = vpop.f32.mrb[0].mxu0
  %v688 = vadd.f32 %v584, %v687
  %v689 = vpop.f32.mrb[0].mxu0
  %690 = vmatprep.mubr.bf16.mxu0 0
  %691 = vmatmul.mubr.bf16.gmra.mrb[0].mxu0 %v357
  %v692 = vpop.f32.mrb[0].mxu0
  %v693 = vadd.f32 %v584, %v692
  %v694 = vpop.f32.mrb[0].mxu0
  %v695 = vpop.f32.mrb[0].mxu0
  %v696 = vadd.f32 %v584, %v695
  %v697 = vpop.f32.mrb[0].mxu0
  %698 = vmatprep.mubr.bf16.mxu0 0
  %699 = vmatmul.mubr.bf16.gmra.mrb[0].mxu0 %v358
  %v700 = vpop.f32.mrb[0].mxu0
  %v701 = vadd.f32 %v584, %v700
  %v702 = vpop.f32.mrb[0].mxu0
  %v703 = vpop.f32.mrb[0].mxu0
  %v704 = vadd.f32 %v584, %v703
  %v705 = vpop.f32.mrb[0].mxu0
  %706 = vmatprep.mubr.bf16.mxu0 0
  %707 = vmatmul.mubr.bf16.gmra.mrb[0].mxu0 %v359
  %v708 = vpop.f32.mrb[0].mxu0
  %v709 = vadd.f32 %v584, %v708
  %v710 = vpop.f32.mrb[0].mxu0
  %v711 = vpop.f32.mrb[0].mxu0
  %v712 = vadd.f32 %v584, %v711
  %v713 = vpop.f32.mrb[0].mxu0
  %714 = vmatprep.mubr.bf16.mxu0 0
  %715 = vmatmul.mubr.bf16.gmra.mrb[0].mxu0 %v360
  %v716 = vpop.f32.mrb[0].mxu0
  %v717 = vadd.f32 %v584, %v716
  %v718 = vpop.f32.mrb[0].mxu0
  %v719 = vpop.f32.mrb[0].mxu0
  %v720 = vadd.f32 %v584, %v719
  %v721 = vpop.f32.mrb[0].mxu0
  %722 = vmatprep.mubr.bf16.mxu0 0
  %723 = vmatmul.mubr.bf16.gmra.mrb[0].mxu0 %v361
  %v724 = vpop.f32.mrb[0].mxu0
  %v725 = vadd.f32 %v584, %v724
  %v726 = vpop.f32.mrb[0].mxu0
  %v727 = vpop.f32.mrb[0].mxu0
  %v728 = vadd.f32 %v584, %v727
  %v729 = vpop.f32.mrb[0].mxu0
  %730 = vmatprep.mubr.bf16.mxu0 0
  %731 = vmatmul.mubr.bf16.gmra.mrb[0].mxu0 %v362
  %v732 = vpop.f32.mrb[0].mxu0
  %v733 = vadd.f32 %v584, %v732
  %v734 = vpop.f32.mrb[0].mxu0
  %v735 = vpop.f32.mrb[0].mxu0
  %v736 = vadd.f32 %v584, %v735
  %v737 = vpop.f32.mrb[0].mxu0
  %738 = vmatprep.mubr.bf16.mxu0 0
  %739 = vmatmul.mubr.bf16.gmra.mrb[0].mxu0 %v363
  %v740 = vpop.f32.mrb[0].mxu0
  %v741 = vadd.f32 %v584, %v740
  %v742 = vpop.f32.mrb[0].mxu0
  %v743 = vpop.f32.mrb[0].mxu0
  %v744 = vadd.f32 %v584, %v743
  %v745 = vpop.f32.mrb[0].mxu0
  %746 = vmatprep.mubr.bf16.mxu0 0
  %747 = vmatmul.mubr.bf16.gmra.mrb[0].mxu0 %v364
  %v748 = vpop.f32.mrb[0].mxu0
  %v749 = vadd.f32 %v584, %v748
  %v750 = vpop.f32.mrb[0].mxu0
  %v751 = vpop.f32.mrb[0].mxu0
  %v752 = vadd.f32 %v584, %v751
  %v753 = vpop.f32.mrb[0].mxu0
  %754 = vmatprep.mubr.bf16.mxu0 0
  %755 = vmatmul.mubr.bf16.gmra.mrb[0].mxu0 %v365
  %v756 = vpop.f32.mrb[0].mxu0
  %v757 = vadd.f32 %v584, %v756
  %v758 = vpop.f32.mrb[0].mxu0
  %v759 = vpop.f32.mrb[0].mxu0
  %v760 = vadd.f32 %v584, %v759
  %v761 = vpop.f32.mrb[0].mxu0
  %762 = vmatprep.mubr.bf16.mxu0 0
  %763 = vmatmul.mubr.bf16.gmra.mrb[0].mxu0 %v366
  %v764 = vpop.f32.mrb[0].mxu0
  %v765 = vadd.f32 %v584, %v764
  %v766 = vpop.f32.mrb[0].mxu0
  %v767 = vpop.f32.mrb[0].mxu0
  %v768 = vadd.f32 %v584, %v767
  %v769 = vpop.f32.mrb[0].mxu0
  %770 = vmatprep.mubr.bf16.mxu0 0
  %771 = vmatmul.mubr.bf16.gmra.mrb[0].mxu0 %v367
  %v772 = vpop.f32.mrb[0].mxu0
  %v773 = vadd.f32 %v584, %v772
  %v774 = vpop.f32.mrb[0].mxu0
  %v775 = vpop.f32.mrb[0].mxu0
  %v776 = vadd.f32 %v584, %v775
  %v777 = vpop.f32.mrb[0].mxu0
  %778 = vmatprep.mubr.bf16.mxu0 0
  %779 = vmatmul.mubr.bf16.gmra.mrb[0].mxu0 %v368
  %v780 = vpop.f32.mrb[0].mxu0
  %v781 = vadd.f32 %v584, %v780
  %v782 = vpop.f32.mrb[0].mxu0
  %v783 = vpop.f32.mrb[0].mxu0
  %v784 = vadd.f32 %v584, %v783
  %v785 = vpop.f32.mrb[0].mxu0
  %786 = vmatprep.mubr.bf16.mxu0 0
  %787 = vmatmul.mubr.bf16.gmra.mrb[0].mxu0 %v369
  %v788 = vpop.f32.mrb[0].mxu0
  %v789 = vadd.f32 %v584, %v788
  %v790 = vpop.f32.mrb[0].mxu0
  %v791 = vpop.f32.mrb[0].mxu0
  %v792 = vadd.f32 %v584, %v791
  %v793 = vpop.f32.mrb[0].mxu0
  %794 = vdwg.mxu0
  %v795 = vmax.f32 %v669, 0.0
  %v796 = vmax.f32 %v672, 0.0
  %v797 = vmax.f32 %v677, 0.0
  %v798 = vmax.f32 %v680, 0.0
  %v799 = vmax.f32 %v685, 0.0
  %v800 = vmax.f32 %v688, 0.0
  %v801 = vmax.f32 %v693, 0.0
  %v802 = vmax.f32 %v696, 0.0
  %v803 = vmax.f32 %v701, 0.0
  %v804 = vmax.f32 %v704, 0.0
  %v805 = vmax.f32 %v709, 0.0
  %v806 = vmax.f32 %v712, 0.0
  %v807 = vmax.f32 %v717, 0.0
  %v808 = vmax.f32 %v720, 0.0
  %v809 = vmax.f32 %v725, 0.0
  %v810 = vmax.f32 %v728, 0.0
  %v811 = vmax.f32 %v733, 0.0
  %v812 = vmax.f32 %v736, 0.0
  %v813 = vmax.f32 %v741, 0.0
  %v814 = vmax.f32 %v744, 0.0
  %v815 = vmax.f32 %v749, 0.0
  %v816 = vmax.f32 %v752, 0.0
  %v817 = vmax.f32 %v757, 0.0
  %v818 = vmax.f32 %v760, 0.0
  %v819 = vmax.f32 %v765, 0.0
  %v820 = vmax.f32 %v768, 0.0
  %v821 = vmax.f32 %v773, 0.0
  %v822 = vmax.f32 %v776, 0.0
  %v823 = vmax.f32 %v781, 0.0
  %v824 = vmax.f32 %v784, 0.0
  %v825 = vmax.f32 %v789, 0.0
  %v826 = vmax.f32 %v792, 0.0
  %v827 = vld [vmem:[%s3] sm:$0xf]
  %v828 = vld [vmem:[%s3 + $0x4] sm:$0xf]
  %v829 = vld [vmem:[%s3 + $0x8] sm:$0xf]
  %v830 = vld [vmem:[%s3 + $0xc] sm:$0xf]
  %v831 = vld [vmem:[%s3 + $0x10] sm:$0xf]
  %v832 = vld [vmem:[%s3 + $0x14] sm:$0xf]
  %v833 = vld [vmem:[%s3 + $0x18] sm:$0xf]
  %v834 = vld [vmem:[%s3 + $0x1c] sm:$0xf]
  %v835 = vld [vmem:[%s3 + $0x20] sm:$0xf]
  %v836 = vld [vmem:[%s3 + $0x24] sm:$0xf]
  %v837 = vld [vmem:[%s3 + $0x28] sm:$0xf]
  %v838 = vld [vmem:[%s3 + $0x2c] sm:$0xf]
  %v839 = vld [vmem:[%s3 + $0x30] sm:$0xf]
  %v840 = vld [vmem:[%s3 + $0x34] sm:$0xf]
  %v841 = vld [vmem:[%s3 + $0x38] sm:$0xf]
  %v842 = vld [vmem:[%s3 + $0x3c] sm:$0xf]
  %v843 = vld [vmem:[%s7] sm:$0x1]
  %v845 = vlaneseq
  %v846 = vshrl.u32 %v845, 7
  %v847 = vsub.s32 0, %v846
  %v848 = vrot.slane %v843, %v847
  %v866 = vunpack.c.l.b16 %v827
  %v867 = vunpack.c.l.b16 %v828
  %v868 = vunpack.c.l.b16 %v829
  %v869 = vunpack.c.l.b16 %v830
  %v870 = vunpack.c.l.b16 %v831
  %v871 = vunpack.c.l.b16 %v832
  %v872 = vunpack.c.l.b16 %v833
  %v873 = vunpack.c.l.b16 %v834
  %v874 = vunpack.c.l.b16 %v835
  %v875 = vunpack.c.l.b16 %v836
  %v876 = vunpack.c.l.b16 %v837
  %v877 = vunpack.c.l.b16 %v838
  %v878 = vunpack.c.l.b16 %v839
  %v879 = vunpack.c.l.b16 %v840
  %v880 = vunpack.c.l.b16 %v841
  %v881 = vunpack.c.l.b16 %v842
  %v882 = vpack.c.b16 %v867, %v866
  %v883 = vpack.c.b16 %v869, %v868
  %v884 = vpack.c.b16 %v871, %v870
  %v885 = vpack.c.b16 %v873, %v872
  %v886 = vpack.c.b16 %v875, %v874
  %v887 = vpack.c.b16 %v877, %v876
  %v888 = vpack.c.b16 %v879, %v878
  %v889 = vpack.c.b16 %v881, %v880
  %898 = vmatprep.subr.bf16.mxu0 0
  %899 = vmatpush1.bf16.msra.mxu0 %v882
  %900 = vmatprep.subr.bf16.mxu0 0
  %901 = vmatpush1.bf16.msra.mxu0 %v883
  %902 = vmatprep.subr.bf16.mxu0 0
  %903 = vmatpush1.bf16.msra.mxu0 %v884
  %904 = vmatprep.subr.bf16.mxu0 0
  %905 = vmatpush1.bf16.msra.mxu0 %v885
  %906 = vmatprep.subr.bf16.mxu0 0
  %907 = vmatpush1.bf16.msra.mxu0 %v886
  %908 = vmatprep.subr.bf16.mxu0 0
  %909 = vmatpush1.bf16.msra.mxu0 %v887
  %910 = vmatprep.subr.bf16.mxu0 0
  %911 = vmatpush1.bf16.msra.mxu0 %v888
  %912 = vmatprep.subr.bf16.mxu0 0
  %913 = vmatpush1.bf16.msra.mxu0 %v889
  %914 = vmatprep.subr.bf16.mxu0 0
  %915 = vmatpush1.bf16.msra.mxu0 0
  %916 = vmatprep.subr.bf16.mxu0 0
  %917 = vmatpush1.bf16.msra.mxu0 0
  %918 = vmatprep.subr.bf16.mxu0 0
  %919 = vmatpush1.bf16.msra.mxu0 0
  %920 = vmatprep.subr.bf16.mxu0 0
  %921 = vmatpush1.bf16.msra.mxu0 0
  %922 = vmatprep.subr.bf16.mxu0 0
  %923 = vmatpush1.bf16.msra.mxu0 0
  %924 = vmatprep.subr.bf16.mxu0 0
  %925 = vmatpush1.bf16.msra.mxu0 0
  %926 = vmatprep.subr.bf16.mxu0 0
  %927 = vmatpush1.bf16.msra.mxu0 0
  %928 = vmatprep.subr.bf16.mxu0 0
  %929 = vmatpush1.bf16.msra.mxu0 0
  %930 = vmatprep.mubr.bf16.mxu0 0
  %931 = vmatmul.mubr.bf16.gmra.mrb[0].mxu0 %v547
  %v932 = vpop.f32.mrb[0].mxu0
  %v933 = vadd.f32 %v848, %v932
  %v934 = vpop.f32.mrb[0].mxu0
  %v935 = vpop.f32.mrb[0].mxu0
  %v936 = vadd.f32 %v848, %v935
  %v937 = vpop.f32.mrb[0].mxu0
  %938 = vmatprep.mubr.bf16.mxu0 0
  %939 = vmatmul.mubr.bf16.gmra.mrb[0].mxu0 %v548
  %v940 = vpop.f32.mrb[0].mxu0
  %v941 = vadd.f32 %v848, %v940
  %v942 = vpop.f32.mrb[0].mxu0
  %v943 = vpop.f32.mrb[0].mxu0
  %v944 = vadd.f32 %v848, %v943
  %v945 = vpop.f32.mrb[0].mxu0
  %946 = vmatprep.mubr.bf16.mxu0 0
  %947 = vmatmul.mubr.bf16.gmra.mrb[0].mxu0 %v549
  %v948 = vpop.f32.mrb[0].mxu0
  %v949 = vadd.f32 %v848, %v948
  %v950 = vpop.f32.mrb[0].mxu0
  %v951 = vpop.f32.mrb[0].mxu0
  %v952 = vadd.f32 %v848, %v951
  %v953 = vpop.f32.mrb[0].mxu0
  %954 = vmatprep.mubr.bf16.mxu0 0
  %955 = vmatmul.mubr.bf16.gmra.mrb[0].mxu0 %v550
  %v956 = vpop.f32.mrb[0].mxu0
  %v957 = vadd.f32 %v848, %v956
  %v958 = vpop.f32.mrb[0].mxu0
  %v959 = vpop.f32.mrb[0].mxu0
  %v960 = vadd.f32 %v848, %v959
  %v961 = vpop.f32.mrb[0].mxu0
  %962 = vmatprep.mubr.bf16.mxu0 0
  %963 = vmatmul.mubr.bf16.gmra.mrb[0].mxu0 %v551
  %v964 = vpop.f32.mrb[0].mxu0
  %v965 = vadd.f32 %v848, %v964
  %v966 = vpop.f32.mrb[0].mxu0
  %v967 = vpop.f32.mrb[0].mxu0
  %v968 = vadd.f32 %v848, %v967
  %v969 = vpop.f32.mrb[0].mxu0
  %970 = vmatprep.mubr.bf16.mxu0 0
  %971 = vmatmul.mubr.bf16.gmra.mrb[0].mxu0 %v552
  %v972 = vpop.f32.mrb[0].mxu0
  %v973 = vadd.f32 %v848, %v972
  %v974 = vpop.f32.mrb[0].mxu0
  %v975 = vpop.f32.mrb[0].mxu0
  %v976 = vadd.f32 %v848, %v975
  %v977 = vpop.f32.mrb[0].mxu0
  %978 = vmatprep.mubr.bf16.mxu0 0
  %979 = vmatmul.mubr.bf16.gmra.mrb[0].mxu0 %v553
  %v980 = vpop.f32.mrb[0].mxu0
  %v981 = vadd.f32 %v848, %v980
  %v982 = vpop.f32.mrb[0].mxu0
  %v983 = vpop.f32.mrb[0].mxu0
  %v984 = vadd.f32 %v848, %v983
  %v985 = vpop.f32.mrb[0].mxu0
  %986 = vmatprep.mubr.bf16.mxu0 0
  %987 = vmatmul.mubr.bf16.gmra.mrb[0].mxu0 %v554
  %v988 = vpop.f32.mrb[0].mxu0
  %v989 = vadd.f32 %v848, %v988
  %v990 = vpop.f32.mrb[0].mxu0
  %v991 = vpop.f32.mrb[0].mxu0
  %v992 = vadd.f32 %v848, %v991
  %v993 = vpop.f32.mrb[0].mxu0
  %994 = vmatprep.mubr.bf16.mxu0 0
  %995 = vmatmul.mubr.bf16.gmra.mrb[0].mxu0 %v555
  %v996 = vpop.f32.mrb[0].mxu0
  %v997 = vadd.f32 %v848, %v996
  %v998 = vpop.f32.mrb[0].mxu0
  %v999 = vpop.f32.mrb[0].mxu0
  %v1000 = vadd.f32 %v848, %v999
  %v1001 = vpop.f32.mrb[0].mxu0
  %1002 = vmatprep.mubr.bf16.mxu0 0
  %1003 = vmatmul.mubr.bf16.gmra.mrb[0].mxu0 %v556
  %v1004 = vpop.f32.mrb[0].mxu0
  %v1005 = vadd.f32 %v848, %v1004
  %v1006 = vpop.f32.mrb[0].mxu0
  %v1007 = vpop.f32.mrb[0].mxu0
  %v1008 = vadd.f32 %v848, %v1007
  %v1009 = vpop.f32.mrb[0].mxu0
  %1010 = vmatprep.mubr.bf16.mxu0 0
  %1011 = vmatmul.mubr.bf16.gmra.mrb[0].mxu0 %v557
  %v1012 = vpop.f32.mrb[0].mxu0
  %v1013 = vadd.f32 %v848, %v1012
  %v1014 = vpop.f32.mrb[0].mxu0
  %v1015 = vpop.f32.mrb[0].mxu0
  %v1016 = vadd.f32 %v848, %v1015
  %v1017 = vpop.f32.mrb[0].mxu0
  %1018 = vmatprep.mubr.bf16.mxu0 0
  %1019 = vmatmul.mubr.bf16.gmra.mrb[0].mxu0 %v558
  %v1020 = vpop.f32.mrb[0].mxu0
  %v1021 = vadd.f32 %v848, %v1020
  %v1022 = vpop.f32.mrb[0].mxu0
  %v1023 = vpop.f32.mrb[0].mxu0
  %v1024 = vadd.f32 %v848, %v1023
  %v1025 = vpop.f32.mrb[0].mxu0
  %1026 = vmatprep.mubr.bf16.mxu0 0
  %1027 = vmatmul.mubr.bf16.gmra.mrb[0].mxu0 %v559
  %v1028 = vpop.f32.mrb[0].mxu0
  %v1029 = vadd.f32 %v848, %v1028
  %v1030 = vpop.f32.mrb[0].mxu0
  %v1031 = vpop.f32.mrb[0].mxu0
  %v1032 = vadd.f32 %v848, %v1031
  %v1033 = vpop.f32.mrb[0].mxu0
  %1034 = vmatprep.mubr.bf16.mxu0 0
  %1035 = vmatmul.mubr.bf16.gmra.mrb[0].mxu0 %v560
  %v1036 = vpop.f32.mrb[0].mxu0
  %v1037 = vadd.f32 %v848, %v1036
  %v1038 = vpop.f32.mrb[0].mxu0
  %v1039 = vpop.f32.mrb[0].mxu0
  %v1040 = vadd.f32 %v848, %v1039
  %v1041 = vpop.f32.mrb[0].mxu0
  %1042 = vmatprep.mubr.bf16.mxu0 0
  %1043 = vmatmul.mubr.bf16.gmra.mrb[0].mxu0 %v561
  %v1044 = vpop.f32.mrb[0].mxu0
  %v1045 = vadd.f32 %v848, %v1044
  %v1046 = vpop.f32.mrb[0].mxu0
  %v1047 = vpop.f32.mrb[0].mxu0
  %v1048 = vadd.f32 %v848, %v1047
  %v1049 = vpop.f32.mrb[0].mxu0
  %1050 = vmatprep.mubr.bf16.mxu0 0
  %1051 = vmatmul.mubr.bf16.gmra.mrb[0].mxu0 %v562
  %v1052 = vpop.f32.mrb[0].mxu0
  %v1053 = vadd.f32 %v848, %v1052
  %v1054 = vpop.f32.mrb[0].mxu0
  %v1055 = vpop.f32.mrb[0].mxu0
  %v1056 = vadd.f32 %v848, %v1055
  %v1057 = vpop.f32.mrb[0].mxu0
  %1058 = vdwg.mxu0
  %v1059 = vmax.f32 %v933, 0.0
  %v1060 = vmax.f32 %v936, 0.0
  %v1061 = vmax.f32 %v941, 0.0
  %v1062 = vmax.f32 %v944, 0.0
  %v1063 = vmax.f32 %v949, 0.0
  %v1064 = vmax.f32 %v952, 0.0
  %v1065 = vmax.f32 %v957, 0.0
  %v1066 = vmax.f32 %v960, 0.0
  %v1067 = vmax.f32 %v965, 0.0
  %v1068 = vmax.f32 %v968, 0.0
  %v1069 = vmax.f32 %v973, 0.0
  %v1070 = vmax.f32 %v976, 0.0
  %v1071 = vmax.f32 %v981, 0.0
  %v1072 = vmax.f32 %v984, 0.0
  %v1073 = vmax.f32 %v989, 0.0
  %v1074 = vmax.f32 %v992, 0.0
  %v1075 = vmax.f32 %v997, 0.0
  %v1076 = vmax.f32 %v1000, 0.0
  %v1077 = vmax.f32 %v1005, 0.0
  %v1078 = vmax.f32 %v1008, 0.0
  %v1079 = vmax.f32 %v1013, 0.0
  %v1080 = vmax.f32 %v1016, 0.0
  %v1081 = vmax.f32 %v1021, 0.0
  %v1082 = vmax.f32 %v1024, 0.0
  %v1083 = vmax.f32 %v1029, 0.0
  %v1084 = vmax.f32 %v1032, 0.0
  %v1085 = vmax.f32 %v1037, 0.0
  %v1086 = vmax.f32 %v1040, 0.0
  %v1087 = vmax.f32 %v1045, 0.0
  %v1088 = vmax.f32 %v1048, 0.0
  %v1089 = vmax.f32 %v1053, 0.0
  %v1090 = vmax.f32 %v1056, 0.0
  %v1091 = vld [vmem:[%s5] sm:$0x1]
  %v1092 = vld [vmem:[%s6] sm:$0x1]
  %1093 = vadd.xlane.f32.xlu0 %v795
  %v1094 = vpop.xlane.xlu0 %1093
  %1095 = vadd.xlane.f32.xlu0 %v796
  %v1096 = vpop.xlane.xlu0 %1095
  %1097 = vadd.xlane.f32.xlu0 %v797
  %v1098 = vpop.xlane.xlu0 %1097
  %1099 = vadd.xlane.f32.xlu0 %v798
  %v1100 = vpop.xlane.xlu0 %1099
  %1101 = vadd.xlane.f32.xlu0 %v799
  %v1102 = vpop.xlane.xlu0 %1101
  %1103 = vadd.xlane.f32.xlu0 %v800
  %v1104 = vpop.xlane.xlu0 %1103
  %1105 = vadd.xlane.f32.xlu0 %v801
  %v1106 = vpop.xlane.xlu0 %1105
  %1107 = vadd.xlane.f32.xlu0 %v802
  %v1108 = vpop.xlane.xlu0 %1107
  %1109 = vadd.xlane.f32.xlu0 %v803
  %v1110 = vpop.xlane.xlu0 %1109
  %1111 = vadd.xlane.f32.xlu0 %v804
  %v1112 = vpop.xlane.xlu0 %1111
  %1113 = vadd.xlane.f32.xlu0 %v805
  %v1114 = vpop.xlane.xlu0 %1113
  %1115 = vadd.xlane.f32.xlu0 %v806
  %v1116 = vpop.xlane.xlu0 %1115
  %1117 = vadd.xlane.f32.xlu0 %v807
  %v1118 = vpop.xlane.xlu0 %1117
  %1119 = vadd.xlane.f32.xlu0 %v808
  %v1120 = vpop.xlane.xlu0 %1119
  %1121 = vadd.xlane.f32.xlu0 %v809
  %v1122 = vpop.xlane.xlu0 %1121
  %1123 = vadd.xlane.f32.xlu0 %v810
  %v1124 = vpop.xlane.xlu0 %1123
  %1125 = vadd.xlane.f32.xlu0 %v811
  %v1126 = vpop.xlane.xlu0 %1125
  %1127 = vadd.xlane.f32.xlu0 %v812
  %v1128 = vpop.xlane.xlu0 %1127
  %1129 = vadd.xlane.f32.xlu0 %v813
  %v1130 = vpop.xlane.xlu0 %1129
  %1131 = vadd.xlane.f32.xlu0 %v814
  %v1132 = vpop.xlane.xlu0 %1131
  %1133 = vadd.xlane.f32.xlu0 %v815
  %v1134 = vpop.xlane.xlu0 %1133
  %1135 = vadd.xlane.f32.xlu0 %v816
  %v1136 = vpop.xlane.xlu0 %1135
  %1137 = vadd.xlane.f32.xlu0 %v817
  %v1138 = vpop.xlane.xlu0 %1137
  %1139 = vadd.xlane.f32.xlu0 %v818
  %v1140 = vpop.xlane.xlu0 %1139
  %1141 = vadd.xlane.f32.xlu0 %v819
  %v1142 = vpop.xlane.xlu0 %1141
  %1143 = vadd.xlane.f32.xlu0 %v820
  %v1144 = vpop.xlane.xlu0 %1143
  %1145 = vadd.xlane.f32.xlu0 %v821
  %v1146 = vpop.xlane.xlu0 %1145
  %1147 = vadd.xlane.f32.xlu0 %v822
  %v1148 = vpop.xlane.xlu0 %1147
  %1149 = vadd.xlane.f32.xlu0 %v823
  %v1150 = vpop.xlane.xlu0 %1149
  %1151 = vadd.xlane.f32.xlu0 %v824
  %v1152 = vpop.xlane.xlu0 %1151
  %1153 = vadd.xlane.f32.xlu0 %v825
  %v1154 = vpop.xlane.xlu0 %1153
  %1155 = vadd.xlane.f32.xlu0 %v826
  %v1156 = vpop.xlane.xlu0 %1155
  %v1157 = vmul.f32 %v1094, 0.03125
  %v1158 = vmul.f32 %v1096, 0.03125
  %v1159 = vmul.f32 %v1098, 0.03125
  %v1160 = vmul.f32 %v1100, 0.03125
  %v1161 = vmul.f32 %v1102, 0.03125
  %v1162 = vmul.f32 %v1104, 0.03125
  %v1163 = vmul.f32 %v1106, 0.03125
  %v1164 = vmul.f32 %v1108, 0.03125
  %v1165 = vmul.f32 %v1110, 0.03125
  %v1166 = vmul.f32 %v1112, 0.03125
  %v1167 = vmul.f32 %v1114, 0.03125
  %v1168 = vmul.f32 %v1116, 0.03125
  %v1169 = vmul.f32 %v1118, 0.03125
  %v1170 = vmul.f32 %v1120, 0.03125
  %v1171 = vmul.f32 %v1122, 0.03125
  %v1172 = vmul.f32 %v1124, 0.03125
  %v1173 = vmul.f32 %v1126, 0.03125
  %v1174 = vmul.f32 %v1128, 0.03125
  %v1175 = vmul.f32 %v1130, 0.03125
  %v1176 = vmul.f32 %v1132, 0.03125
  %v1177 = vmul.f32 %v1134, 0.03125
  %v1178 = vmul.f32 %v1136, 0.03125
  %v1179 = vmul.f32 %v1138, 0.03125
  %v1180 = vmul.f32 %v1140, 0.03125
  %v1181 = vmul.f32 %v1142, 0.03125
  %v1182 = vmul.f32 %v1144, 0.03125
  %v1183 = vmul.f32 %v1146, 0.03125
  %v1184 = vmul.f32 %v1148, 0.03125
  %v1185 = vmul.f32 %v1150, 0.03125
  %v1186 = vmul.f32 %v1152, 0.03125
  %v1187 = vmul.f32 %v1154, 0.03125
  %v1188 = vmul.f32 %v1156, 0.03125
  %v1189 = vsub.f32 %v795, %v1157
  %v1190 = vsub.f32 %v796, %v1158
  %v1191 = vsub.f32 %v797, %v1159
  %v1192 = vsub.f32 %v798, %v1160
  %v1193 = vsub.f32 %v799, %v1161
  %v1194 = vsub.f32 %v800, %v1162
  %v1195 = vsub.f32 %v801, %v1163
  %v1196 = vsub.f32 %v802, %v1164
  %v1197 = vsub.f32 %v803, %v1165
  %v1198 = vsub.f32 %v804, %v1166
  %v1199 = vsub.f32 %v805, %v1167
  %v1200 = vsub.f32 %v806, %v1168
  %v1201 = vsub.f32 %v807, %v1169
  %v1202 = vsub.f32 %v808, %v1170
  %v1203 = vsub.f32 %v809, %v1171
  %v1204 = vsub.f32 %v810, %v1172
  %v1205 = vsub.f32 %v811, %v1173
  %v1206 = vsub.f32 %v812, %v1174
  %v1207 = vsub.f32 %v813, %v1175
  %v1208 = vsub.f32 %v814, %v1176
  %v1209 = vsub.f32 %v815, %v1177
  %v1210 = vsub.f32 %v816, %v1178
  %v1211 = vsub.f32 %v817, %v1179
  %v1212 = vsub.f32 %v818, %v1180
  %v1213 = vsub.f32 %v819, %v1181
  %v1214 = vsub.f32 %v820, %v1182
  %v1215 = vsub.f32 %v821, %v1183
  %v1216 = vsub.f32 %v822, %v1184
  %v1217 = vsub.f32 %v823, %v1185
  %v1218 = vsub.f32 %v824, %v1186
  %v1219 = vsub.f32 %v825, %v1187
  %v1220 = vsub.f32 %v826, %v1188
  %v1221 = vlaneseq
  %v1222 = vand.u32 %v1221, 127
  %vm1223 = vcmp.lt.s32.totalorder %v1222, 32
  %v1224 = vsel %vm1223, %v1189, 0.0
  %v1225 = vsel %vm1223, %v1190, 0.0
  %v1226 = vsel %vm1223, %v1191, 0.0
  %v1227 = vsel %vm1223, %v1192, 0.0
  %v1228 = vsel %vm1223, %v1193, 0.0
  %v1229 = vsel %vm1223, %v1194, 0.0
  %v1230 = vsel %vm1223, %v1195, 0.0
  %v1231 = vsel %vm1223, %v1196, 0.0
  %v1232 = vsel %vm1223, %v1197, 0.0
  %v1233 = vsel %vm1223, %v1198, 0.0
  %v1234 = vsel %vm1223, %v1199, 0.0
  %v1235 = vsel %vm1223, %v1200, 0.0
  %v1236 = vsel %vm1223, %v1201, 0.0
  %v1237 = vsel %vm1223, %v1202, 0.0
  %v1238 = vsel %vm1223, %v1203, 0.0
  %v1239 = vsel %vm1223, %v1204, 0.0
  %v1240 = vsel %vm1223, %v1205, 0.0
  %v1241 = vsel %vm1223, %v1206, 0.0
  %v1242 = vsel %vm1223, %v1207, 0.0
  %v1243 = vsel %vm1223, %v1208, 0.0
  %v1244 = vsel %vm1223, %v1209, 0.0
  %v1245 = vsel %vm1223, %v1210, 0.0
  %v1246 = vsel %vm1223, %v1211, 0.0
  %v1247 = vsel %vm1223, %v1212, 0.0
  %v1248 = vsel %vm1223, %v1213, 0.0
  %v1249 = vsel %vm1223, %v1214, 0.0
  %v1250 = vsel %vm1223, %v1215, 0.0
  %v1251 = vsel %vm1223, %v1216, 0.0
  %v1252 = vsel %vm1223, %v1217, 0.0
  %v1253 = vsel %vm1223, %v1218, 0.0
  %v1254 = vsel %vm1223, %v1219, 0.0
  %v1255 = vsel %vm1223, %v1220, 0.0
  %v1256 = vmul.f32 %v1224, %v1224
  %v1257 = vmul.f32 %v1225, %v1225
  %v1258 = vmul.f32 %v1226, %v1226
  %v1259 = vmul.f32 %v1227, %v1227
  %v1260 = vmul.f32 %v1228, %v1228
  %v1261 = vmul.f32 %v1229, %v1229
  %v1262 = vmul.f32 %v1230, %v1230
  %v1263 = vmul.f32 %v1231, %v1231
  %v1264 = vmul.f32 %v1232, %v1232
  %v1265 = vmul.f32 %v1233, %v1233
  %v1266 = vmul.f32 %v1234, %v1234
  %v1267 = vmul.f32 %v1235, %v1235
  %v1268 = vmul.f32 %v1236, %v1236
  %v1269 = vmul.f32 %v1237, %v1237
  %v1270 = vmul.f32 %v1238, %v1238
  %v1271 = vmul.f32 %v1239, %v1239
  %v1272 = vmul.f32 %v1240, %v1240
  %v1273 = vmul.f32 %v1241, %v1241
  %v1274 = vmul.f32 %v1242, %v1242
  %v1275 = vmul.f32 %v1243, %v1243
  %v1276 = vmul.f32 %v1244, %v1244
  %v1277 = vmul.f32 %v1245, %v1245
  %v1278 = vmul.f32 %v1246, %v1246
  %v1279 = vmul.f32 %v1247, %v1247
  %v1280 = vmul.f32 %v1248, %v1248
  %v1281 = vmul.f32 %v1249, %v1249
  %v1282 = vmul.f32 %v1250, %v1250
  %v1283 = vmul.f32 %v1251, %v1251
  %v1284 = vmul.f32 %v1252, %v1252
  %v1285 = vmul.f32 %v1253, %v1253
  %v1286 = vmul.f32 %v1254, %v1254
  %v1287 = vmul.f32 %v1255, %v1255
  %1288 = vadd.xlane.f32.xlu0 %v1256
  %v1289 = vpop.xlane.xlu0 %1288
  %1290 = vadd.xlane.f32.xlu0 %v1257
  %v1291 = vpop.xlane.xlu0 %1290
  %1292 = vadd.xlane.f32.xlu0 %v1258
  %v1293 = vpop.xlane.xlu0 %1292
  %1294 = vadd.xlane.f32.xlu0 %v1259
  %v1295 = vpop.xlane.xlu0 %1294
  %1296 = vadd.xlane.f32.xlu0 %v1260
  %v1297 = vpop.xlane.xlu0 %1296
  %1298 = vadd.xlane.f32.xlu0 %v1261
  %v1299 = vpop.xlane.xlu0 %1298
  %1300 = vadd.xlane.f32.xlu0 %v1262
  %v1301 = vpop.xlane.xlu0 %1300
  %1302 = vadd.xlane.f32.xlu0 %v1263
  %v1303 = vpop.xlane.xlu0 %1302
  %1304 = vadd.xlane.f32.xlu0 %v1264
  %v1305 = vpop.xlane.xlu0 %1304
  %1306 = vadd.xlane.f32.xlu0 %v1265
  %v1307 = vpop.xlane.xlu0 %1306
  %1308 = vadd.xlane.f32.xlu0 %v1266
  %v1309 = vpop.xlane.xlu0 %1308
  %1310 = vadd.xlane.f32.xlu0 %v1267
  %v1311 = vpop.xlane.xlu0 %1310
  %1312 = vadd.xlane.f32.xlu0 %v1268
  %v1313 = vpop.xlane.xlu0 %1312
  %1314 = vadd.xlane.f32.xlu0 %v1269
  %v1315 = vpop.xlane.xlu0 %1314
  %1316 = vadd.xlane.f32.xlu0 %v1270
  %v1317 = vpop.xlane.xlu0 %1316
  %1318 = vadd.xlane.f32.xlu0 %v1271
  %v1319 = vpop.xlane.xlu0 %1318
  %1320 = vadd.xlane.f32.xlu0 %v1272
  %v1321 = vpop.xlane.xlu0 %1320
  %1322 = vadd.xlane.f32.xlu0 %v1273
  %v1323 = vpop.xlane.xlu0 %1322
  %1324 = vadd.xlane.f32.xlu0 %v1274
  %v1325 = vpop.xlane.xlu0 %1324
  %1326 = vadd.xlane.f32.xlu0 %v1275
  %v1327 = vpop.xlane.xlu0 %1326
  %1328 = vadd.xlane.f32.xlu0 %v1276
  %v1329 = vpop.xlane.xlu0 %1328
  %1330 = vadd.xlane.f32.xlu0 %v1277
  %v1331 = vpop.xlane.xlu0 %1330
  %1332 = vadd.xlane.f32.xlu0 %v1278
  %v1333 = vpop.xlane.xlu0 %1332
  %1334 = vadd.xlane.f32.xlu0 %v1279
  %v1335 = vpop.xlane.xlu0 %1334
  %1336 = vadd.xlane.f32.xlu0 %v1280
  %v1337 = vpop.xlane.xlu0 %1336
  %1338 = vadd.xlane.f32.xlu0 %v1281
  %v1339 = vpop.xlane.xlu0 %1338
  %1340 = vadd.xlane.f32.xlu0 %v1282
  %v1341 = vpop.xlane.xlu0 %1340
  %1342 = vadd.xlane.f32.xlu0 %v1283
  %v1343 = vpop.xlane.xlu0 %1342
  %1344 = vadd.xlane.f32.xlu0 %v1284
  %v1345 = vpop.xlane.xlu0 %1344
  %1346 = vadd.xlane.f32.xlu0 %v1285
  %v1347 = vpop.xlane.xlu0 %1346
  %1348 = vadd.xlane.f32.xlu0 %v1286
  %v1349 = vpop.xlane.xlu0 %1348
  %1350 = vadd.xlane.f32.xlu0 %v1287
  %v1351 = vpop.xlane.xlu0 %1350
  %v1352 = vmul.f32 %v1289, 0.03125
  %v1353 = vmul.f32 %v1291, 0.03125
  %v1354 = vmul.f32 %v1293, 0.03125
  %v1355 = vmul.f32 %v1295, 0.03125
  %v1356 = vmul.f32 %v1297, 0.03125
  %v1357 = vmul.f32 %v1299, 0.03125
  %v1358 = vmul.f32 %v1301, 0.03125
  %v1359 = vmul.f32 %v1303, 0.03125
  %v1360 = vmul.f32 %v1305, 0.03125
  %v1361 = vmul.f32 %v1307, 0.03125
  %v1362 = vmul.f32 %v1309, 0.03125
  %v1363 = vmul.f32 %v1311, 0.03125
  %v1364 = vmul.f32 %v1313, 0.03125
  %v1365 = vmul.f32 %v1315, 0.03125
  %v1366 = vmul.f32 %v1317, 0.03125
  %v1367 = vmul.f32 %v1319, 0.03125
  %v1368 = vmul.f32 %v1321, 0.03125
  %v1369 = vmul.f32 %v1323, 0.03125
  %v1370 = vmul.f32 %v1325, 0.03125
  %v1371 = vmul.f32 %v1327, 0.03125
  %v1372 = vmul.f32 %v1329, 0.03125
  %v1373 = vmul.f32 %v1331, 0.03125
  %v1374 = vmul.f32 %v1333, 0.03125
  %v1375 = vmul.f32 %v1335, 0.03125
  %v1376 = vmul.f32 %v1337, 0.03125
  %v1377 = vmul.f32 %v1339, 0.03125
  %v1378 = vmul.f32 %v1341, 0.03125
  %v1379 = vmul.f32 %v1343, 0.03125
  %v1380 = vmul.f32 %v1345, 0.03125
  %v1381 = vmul.f32 %v1347, 0.03125
  %v1382 = vmul.f32 %v1349, 0.03125
  %v1383 = vmul.f32 %v1351, 0.03125
  %v1384 = vadd.f32 %v1352, 1e-09
  %v1385 = vadd.f32 %v1353, 1e-09
  %v1386 = vadd.f32 %v1354, 1e-09
  %v1387 = vadd.f32 %v1355, 1e-09
  %v1388 = vadd.f32 %v1356, 1e-09
  %v1389 = vadd.f32 %v1357, 1e-09
  %v1390 = vadd.f32 %v1358, 1e-09
  %v1391 = vadd.f32 %v1359, 1e-09
  %v1392 = vadd.f32 %v1360, 1e-09
  %v1393 = vadd.f32 %v1361, 1e-09
  %v1394 = vadd.f32 %v1362, 1e-09
  %v1395 = vadd.f32 %v1363, 1e-09
  %v1396 = vadd.f32 %v1364, 1e-09
  %v1397 = vadd.f32 %v1365, 1e-09
  %v1398 = vadd.f32 %v1366, 1e-09
  %v1399 = vadd.f32 %v1367, 1e-09
  %v1400 = vadd.f32 %v1368, 1e-09
  %v1401 = vadd.f32 %v1369, 1e-09
  %v1402 = vadd.f32 %v1370, 1e-09
  %v1403 = vadd.f32 %v1371, 1e-09
  %v1404 = vadd.f32 %v1372, 1e-09
  %v1405 = vadd.f32 %v1373, 1e-09
  %v1406 = vadd.f32 %v1374, 1e-09
  %v1407 = vadd.f32 %v1375, 1e-09
  %v1408 = vadd.f32 %v1376, 1e-09
  %v1409 = vadd.f32 %v1377, 1e-09
  %v1410 = vadd.f32 %v1378, 1e-09
  %v1411 = vadd.f32 %v1379, 1e-09
  %v1412 = vadd.f32 %v1380, 1e-09
  %v1413 = vadd.f32 %v1381, 1e-09
  %v1414 = vadd.f32 %v1382, 1e-09
  %v1415 = vadd.f32 %v1383, 1e-09
  %v1417 = vlaneseq
  %v1418 = vshrl.u32 %v1417, 7
  %v1419 = vsub.s32 0, %v1418
  %v1420 = vrot.slane %v1091, %v1419
  %v1422 = vmul.f32 %v1189, %v1420
  %v1423 = vmul.f32 %v1190, %v1420
  %v1424 = vmul.f32 %v1191, %v1420
  %v1425 = vmul.f32 %v1192, %v1420
  %v1426 = vmul.f32 %v1193, %v1420
  %v1427 = vmul.f32 %v1194, %v1420
  %v1428 = vmul.f32 %v1195, %v1420
  %v1429 = vmul.f32 %v1196, %v1420
  %v1430 = vmul.f32 %v1197, %v1420
  %v1431 = vmul.f32 %v1198, %v1420
  %v1432 = vmul.f32 %v1199, %v1420
  %v1433 = vmul.f32 %v1200, %v1420
  %v1434 = vmul.f32 %v1201, %v1420
  %v1435 = vmul.f32 %v1202, %v1420
  %v1436 = vmul.f32 %v1203, %v1420
  %v1437 = vmul.f32 %v1204, %v1420
  %v1438 = vmul.f32 %v1205, %v1420
  %v1439 = vmul.f32 %v1206, %v1420
  %v1440 = vmul.f32 %v1207, %v1420
  %v1441 = vmul.f32 %v1208, %v1420
  %v1442 = vmul.f32 %v1209, %v1420
  %v1443 = vmul.f32 %v1210, %v1420
  %v1444 = vmul.f32 %v1211, %v1420
  %v1445 = vmul.f32 %v1212, %v1420
  %v1446 = vmul.f32 %v1213, %v1420
  %v1447 = vmul.f32 %v1214, %v1420
  %v1448 = vmul.f32 %v1215, %v1420
  %v1449 = vmul.f32 %v1216, %v1420
  %v1450 = vmul.f32 %v1217, %v1420
  %v1451 = vmul.f32 %v1218, %v1420
  %v1452 = vmul.f32 %v1219, %v1420
  %v1453 = vmul.f32 %v1220, %v1420
  %v1454 = vrsqrt.pop %v1384
  %v1455 = vrsqrt.pop %v1385
  %v1456 = vrsqrt.pop %v1386
  %v1457 = vrsqrt.pop %v1387
  %v1458 = vrsqrt.pop %v1388
  %v1459 = vrsqrt.pop %v1389
  %v1460 = vrsqrt.pop %v1390
  %v1461 = vrsqrt.pop %v1391
  %v1462 = vrsqrt.pop %v1392
  %v1463 = vrsqrt.pop %v1393
  %v1464 = vrsqrt.pop %v1394
  %v1465 = vrsqrt.pop %v1395
  %v1466 = vrsqrt.pop %v1396
  %v1467 = vrsqrt.pop %v1397
  %v1468 = vrsqrt.pop %v1398
  %v1469 = vrsqrt.pop %v1399
  %v1470 = vrsqrt.pop %v1400
  %v1471 = vrsqrt.pop %v1401
  %v1472 = vrsqrt.pop %v1402
  %v1473 = vrsqrt.pop %v1403
  %v1474 = vrsqrt.pop %v1404
  %v1475 = vrsqrt.pop %v1405
  %v1476 = vrsqrt.pop %v1406
  %v1477 = vrsqrt.pop %v1407
  %v1478 = vrsqrt.pop %v1408
  %v1479 = vrsqrt.pop %v1409
  %v1480 = vrsqrt.pop %v1410
  %v1481 = vrsqrt.pop %v1411
  %v1482 = vrsqrt.pop %v1412
  %v1483 = vrsqrt.pop %v1413
  %v1484 = vrsqrt.pop %v1414
  %v1485 = vrsqrt.pop %v1415
  %v1486 = vmul.f32 %v1422, %v1454
  %v1487 = vmul.f32 %v1423, %v1455
  %v1488 = vmul.f32 %v1424, %v1456
  %v1489 = vmul.f32 %v1425, %v1457
  %v1490 = vmul.f32 %v1426, %v1458
  %v1491 = vmul.f32 %v1427, %v1459
  %v1492 = vmul.f32 %v1428, %v1460
  %v1493 = vmul.f32 %v1429, %v1461
  %v1494 = vmul.f32 %v1430, %v1462
  %v1495 = vmul.f32 %v1431, %v1463
  %v1496 = vmul.f32 %v1432, %v1464
  %v1497 = vmul.f32 %v1433, %v1465
  %v1498 = vmul.f32 %v1434, %v1466
  %v1499 = vmul.f32 %v1435, %v1467
  %v1500 = vmul.f32 %v1436, %v1468
  %v1501 = vmul.f32 %v1437, %v1469
  %v1502 = vmul.f32 %v1438, %v1470
  %v1503 = vmul.f32 %v1439, %v1471
  %v1504 = vmul.f32 %v1440, %v1472
  %v1505 = vmul.f32 %v1441, %v1473
  %v1506 = vmul.f32 %v1442, %v1474
  %v1507 = vmul.f32 %v1443, %v1475
  %v1508 = vmul.f32 %v1444, %v1476
  %v1509 = vmul.f32 %v1445, %v1477
  %v1510 = vmul.f32 %v1446, %v1478
  %v1511 = vmul.f32 %v1447, %v1479
  %v1512 = vmul.f32 %v1448, %v1480
  %v1513 = vmul.f32 %v1449, %v1481
  %v1514 = vmul.f32 %v1450, %v1482
  %v1515 = vmul.f32 %v1451, %v1483
  %v1516 = vmul.f32 %v1452, %v1484
  %v1517 = vmul.f32 %v1453, %v1485
  %v1519 = vlaneseq
  %v1520 = vshrl.u32 %v1519, 7
  %v1521 = vsub.s32 0, %v1520
  %v1522 = vrot.slane %v1092, %v1521
  %v1524 = vadd.f32 %v1486, %v1522
  %v1525 = vadd.f32 %v1487, %v1522
  %v1526 = vadd.f32 %v1488, %v1522
  %v1527 = vadd.f32 %v1489, %v1522
  %v1528 = vadd.f32 %v1490, %v1522
  %v1529 = vadd.f32 %v1491, %v1522
  %v1530 = vadd.f32 %v1492, %v1522
  %v1531 = vadd.f32 %v1493, %v1522
  %v1532 = vadd.f32 %v1494, %v1522
  %v1533 = vadd.f32 %v1495, %v1522
  %v1534 = vadd.f32 %v1496, %v1522
  %v1535 = vadd.f32 %v1497, %v1522
  %v1536 = vadd.f32 %v1498, %v1522
  %v1537 = vadd.f32 %v1499, %v1522
  %v1538 = vadd.f32 %v1500, %v1522
  %v1539 = vadd.f32 %v1501, %v1522
  %v1540 = vadd.f32 %v1502, %v1522
  %v1541 = vadd.f32 %v1503, %v1522
  %v1542 = vadd.f32 %v1504, %v1522
  %v1543 = vadd.f32 %v1505, %v1522
  %v1544 = vadd.f32 %v1506, %v1522
  %v1545 = vadd.f32 %v1507, %v1522
  %v1546 = vadd.f32 %v1508, %v1522
  %v1547 = vadd.f32 %v1509, %v1522
  %v1548 = vadd.f32 %v1510, %v1522
  %v1549 = vadd.f32 %v1511, %v1522
  %v1550 = vadd.f32 %v1512, %v1522
  %v1551 = vadd.f32 %v1513, %v1522
  %v1552 = vadd.f32 %v1514, %v1522
  %v1553 = vadd.f32 %v1515, %v1522
  %v1554 = vadd.f32 %v1516, %v1522
  %v1555 = vadd.f32 %v1517, %v1522
  %v1556 = vld [vmem:[%s8] sm:$0x1]
  %v1557 = vld [vmem:[%s9] sm:$0x1]
  %1558 = vadd.xlane.f32.xlu0 %v1059
  %v1559 = vpop.xlane.xlu0 %1558
  %1560 = vadd.xlane.f32.xlu0 %v1060
  %v1561 = vpop.xlane.xlu0 %1560
  %1562 = vadd.xlane.f32.xlu0 %v1061
  %v1563 = vpop.xlane.xlu0 %1562
  %1564 = vadd.xlane.f32.xlu0 %v1062
  %v1565 = vpop.xlane.xlu0 %1564
  %1566 = vadd.xlane.f32.xlu0 %v1063
  %v1567 = vpop.xlane.xlu0 %1566
  %1568 = vadd.xlane.f32.xlu0 %v1064
  %v1569 = vpop.xlane.xlu0 %1568
  %1570 = vadd.xlane.f32.xlu0 %v1065
  %v1571 = vpop.xlane.xlu0 %1570
  %1572 = vadd.xlane.f32.xlu0 %v1066
  %v1573 = vpop.xlane.xlu0 %1572
  %1574 = vadd.xlane.f32.xlu0 %v1067
  %v1575 = vpop.xlane.xlu0 %1574
  %1576 = vadd.xlane.f32.xlu0 %v1068
  %v1577 = vpop.xlane.xlu0 %1576
  %1578 = vadd.xlane.f32.xlu0 %v1069
  %v1579 = vpop.xlane.xlu0 %1578
  %1580 = vadd.xlane.f32.xlu0 %v1070
  %v1581 = vpop.xlane.xlu0 %1580
  %1582 = vadd.xlane.f32.xlu0 %v1071
  %v1583 = vpop.xlane.xlu0 %1582
  %1584 = vadd.xlane.f32.xlu0 %v1072
  %v1585 = vpop.xlane.xlu0 %1584
  %1586 = vadd.xlane.f32.xlu0 %v1073
  %v1587 = vpop.xlane.xlu0 %1586
  %1588 = vadd.xlane.f32.xlu0 %v1074
  %v1589 = vpop.xlane.xlu0 %1588
  %1590 = vadd.xlane.f32.xlu0 %v1075
  %v1591 = vpop.xlane.xlu0 %1590
  %1592 = vadd.xlane.f32.xlu0 %v1076
  %v1593 = vpop.xlane.xlu0 %1592
  %1594 = vadd.xlane.f32.xlu0 %v1077
  %v1595 = vpop.xlane.xlu0 %1594
  %1596 = vadd.xlane.f32.xlu0 %v1078
  %v1597 = vpop.xlane.xlu0 %1596
  %1598 = vadd.xlane.f32.xlu0 %v1079
  %v1599 = vpop.xlane.xlu0 %1598
  %1600 = vadd.xlane.f32.xlu0 %v1080
  %v1601 = vpop.xlane.xlu0 %1600
  %1602 = vadd.xlane.f32.xlu0 %v1081
  %v1603 = vpop.xlane.xlu0 %1602
  %1604 = vadd.xlane.f32.xlu0 %v1082
  %v1605 = vpop.xlane.xlu0 %1604
  %1606 = vadd.xlane.f32.xlu0 %v1083
  %v1607 = vpop.xlane.xlu0 %1606
  %1608 = vadd.xlane.f32.xlu0 %v1084
  %v1609 = vpop.xlane.xlu0 %1608
  %1610 = vadd.xlane.f32.xlu0 %v1085
  %v1611 = vpop.xlane.xlu0 %1610
  %1612 = vadd.xlane.f32.xlu0 %v1086
  %v1613 = vpop.xlane.xlu0 %1612
  %1614 = vadd.xlane.f32.xlu0 %v1087
  %v1615 = vpop.xlane.xlu0 %1614
  %1616 = vadd.xlane.f32.xlu0 %v1088
  %v1617 = vpop.xlane.xlu0 %1616
  %1618 = vadd.xlane.f32.xlu0 %v1089
  %v1619 = vpop.xlane.xlu0 %1618
  %1620 = vadd.xlane.f32.xlu0 %v1090
  %v1621 = vpop.xlane.xlu0 %1620
  %v1622 = vmul.f32 %v1559, 0.03125
  %v1623 = vmul.f32 %v1561, 0.03125
  %v1624 = vmul.f32 %v1563, 0.03125
  %v1625 = vmul.f32 %v1565, 0.03125
  %v1626 = vmul.f32 %v1567, 0.03125
  %v1627 = vmul.f32 %v1569, 0.03125
  %v1628 = vmul.f32 %v1571, 0.03125
  %v1629 = vmul.f32 %v1573, 0.03125
  %v1630 = vmul.f32 %v1575, 0.03125
  %v1631 = vmul.f32 %v1577, 0.03125
  %v1632 = vmul.f32 %v1579, 0.03125
  %v1633 = vmul.f32 %v1581, 0.03125
  %v1634 = vmul.f32 %v1583, 0.03125
  %v1635 = vmul.f32 %v1585, 0.03125
  %v1636 = vmul.f32 %v1587, 0.03125
  %v1637 = vmul.f32 %v1589, 0.03125
  %v1638 = vmul.f32 %v1591, 0.03125
  %v1639 = vmul.f32 %v1593, 0.03125
  %v1640 = vmul.f32 %v1595, 0.03125
  %v1641 = vmul.f32 %v1597, 0.03125
  %v1642 = vmul.f32 %v1599, 0.03125
  %v1643 = vmul.f32 %v1601, 0.03125
  %v1644 = vmul.f32 %v1603, 0.03125
  %v1645 = vmul.f32 %v1605, 0.03125
  %v1646 = vmul.f32 %v1607, 0.03125
  %v1647 = vmul.f32 %v1609, 0.03125
  %v1648 = vmul.f32 %v1611, 0.03125
  %v1649 = vmul.f32 %v1613, 0.03125
  %v1650 = vmul.f32 %v1615, 0.03125
  %v1651 = vmul.f32 %v1617, 0.03125
  %v1652 = vmul.f32 %v1619, 0.03125
  %v1653 = vmul.f32 %v1621, 0.03125
  %v1654 = vsub.f32 %v1059, %v1622
  %v1655 = vsub.f32 %v1060, %v1623
  %v1656 = vsub.f32 %v1061, %v1624
  %v1657 = vsub.f32 %v1062, %v1625
  %v1658 = vsub.f32 %v1063, %v1626
  %v1659 = vsub.f32 %v1064, %v1627
  %v1660 = vsub.f32 %v1065, %v1628
  %v1661 = vsub.f32 %v1066, %v1629
  %v1662 = vsub.f32 %v1067, %v1630
  %v1663 = vsub.f32 %v1068, %v1631
  %v1664 = vsub.f32 %v1069, %v1632
  %v1665 = vsub.f32 %v1070, %v1633
  %v1666 = vsub.f32 %v1071, %v1634
  %v1667 = vsub.f32 %v1072, %v1635
  %v1668 = vsub.f32 %v1073, %v1636
  %v1669 = vsub.f32 %v1074, %v1637
  %v1670 = vsub.f32 %v1075, %v1638
  %v1671 = vsub.f32 %v1076, %v1639
  %v1672 = vsub.f32 %v1077, %v1640
  %v1673 = vsub.f32 %v1078, %v1641
  %v1674 = vsub.f32 %v1079, %v1642
  %v1675 = vsub.f32 %v1080, %v1643
  %v1676 = vsub.f32 %v1081, %v1644
  %v1677 = vsub.f32 %v1082, %v1645
  %v1678 = vsub.f32 %v1083, %v1646
  %v1679 = vsub.f32 %v1084, %v1647
  %v1680 = vsub.f32 %v1085, %v1648
  %v1681 = vsub.f32 %v1086, %v1649
  %v1682 = vsub.f32 %v1087, %v1650
  %v1683 = vsub.f32 %v1088, %v1651
  %v1684 = vsub.f32 %v1089, %v1652
  %v1685 = vsub.f32 %v1090, %v1653
  %v1686 = vsel %vm1223, %v1654, 0.0
  %v1687 = vsel %vm1223, %v1655, 0.0
  %v1688 = vsel %vm1223, %v1656, 0.0
  %v1689 = vsel %vm1223, %v1657, 0.0
  %v1690 = vsel %vm1223, %v1658, 0.0
  %v1691 = vsel %vm1223, %v1659, 0.0
  %v1692 = vsel %vm1223, %v1660, 0.0
  %v1693 = vsel %vm1223, %v1661, 0.0
  %v1694 = vsel %vm1223, %v1662, 0.0
  %v1695 = vsel %vm1223, %v1663, 0.0
  %v1696 = vsel %vm1223, %v1664, 0.0
  %v1697 = vsel %vm1223, %v1665, 0.0
  %v1698 = vsel %vm1223, %v1666, 0.0
  %v1699 = vsel %vm1223, %v1667, 0.0
  %v1700 = vsel %vm1223, %v1668, 0.0
  %v1701 = vsel %vm1223, %v1669, 0.0
  %v1702 = vsel %vm1223, %v1670, 0.0
  %v1703 = vsel %vm1223, %v1671, 0.0
  %v1704 = vsel %vm1223, %v1672, 0.0
  %v1705 = vsel %vm1223, %v1673, 0.0
  %v1706 = vsel %vm1223, %v1674, 0.0
  %v1707 = vsel %vm1223, %v1675, 0.0
  %v1708 = vsel %vm1223, %v1676, 0.0
  %v1709 = vsel %vm1223, %v1677, 0.0
  %v1710 = vsel %vm1223, %v1678, 0.0
  %v1711 = vsel %vm1223, %v1679, 0.0
  %v1712 = vsel %vm1223, %v1680, 0.0
  %v1713 = vsel %vm1223, %v1681, 0.0
  %v1714 = vsel %vm1223, %v1682, 0.0
  %v1715 = vsel %vm1223, %v1683, 0.0
  %v1716 = vsel %vm1223, %v1684, 0.0
  %v1717 = vsel %vm1223, %v1685, 0.0
  %v1718 = vmul.f32 %v1686, %v1686
  %v1719 = vmul.f32 %v1687, %v1687
  %v1720 = vmul.f32 %v1688, %v1688
  %v1721 = vmul.f32 %v1689, %v1689
  %v1722 = vmul.f32 %v1690, %v1690
  %v1723 = vmul.f32 %v1691, %v1691
  %v1724 = vmul.f32 %v1692, %v1692
  %v1725 = vmul.f32 %v1693, %v1693
  %v1726 = vmul.f32 %v1694, %v1694
  %v1727 = vmul.f32 %v1695, %v1695
  %v1728 = vmul.f32 %v1696, %v1696
  %v1729 = vmul.f32 %v1697, %v1697
  %v1730 = vmul.f32 %v1698, %v1698
  %v1731 = vmul.f32 %v1699, %v1699
  %v1732 = vmul.f32 %v1700, %v1700
  %v1733 = vmul.f32 %v1701, %v1701
  %v1734 = vmul.f32 %v1702, %v1702
  %v1735 = vmul.f32 %v1703, %v1703
  %v1736 = vmul.f32 %v1704, %v1704
  %v1737 = vmul.f32 %v1705, %v1705
  %v1738 = vmul.f32 %v1706, %v1706
  %v1739 = vmul.f32 %v1707, %v1707
  %v1740 = vmul.f32 %v1708, %v1708
  %v1741 = vmul.f32 %v1709, %v1709
  %v1742 = vmul.f32 %v1710, %v1710
  %v1743 = vmul.f32 %v1711, %v1711
  %v1744 = vmul.f32 %v1712, %v1712
  %v1745 = vmul.f32 %v1713, %v1713
  %v1746 = vmul.f32 %v1714, %v1714
  %v1747 = vmul.f32 %v1715, %v1715
  %v1748 = vmul.f32 %v1716, %v1716
  %v1749 = vmul.f32 %v1717, %v1717
  %1750 = vadd.xlane.f32.xlu0 %v1718
  %v1751 = vpop.xlane.xlu0 %1750
  %1752 = vadd.xlane.f32.xlu0 %v1719
  %v1753 = vpop.xlane.xlu0 %1752
  %1754 = vadd.xlane.f32.xlu0 %v1720
  %v1755 = vpop.xlane.xlu0 %1754
  %1756 = vadd.xlane.f32.xlu0 %v1721
  %v1757 = vpop.xlane.xlu0 %1756
  %1758 = vadd.xlane.f32.xlu0 %v1722
  %v1759 = vpop.xlane.xlu0 %1758
  %1760 = vadd.xlane.f32.xlu0 %v1723
  %v1761 = vpop.xlane.xlu0 %1760
  %1762 = vadd.xlane.f32.xlu0 %v1724
  %v1763 = vpop.xlane.xlu0 %1762
  %1764 = vadd.xlane.f32.xlu0 %v1725
  %v1765 = vpop.xlane.xlu0 %1764
  %1766 = vadd.xlane.f32.xlu0 %v1726
  %v1767 = vpop.xlane.xlu0 %1766
  %1768 = vadd.xlane.f32.xlu0 %v1727
  %v1769 = vpop.xlane.xlu0 %1768
  %1770 = vadd.xlane.f32.xlu0 %v1728
  %v1771 = vpop.xlane.xlu0 %1770
  %1772 = vadd.xlane.f32.xlu0 %v1729
  %v1773 = vpop.xlane.xlu0 %1772
  %1774 = vadd.xlane.f32.xlu0 %v1730
  %v1775 = vpop.xlane.xlu0 %1774
  %1776 = vadd.xlane.f32.xlu0 %v1731
  %v1777 = vpop.xlane.xlu0 %1776
  %1778 = vadd.xlane.f32.xlu0 %v1732
  %v1779 = vpop.xlane.xlu0 %1778
  %1780 = vadd.xlane.f32.xlu0 %v1733
  %v1781 = vpop.xlane.xlu0 %1780
  %1782 = vadd.xlane.f32.xlu0 %v1734
  %v1783 = vpop.xlane.xlu0 %1782
  %1784 = vadd.xlane.f32.xlu0 %v1735
  %v1785 = vpop.xlane.xlu0 %1784
  %1786 = vadd.xlane.f32.xlu0 %v1736
  %v1787 = vpop.xlane.xlu0 %1786
  %1788 = vadd.xlane.f32.xlu0 %v1737
  %v1789 = vpop.xlane.xlu0 %1788
  %1790 = vadd.xlane.f32.xlu0 %v1738
  %v1791 = vpop.xlane.xlu0 %1790
  %1792 = vadd.xlane.f32.xlu0 %v1739
  %v1793 = vpop.xlane.xlu0 %1792
  %1794 = vadd.xlane.f32.xlu0 %v1740
  %v1795 = vpop.xlane.xlu0 %1794
  %1796 = vadd.xlane.f32.xlu0 %v1741
  %v1797 = vpop.xlane.xlu0 %1796
  %1798 = vadd.xlane.f32.xlu0 %v1742
  %v1799 = vpop.xlane.xlu0 %1798
  %1800 = vadd.xlane.f32.xlu0 %v1743
  %v1801 = vpop.xlane.xlu0 %1800
  %1802 = vadd.xlane.f32.xlu0 %v1744
  %v1803 = vpop.xlane.xlu0 %1802
  %1804 = vadd.xlane.f32.xlu0 %v1745
  %v1805 = vpop.xlane.xlu0 %1804
  %1806 = vadd.xlane.f32.xlu0 %v1746
  %v1807 = vpop.xlane.xlu0 %1806
  %1808 = vadd.xlane.f32.xlu0 %v1747
  %v1809 = vpop.xlane.xlu0 %1808
  %1810 = vadd.xlane.f32.xlu0 %v1748
  %v1811 = vpop.xlane.xlu0 %1810
  %1812 = vadd.xlane.f32.xlu0 %v1749
  %v1813 = vpop.xlane.xlu0 %1812
  %v1814 = vmul.f32 %v1751, 0.03125
  %v1815 = vmul.f32 %v1753, 0.03125
  %v1816 = vmul.f32 %v1755, 0.03125
  %v1817 = vmul.f32 %v1757, 0.03125
  %v1818 = vmul.f32 %v1759, 0.03125
  %v1819 = vmul.f32 %v1761, 0.03125
  %v1820 = vmul.f32 %v1763, 0.03125
  %v1821 = vmul.f32 %v1765, 0.03125
  %v1822 = vmul.f32 %v1767, 0.03125
  %v1823 = vmul.f32 %v1769, 0.03125
  %v1824 = vmul.f32 %v1771, 0.03125
  %v1825 = vmul.f32 %v1773, 0.03125
  %v1826 = vmul.f32 %v1775, 0.03125
  %v1827 = vmul.f32 %v1777, 0.03125
  %v1828 = vmul.f32 %v1779, 0.03125
  %v1829 = vmul.f32 %v1781, 0.03125
  %v1830 = vmul.f32 %v1783, 0.03125
  %v1831 = vmul.f32 %v1785, 0.03125
  %v1832 = vmul.f32 %v1787, 0.03125
  %v1833 = vmul.f32 %v1789, 0.03125
  %v1834 = vmul.f32 %v1791, 0.03125
  %v1835 = vmul.f32 %v1793, 0.03125
  %v1836 = vmul.f32 %v1795, 0.03125
  %v1837 = vmul.f32 %v1797, 0.03125
  %v1838 = vmul.f32 %v1799, 0.03125
  %v1839 = vmul.f32 %v1801, 0.03125
  %v1840 = vmul.f32 %v1803, 0.03125
  %v1841 = vmul.f32 %v1805, 0.03125
  %v1842 = vmul.f32 %v1807, 0.03125
  %v1843 = vmul.f32 %v1809, 0.03125
  %v1844 = vmul.f32 %v1811, 0.03125
  %v1845 = vmul.f32 %v1813, 0.03125
  %v1846 = vadd.f32 %v1814, 1e-09
  %v1847 = vadd.f32 %v1815, 1e-09
  %v1848 = vadd.f32 %v1816, 1e-09
  %v1849 = vadd.f32 %v1817, 1e-09
  %v1850 = vadd.f32 %v1818, 1e-09
  %v1851 = vadd.f32 %v1819, 1e-09
  %v1852 = vadd.f32 %v1820, 1e-09
  %v1853 = vadd.f32 %v1821, 1e-09
  %v1854 = vadd.f32 %v1822, 1e-09
  %v1855 = vadd.f32 %v1823, 1e-09
  %v1856 = vadd.f32 %v1824, 1e-09
  %v1857 = vadd.f32 %v1825, 1e-09
  %v1858 = vadd.f32 %v1826, 1e-09
  %v1859 = vadd.f32 %v1827, 1e-09
  %v1860 = vadd.f32 %v1828, 1e-09
  %v1861 = vadd.f32 %v1829, 1e-09
  %v1862 = vadd.f32 %v1830, 1e-09
  %v1863 = vadd.f32 %v1831, 1e-09
  %v1864 = vadd.f32 %v1832, 1e-09
  %v1865 = vadd.f32 %v1833, 1e-09
  %v1866 = vadd.f32 %v1834, 1e-09
  %v1867 = vadd.f32 %v1835, 1e-09
  %v1868 = vadd.f32 %v1836, 1e-09
  %v1869 = vadd.f32 %v1837, 1e-09
  %v1870 = vadd.f32 %v1838, 1e-09
  %v1871 = vadd.f32 %v1839, 1e-09
  %v1872 = vadd.f32 %v1840, 1e-09
  %v1873 = vadd.f32 %v1841, 1e-09
  %v1874 = vadd.f32 %v1842, 1e-09
  %v1875 = vadd.f32 %v1843, 1e-09
  %v1876 = vadd.f32 %v1844, 1e-09
  %v1877 = vadd.f32 %v1845, 1e-09
  %v1879 = vlaneseq
  %v1880 = vshrl.u32 %v1879, 7
  %v1881 = vsub.s32 0, %v1880
  %v1882 = vrot.slane %v1556, %v1881
  %v1884 = vmul.f32 %v1654, %v1882
  %v1885 = vmul.f32 %v1655, %v1882
  %v1886 = vmul.f32 %v1656, %v1882
  %v1887 = vmul.f32 %v1657, %v1882
  %v1888 = vmul.f32 %v1658, %v1882
  %v1889 = vmul.f32 %v1659, %v1882
  %v1890 = vmul.f32 %v1660, %v1882
  %v1891 = vmul.f32 %v1661, %v1882
  %v1892 = vmul.f32 %v1662, %v1882
  %v1893 = vmul.f32 %v1663, %v1882
  %v1894 = vmul.f32 %v1664, %v1882
  %v1895 = vmul.f32 %v1665, %v1882
  %v1896 = vmul.f32 %v1666, %v1882
  %v1897 = vmul.f32 %v1667, %v1882
  %v1898 = vmul.f32 %v1668, %v1882
  %v1899 = vmul.f32 %v1669, %v1882
  %v1900 = vmul.f32 %v1670, %v1882
  %v1901 = vmul.f32 %v1671, %v1882
  %v1902 = vmul.f32 %v1672, %v1882
  %v1903 = vmul.f32 %v1673, %v1882
  %v1904 = vmul.f32 %v1674, %v1882
  %v1905 = vmul.f32 %v1675, %v1882
  %v1906 = vmul.f32 %v1676, %v1882
  %v1907 = vmul.f32 %v1677, %v1882
  %v1908 = vmul.f32 %v1678, %v1882
  %v1909 = vmul.f32 %v1679, %v1882
  %v1910 = vmul.f32 %v1680, %v1882
  %v1911 = vmul.f32 %v1681, %v1882
  %v1912 = vmul.f32 %v1682, %v1882
  %v1913 = vmul.f32 %v1683, %v1882
  %v1914 = vmul.f32 %v1684, %v1882
  %v1915 = vmul.f32 %v1685, %v1882
  %v1916 = vrsqrt.pop %v1846
  %v1917 = vrsqrt.pop %v1847
  %v1918 = vrsqrt.pop %v1848
  %v1919 = vrsqrt.pop %v1849
  %v1920 = vrsqrt.pop %v1850
  %v1921 = vrsqrt.pop %v1851
  %v1922 = vrsqrt.pop %v1852
  %v1923 = vrsqrt.pop %v1853
  %v1924 = vrsqrt.pop %v1854
  %v1925 = vrsqrt.pop %v1855
  %v1926 = vrsqrt.pop %v1856
  %v1927 = vrsqrt.pop %v1857
  %v1928 = vrsqrt.pop %v1858
  %v1929 = vrsqrt.pop %v1859
  %v1930 = vrsqrt.pop %v1860
  %v1931 = vrsqrt.pop %v1861
  %v1932 = vrsqrt.pop %v1862
  %v1933 = vrsqrt.pop %v1863
  %v1934 = vrsqrt.pop %v1864
  %v1935 = vrsqrt.pop %v1865
  %v1936 = vrsqrt.pop %v1866
  %v1937 = vrsqrt.pop %v1867
  %v1938 = vrsqrt.pop %v1868
  %v1939 = vrsqrt.pop %v1869
  %v1940 = vrsqrt.pop %v1870
  %v1941 = vrsqrt.pop %v1871
  %v1942 = vrsqrt.pop %v1872
  %v1943 = vrsqrt.pop %v1873
  %v1944 = vrsqrt.pop %v1874
  %v1945 = vrsqrt.pop %v1875
  %v1946 = vrsqrt.pop %v1876
  %v1947 = vrsqrt.pop %v1877
  %v1948 = vmul.f32 %v1884, %v1916
  %v1949 = vmul.f32 %v1885, %v1917
  %v1950 = vmul.f32 %v1886, %v1918
  %v1951 = vmul.f32 %v1887, %v1919
  %v1952 = vmul.f32 %v1888, %v1920
  %v1953 = vmul.f32 %v1889, %v1921
  %v1954 = vmul.f32 %v1890, %v1922
  %v1955 = vmul.f32 %v1891, %v1923
  %v1956 = vmul.f32 %v1892, %v1924
  %v1957 = vmul.f32 %v1893, %v1925
  %v1958 = vmul.f32 %v1894, %v1926
  %v1959 = vmul.f32 %v1895, %v1927
  %v1960 = vmul.f32 %v1896, %v1928
  %v1961 = vmul.f32 %v1897, %v1929
  %v1962 = vmul.f32 %v1898, %v1930
  %v1963 = vmul.f32 %v1899, %v1931
  %v1964 = vmul.f32 %v1900, %v1932
  %v1965 = vmul.f32 %v1901, %v1933
  %v1966 = vmul.f32 %v1902, %v1934
  %v1967 = vmul.f32 %v1903, %v1935
  %v1968 = vmul.f32 %v1904, %v1936
  %v1969 = vmul.f32 %v1905, %v1937
  %v1970 = vmul.f32 %v1906, %v1938
  %v1971 = vmul.f32 %v1907, %v1939
  %v1972 = vmul.f32 %v1908, %v1940
  %v1973 = vmul.f32 %v1909, %v1941
  %v1974 = vmul.f32 %v1910, %v1942
  %v1975 = vmul.f32 %v1911, %v1943
  %v1976 = vmul.f32 %v1912, %v1944
  %v1977 = vmul.f32 %v1913, %v1945
  %v1978 = vmul.f32 %v1914, %v1946
  %v1979 = vmul.f32 %v1915, %v1947
  %v1981 = vlaneseq
  %v1982 = vshrl.u32 %v1981, 7
  %v1983 = vsub.s32 0, %v1982
  %v1984 = vrot.slane %v1557, %v1983
  %v1986 = vadd.f32 %v1948, %v1984
  %v1987 = vadd.f32 %v1949, %v1984
  %v1988 = vadd.f32 %v1950, %v1984
  %v1989 = vadd.f32 %v1951, %v1984
  %v1990 = vadd.f32 %v1952, %v1984
  %v1991 = vadd.f32 %v1953, %v1984
  %v1992 = vadd.f32 %v1954, %v1984
  %v1993 = vadd.f32 %v1955, %v1984
  %v1994 = vadd.f32 %v1956, %v1984
  %v1995 = vadd.f32 %v1957, %v1984
  %v1996 = vadd.f32 %v1958, %v1984
  %v1997 = vadd.f32 %v1959, %v1984
  %v1998 = vadd.f32 %v1960, %v1984
  %v1999 = vadd.f32 %v1961, %v1984
  %v2000 = vadd.f32 %v1962, %v1984
  %v2001 = vadd.f32 %v1963, %v1984
  %v2002 = vadd.f32 %v1964, %v1984
  %v2003 = vadd.f32 %v1965, %v1984
  %v2004 = vadd.f32 %v1966, %v1984
  %v2005 = vadd.f32 %v1967, %v1984
  %v2006 = vadd.f32 %v1968, %v1984
  %v2007 = vadd.f32 %v1969, %v1984
  %v2008 = vadd.f32 %v1970, %v1984
  %v2009 = vadd.f32 %v1971, %v1984
  %v2010 = vadd.f32 %v1972, %v1984
  %v2011 = vadd.f32 %v1973, %v1984
  %v2012 = vadd.f32 %v1974, %v1984
  %v2013 = vadd.f32 %v1975, %v1984
  %v2014 = vadd.f32 %v1976, %v1984
  %v2015 = vadd.f32 %v1977, %v1984
  %v2016 = vadd.f32 %v1978, %v1984
  %v2017 = vadd.f32 %v1979, %v1984
  %v2018 = vpack.c.bf16 %v1525, %v1524
  %v2019 = vpack.c.bf16 %v1987, %v1986
  %v2020 = vpack.c.bf16 %v1527, %v1526
  %v2021 = vpack.c.bf16 %v1989, %v1988
  %v2022 = vpack.c.bf16 %v1529, %v1528
  %v2023 = vpack.c.bf16 %v1991, %v1990
  %v2024 = vpack.c.bf16 %v1531, %v1530
  %v2025 = vpack.c.bf16 %v1993, %v1992
  %v2026 = vpack.c.bf16 %v1533, %v1532
  %v2027 = vpack.c.bf16 %v1995, %v1994
  %v2028 = vpack.c.bf16 %v1535, %v1534
  %v2029 = vpack.c.bf16 %v1997, %v1996
  %v2030 = vpack.c.bf16 %v1537, %v1536
  %v2031 = vpack.c.bf16 %v1999, %v1998
  %v2032 = vpack.c.bf16 %v1539, %v1538
  %v2033 = vpack.c.bf16 %v2001, %v2000
  %v2034 = vpack.c.bf16 %v1541, %v1540
  %v2035 = vpack.c.bf16 %v2003, %v2002
  %v2036 = vpack.c.bf16 %v1543, %v1542
  %v2037 = vpack.c.bf16 %v2005, %v2004
  %v2038 = vpack.c.bf16 %v1545, %v1544
  %v2039 = vpack.c.bf16 %v2007, %v2006
  %v2040 = vpack.c.bf16 %v1547, %v1546
  %v2041 = vpack.c.bf16 %v2009, %v2008
  %v2042 = vpack.c.bf16 %v1549, %v1548
  %v2043 = vpack.c.bf16 %v2011, %v2010
  %v2044 = vpack.c.bf16 %v1551, %v1550
  %v2045 = vpack.c.bf16 %v2013, %v2012
  %v2046 = vpack.c.bf16 %v1553, %v1552
  %v2047 = vpack.c.bf16 %v2015, %v2014
  %v2048 = vpack.c.bf16 %v1555, %v1554
  %v2049 = vpack.c.bf16 %v2017, %v2016
  %2050 = vmatprep.subr.bf16.mxu0 %v2019
  %2051 = vmatpush1.bf16.msra.mxu0 %v2018
  %2052 = vmatprep.subr.bf16.mxu0 %v2021
  %2053 = vmatpush1.bf16.msra.mxu0 %v2020
  %2054 = vmatprep.subr.bf16.mxu0 %v2023
  %2055 = vmatpush1.bf16.msra.mxu0 %v2022
  %2056 = vmatprep.subr.bf16.mxu0 %v2025
  %2057 = vmatpush1.bf16.msra.mxu0 %v2024
  %2058 = vmatprep.subr.bf16.mxu0 %v2027
  %2059 = vmatpush1.bf16.msra.mxu0 %v2026
  %2060 = vmatprep.subr.bf16.mxu0 %v2029
  %2061 = vmatpush1.bf16.msra.mxu0 %v2028
  %2062 = vmatprep.subr.bf16.mxu0 %v2031
  %2063 = vmatpush1.bf16.msra.mxu0 %v2030
  %2064 = vmatprep.subr.bf16.mxu0 %v2033
  %2065 = vmatpush1.bf16.msra.mxu0 %v2032
  %2066 = vmatprep.subr.bf16.mxu0 %v2035
  %2067 = vmatpush1.bf16.msra.mxu0 %v2034
  %2068 = vmatprep.subr.bf16.mxu0 %v2037
  %2069 = vmatpush1.bf16.msra.mxu0 %v2036
  %2070 = vmatprep.subr.bf16.mxu0 %v2039
  %2071 = vmatpush1.bf16.msra.mxu0 %v2038
  %2072 = vmatprep.subr.bf16.mxu0 %v2041
  %2073 = vmatpush1.bf16.msra.mxu0 %v2040
  %2074 = vmatprep.subr.bf16.mxu0 %v2043
  %2075 = vmatpush1.bf16.msra.mxu0 %v2042
  %2076 = vmatprep.subr.bf16.mxu0 %v2045
  %2077 = vmatpush1.bf16.msra.mxu0 %v2044
  %2078 = vmatprep.subr.bf16.mxu0 %v2047
  %2079 = vmatpush1.bf16.msra.mxu0 %v2046
  %2080 = vmatprep.subr.bf16.mxu0 %v2049
  %2081 = vmatpush1.bf16.msra.mxu0 %v2048
  %2082 = vmatprep.mubr.bf16.mxu0 %v227
  %2083 = vmatmul.mubr.bf16.gmra.mrb[0].mxu0 %v226
  %v2084 = vpop.f32.mrb[0].mxu0
  %v2085 = vadd.f32 0.0, %v2084
  %v2086 = vpop.f32.mrb[0].mxu0
  %v2087 = vadd.f32 0.0, %v2086
  %v2088 = vpop.f32.mrb[0].mxu0
  %v2089 = vadd.f32 0.0, %v2088
  %v2090 = vpop.f32.mrb[0].mxu0
  %v2091 = vadd.f32 0.0, %v2090
  %2092 = vmatprep.mubr.bf16.mxu0 %v229
  %2093 = vmatmul.mubr.bf16.gmra.mrb[0].mxu0 %v228
  %v2094 = vpop.f32.mrb[0].mxu0
  %v2095 = vadd.f32 0.0, %v2094
  %v2096 = vpop.f32.mrb[0].mxu0
  %v2097 = vadd.f32 0.0, %v2096
  %v2098 = vpop.f32.mrb[0].mxu0
  %v2099 = vadd.f32 0.0, %v2098
  %v2100 = vpop.f32.mrb[0].mxu0
  %v2101 = vadd.f32 0.0, %v2100
  %2102 = vmatprep.mubr.bf16.mxu0 %v231
  %2103 = vmatmul.mubr.bf16.gmra.mrb[0].mxu0 %v230
  %v2104 = vpop.f32.mrb[0].mxu0
  %v2105 = vadd.f32 0.0, %v2104
  %v2106 = vpop.f32.mrb[0].mxu0
  %v2107 = vadd.f32 0.0, %v2106
  %v2108 = vpop.f32.mrb[0].mxu0
  %v2109 = vadd.f32 0.0, %v2108
  %v2110 = vpop.f32.mrb[0].mxu0
  %v2111 = vadd.f32 0.0, %v2110
  %2112 = vmatprep.mubr.bf16.mxu0 %v233
  %2113 = vmatmul.mubr.bf16.gmra.mrb[0].mxu0 %v232
  %v2114 = vpop.f32.mrb[0].mxu0
  %v2115 = vadd.f32 0.0, %v2114
  %v2116 = vpop.f32.mrb[0].mxu0
  %v2117 = vadd.f32 0.0, %v2116
  %v2118 = vpop.f32.mrb[0].mxu0
  %v2119 = vadd.f32 0.0, %v2118
  %v2120 = vpop.f32.mrb[0].mxu0
  %v2121 = vadd.f32 0.0, %v2120
  %2122 = vmatprep.mubr.bf16.mxu0 %v235
  %2123 = vmatmul.mubr.bf16.gmra.mrb[0].mxu0 %v234
  %v2124 = vpop.f32.mrb[0].mxu0
  %v2125 = vadd.f32 0.0, %v2124
  %v2126 = vpop.f32.mrb[0].mxu0
  %v2127 = vadd.f32 0.0, %v2126
  %v2128 = vpop.f32.mrb[0].mxu0
  %v2129 = vadd.f32 0.0, %v2128
  %v2130 = vpop.f32.mrb[0].mxu0
  %v2131 = vadd.f32 0.0, %v2130
  %2132 = vmatprep.mubr.bf16.mxu0 %v237
  %2133 = vmatmul.mubr.bf16.gmra.mrb[0].mxu0 %v236
  %v2134 = vpop.f32.mrb[0].mxu0
  %v2135 = vadd.f32 0.0, %v2134
  %v2136 = vpop.f32.mrb[0].mxu0
  %v2137 = vadd.f32 0.0, %v2136
  %v2138 = vpop.f32.mrb[0].mxu0
  %v2139 = vadd.f32 0.0, %v2138
  %v2140 = vpop.f32.mrb[0].mxu0
  %v2141 = vadd.f32 0.0, %v2140
  %2142 = vmatprep.mubr.bf16.mxu0 %v239
  %2143 = vmatmul.mubr.bf16.gmra.mrb[0].mxu0 %v238
  %v2144 = vpop.f32.mrb[0].mxu0
  %v2145 = vadd.f32 0.0, %v2144
  %v2146 = vpop.f32.mrb[0].mxu0
  %v2147 = vadd.f32 0.0, %v2146
  %v2148 = vpop.f32.mrb[0].mxu0
  %v2149 = vadd.f32 0.0, %v2148
  %v2150 = vpop.f32.mrb[0].mxu0
  %v2151 = vadd.f32 0.0, %v2150
  %2152 = vmatprep.mubr.bf16.mxu0 %v241
  %2153 = vmatmul.mubr.bf16.gmra.mrb[0].mxu0 %v240
  %v2154 = vpop.f32.mrb[0].mxu0
  %v2155 = vadd.f32 0.0, %v2154
  %v2156 = vpop.f32.mrb[0].mxu0
  %v2157 = vadd.f32 0.0, %v2156
  %v2158 = vpop.f32.mrb[0].mxu0
  %v2159 = vadd.f32 0.0, %v2158
  %v2160 = vpop.f32.mrb[0].mxu0
  %v2161 = vadd.f32 0.0, %v2160
  %2162 = vmatprep.mubr.bf16.mxu0 %v243
  %2163 = vmatmul.mubr.bf16.gmra.mrb[0].mxu0 %v242
  %v2164 = vpop.f32.mrb[0].mxu0
  %v2165 = vadd.f32 0.0, %v2164
  %v2166 = vpop.f32.mrb[0].mxu0
  %v2167 = vadd.f32 0.0, %v2166
  %v2168 = vpop.f32.mrb[0].mxu0
  %v2169 = vadd.f32 0.0, %v2168
  %v2170 = vpop.f32.mrb[0].mxu0
  %v2171 = vadd.f32 0.0, %v2170
  %2172 = vmatprep.mubr.bf16.mxu0 %v245
  %2173 = vmatmul.mubr.bf16.gmra.mrb[0].mxu0 %v244
  %v2174 = vpop.f32.mrb[0].mxu0
  %v2175 = vadd.f32 0.0, %v2174
  %v2176 = vpop.f32.mrb[0].mxu0
  %v2177 = vadd.f32 0.0, %v2176
  %v2178 = vpop.f32.mrb[0].mxu0
  %v2179 = vadd.f32 0.0, %v2178
  %v2180 = vpop.f32.mrb[0].mxu0
  %v2181 = vadd.f32 0.0, %v2180
  %2182 = vmatprep.mubr.bf16.mxu0 %v247
  %2183 = vmatmul.mubr.bf16.gmra.mrb[0].mxu0 %v246
  %v2184 = vpop.f32.mrb[0].mxu0
  %v2185 = vadd.f32 0.0, %v2184
  %v2186 = vpop.f32.mrb[0].mxu0
  %v2187 = vadd.f32 0.0, %v2186
  %v2188 = vpop.f32.mrb[0].mxu0
  %v2189 = vadd.f32 0.0, %v2188
  %v2190 = vpop.f32.mrb[0].mxu0
  %v2191 = vadd.f32 0.0, %v2190
  %2192 = vmatprep.mubr.bf16.mxu0 %v249
  %2193 = vmatmul.mubr.bf16.gmra.mrb[0].mxu0 %v248
  %v2194 = vpop.f32.mrb[0].mxu0
  %v2195 = vadd.f32 0.0, %v2194
  %v2196 = vpop.f32.mrb[0].mxu0
  %v2197 = vadd.f32 0.0, %v2196
  %v2198 = vpop.f32.mrb[0].mxu0
  %v2199 = vadd.f32 0.0, %v2198
  %v2200 = vpop.f32.mrb[0].mxu0
  %v2201 = vadd.f32 0.0, %v2200
  %2202 = vmatprep.mubr.bf16.mxu0 %v251
  %2203 = vmatmul.mubr.bf16.gmra.mrb[0].mxu0 %v250
  %v2204 = vpop.f32.mrb[0].mxu0
  %v2205 = vadd.f32 0.0, %v2204
  %v2206 = vpop.f32.mrb[0].mxu0
  %v2207 = vadd.f32 0.0, %v2206
  %v2208 = vpop.f32.mrb[0].mxu0
  %v2209 = vadd.f32 0.0, %v2208
  %v2210 = vpop.f32.mrb[0].mxu0
  %v2211 = vadd.f32 0.0, %v2210
  %2212 = vmatprep.mubr.bf16.mxu0 %v253
  %2213 = vmatmul.mubr.bf16.gmra.mrb[0].mxu0 %v252
  %v2214 = vpop.f32.mrb[0].mxu0
  %v2215 = vadd.f32 0.0, %v2214
  %v2216 = vpop.f32.mrb[0].mxu0
  %v2217 = vadd.f32 0.0, %v2216
  %v2218 = vpop.f32.mrb[0].mxu0
  %v2219 = vadd.f32 0.0, %v2218
  %v2220 = vpop.f32.mrb[0].mxu0
  %v2221 = vadd.f32 0.0, %v2220
  %2222 = vmatprep.mubr.bf16.mxu0 %v255
  %2223 = vmatmul.mubr.bf16.gmra.mrb[0].mxu0 %v254
  %v2224 = vpop.f32.mrb[0].mxu0
  %v2225 = vadd.f32 0.0, %v2224
  %v2226 = vpop.f32.mrb[0].mxu0
  %v2227 = vadd.f32 0.0, %v2226
  %v2228 = vpop.f32.mrb[0].mxu0
  %v2229 = vadd.f32 0.0, %v2228
  %v2230 = vpop.f32.mrb[0].mxu0
  %v2231 = vadd.f32 0.0, %v2230
  %2232 = vmatprep.mubr.bf16.mxu0 %v257
  %2233 = vmatmul.mubr.bf16.gmra.mrb[0].mxu0 %v256
  %v2234 = vpop.f32.mrb[0].mxu0
  %v2235 = vadd.f32 0.0, %v2234
  %v2236 = vpop.f32.mrb[0].mxu0
  %v2237 = vadd.f32 0.0, %v2236
  %v2238 = vpop.f32.mrb[0].mxu0
  %v2239 = vadd.f32 0.0, %v2238
  %v2240 = vpop.f32.mrb[0].mxu0
  %v2241 = vadd.f32 0.0, %v2240
  %2242 = vdwg.mxu0
  %v2243 = vpack.c.bf16 %v2089, %v2085
  %v2244 = vpack.c.bf16 %v2091, %v2087
  %v2245 = vpack.c.bf16 %v2099, %v2095
  %v2246 = vpack.c.bf16 %v2101, %v2097
  %v2247 = vpack.c.bf16 %v2109, %v2105
  %v2248 = vpack.c.bf16 %v2111, %v2107
  %v2249 = vpack.c.bf16 %v2119, %v2115
  %v2250 = vpack.c.bf16 %v2121, %v2117
  %v2251 = vpack.c.bf16 %v2129, %v2125
  %v2252 = vpack.c.bf16 %v2131, %v2127
  %v2253 = vpack.c.bf16 %v2139, %v2135
  %v2254 = vpack.c.bf16 %v2141, %v2137
  %v2255 = vpack.c.bf16 %v2149, %v2145
  %v2256 = vpack.c.bf16 %v2151, %v2147
  %v2257 = vpack.c.bf16 %v2159, %v2155
  %v2258 = vpack.c.bf16 %v2161, %v2157
  %v2259 = vpack.c.bf16 %v2169, %v2165
  %v2260 = vpack.c.bf16 %v2171, %v2167
  %v2261 = vpack.c.bf16 %v2179, %v2175
  %v2262 = vpack.c.bf16 %v2181, %v2177
  %v2263 = vpack.c.bf16 %v2189, %v2185
  %v2264 = vpack.c.bf16 %v2191, %v2187
  %v2265 = vpack.c.bf16 %v2199, %v2195
  %v2266 = vpack.c.bf16 %v2201, %v2197
  %v2267 = vpack.c.bf16 %v2209, %v2205
  %v2268 = vpack.c.bf16 %v2211, %v2207
  %v2269 = vpack.c.bf16 %v2219, %v2215
  %v2270 = vpack.c.bf16 %v2221, %v2217
  %v2271 = vpack.c.bf16 %v2229, %v2225
  %v2272 = vpack.c.bf16 %v2231, %v2227
  %v2273 = vpack.c.bf16 %v2239, %v2235
  %v2274 = vpack.c.bf16 %v2241, %v2237
  %v2275 = vld [vmem:[%s10] sm:$0xf]
  %v2276 = vld [vmem:[%s10 + $0x4] sm:$0xf]
  %v2277 = vld [vmem:[%s10 + $0x8] sm:$0xf]
  %v2278 = vld [vmem:[%s10 + $0xc] sm:$0xf]
  %v2279 = vld [vmem:[%s10 + $0x10] sm:$0xf]
  %v2280 = vld [vmem:[%s10 + $0x14] sm:$0xf]
  %v2281 = vld [vmem:[%s10 + $0x18] sm:$0xf]
  %v2282 = vld [vmem:[%s10 + $0x1c] sm:$0xf]
  %v2283 = vld [vmem:[%s10 + $0x20] sm:$0xf]
  %v2284 = vld [vmem:[%s10 + $0x24] sm:$0xf]
  %v2285 = vld [vmem:[%s10 + $0x28] sm:$0xf]
  %v2286 = vld [vmem:[%s10 + $0x2c] sm:$0xf]
  %v2287 = vld [vmem:[%s10 + $0x30] sm:$0xf]
  %v2288 = vld [vmem:[%s10 + $0x34] sm:$0xf]
  %v2289 = vld [vmem:[%s10 + $0x38] sm:$0xf]
  %v2290 = vld [vmem:[%s10 + $0x3c] sm:$0xf]
  %v2291 = vld [vmem:[%s10 + $0x40] sm:$0xf]
  %v2292 = vld [vmem:[%s10 + $0x44] sm:$0xf]
  %v2293 = vld [vmem:[%s10 + $0x48] sm:$0xf]
  %v2294 = vld [vmem:[%s10 + $0x4c] sm:$0xf]
  %v2295 = vld [vmem:[%s10 + $0x50] sm:$0xf]
  %v2296 = vld [vmem:[%s10 + $0x54] sm:$0xf]
  %v2297 = vld [vmem:[%s10 + $0x58] sm:$0xf]
  %v2298 = vld [vmem:[%s10 + $0x5c] sm:$0xf]
  %v2299 = vld [vmem:[%s10 + $0x60] sm:$0xf]
  %v2300 = vld [vmem:[%s10 + $0x64] sm:$0xf]
  %v2301 = vld [vmem:[%s10 + $0x68] sm:$0xf]
  %v2302 = vld [vmem:[%s10 + $0x6c] sm:$0xf]
  %v2303 = vld [vmem:[%s10 + $0x70] sm:$0xf]
  %v2304 = vld [vmem:[%s10 + $0x74] sm:$0xf]
  %v2305 = vld [vmem:[%s10 + $0x78] sm:$0xf]
  %v2306 = vld [vmem:[%s10 + $0x7c] sm:$0xf]
  %v2307 = vld [vmem:[%s12] sm:$0x1]
  %v2309 = vlaneseq
  %v2310 = vshrl.u32 %v2309, 7
  %v2311 = vsub.s32 0, %v2310
  %v2312 = vrot.slane %v2307, %v2311
  %v2346 = vunpack.c.l.b16 %v2275
  %v2347 = vunpack.c.l.b16 %v2276
  %v2348 = vunpack.c.l.b16 %v2277
  %v2349 = vunpack.c.l.b16 %v2278
  %v2350 = vunpack.c.l.b16 %v2279
  %v2351 = vunpack.c.l.b16 %v2280
  %v2352 = vunpack.c.l.b16 %v2281
  %v2353 = vunpack.c.l.b16 %v2282
  %v2354 = vunpack.c.l.b16 %v2283
  %v2355 = vunpack.c.l.b16 %v2284
  %v2356 = vunpack.c.l.b16 %v2285
  %v2357 = vunpack.c.l.b16 %v2286
  %v2358 = vunpack.c.l.b16 %v2287
  %v2359 = vunpack.c.l.b16 %v2288
  %v2360 = vunpack.c.l.b16 %v2289
  %v2361 = vunpack.c.l.b16 %v2290
  %v2362 = vunpack.c.l.b16 %v2291
  %v2363 = vunpack.c.l.b16 %v2292
  %v2364 = vunpack.c.l.b16 %v2293
  %v2365 = vunpack.c.l.b16 %v2294
  %v2366 = vunpack.c.l.b16 %v2295
  %v2367 = vunpack.c.l.b16 %v2296
  %v2368 = vunpack.c.l.b16 %v2297
  %v2369 = vunpack.c.l.b16 %v2298
  %v2370 = vunpack.c.l.b16 %v2299
  %v2371 = vunpack.c.l.b16 %v2300
  %v2372 = vunpack.c.l.b16 %v2301
  %v2373 = vunpack.c.l.b16 %v2302
  %v2374 = vunpack.c.l.b16 %v2303
  %v2375 = vunpack.c.l.b16 %v2304
  %v2376 = vunpack.c.l.b16 %v2305
  %v2377 = vunpack.c.l.b16 %v2306
  %v2378 = vpack.c.b16 %v2347, %v2346
  %v2379 = vpack.c.b16 %v2349, %v2348
  %v2380 = vpack.c.b16 %v2351, %v2350
  %v2381 = vpack.c.b16 %v2353, %v2352
  %v2382 = vpack.c.b16 %v2355, %v2354
  %v2383 = vpack.c.b16 %v2357, %v2356
  %v2384 = vpack.c.b16 %v2359, %v2358
  %v2385 = vpack.c.b16 %v2361, %v2360
  %v2386 = vpack.c.b16 %v2363, %v2362
  %v2387 = vpack.c.b16 %v2365, %v2364
  %v2388 = vpack.c.b16 %v2367, %v2366
  %v2389 = vpack.c.b16 %v2369, %v2368
  %v2390 = vpack.c.b16 %v2371, %v2370
  %v2391 = vpack.c.b16 %v2373, %v2372
  %v2392 = vpack.c.b16 %v2375, %v2374
  %v2393 = vpack.c.b16 %v2377, %v2376
  %2410 = vmatprep.subr.bf16.mxu0 0
  %2411 = vmatpush1.bf16.msra.mxu0 %v2378
  %2412 = vmatprep.subr.bf16.mxu0 0
  %2413 = vmatpush1.bf16.msra.mxu0 %v2379
  %2414 = vmatprep.subr.bf16.mxu0 0
  %2415 = vmatpush1.bf16.msra.mxu0 %v2380
  %2416 = vmatprep.subr.bf16.mxu0 0
  %2417 = vmatpush1.bf16.msra.mxu0 %v2381
  %2418 = vmatprep.subr.bf16.mxu0 0
  %2419 = vmatpush1.bf16.msra.mxu0 %v2382
  %2420 = vmatprep.subr.bf16.mxu0 0
  %2421 = vmatpush1.bf16.msra.mxu0 %v2383
  %2422 = vmatprep.subr.bf16.mxu0 0
  %2423 = vmatpush1.bf16.msra.mxu0 %v2384
  %2424 = vmatprep.subr.bf16.mxu0 0
  %2425 = vmatpush1.bf16.msra.mxu0 %v2385
  %2426 = vmatprep.subr.bf16.mxu0 0
  %2427 = vmatpush1.bf16.msra.mxu0 %v2386
  %2428 = vmatprep.subr.bf16.mxu0 0
  %2429 = vmatpush1.bf16.msra.mxu0 %v2387
  %2430 = vmatprep.subr.bf16.mxu0 0
  %2431 = vmatpush1.bf16.msra.mxu0 %v2388
  %2432 = vmatprep.subr.bf16.mxu0 0
  %2433 = vmatpush1.bf16.msra.mxu0 %v2389
  %2434 = vmatprep.subr.bf16.mxu0 0
  %2435 = vmatpush1.bf16.msra.mxu0 %v2390
  %2436 = vmatprep.subr.bf16.mxu0 0
  %2437 = vmatpush1.bf16.msra.mxu0 %v2391
  %2438 = vmatprep.subr.bf16.mxu0 0
  %2439 = vmatpush1.bf16.msra.mxu0 %v2392
  %2440 = vmatprep.subr.bf16.mxu0 0
  %2441 = vmatpush1.bf16.msra.mxu0 %v2393
  %2442 = vmatprep.mubr.bf16.mxu0 %v2019
  %2443 = vmatmul.mubr.bf16.gmra.mrb[0].mxu0 %v2018
  %v2444 = vpop.f32.mrb[0].mxu0
  %v2445 = vadd.f32 %v2312, %v2444
  %v2446 = vpop.f32.mrb[0].mxu0
  %v2447 = vpop.f32.mrb[0].mxu0
  %v2448 = vadd.f32 %v2312, %v2447
  %v2449 = vpop.f32.mrb[0].mxu0
  %2450 = vmatprep.mubr.bf16.mxu0 %v2021
  %2451 = vmatmul.mubr.bf16.gmra.mrb[0].mxu0 %v2020
  %v2452 = vpop.f32.mrb[0].mxu0
  %v2453 = vadd.f32 %v2312, %v2452
  %v2454 = vpop.f32.mrb[0].mxu0
  %v2455 = vpop.f32.mrb[0].mxu0
  %v2456 = vadd.f32 %v2312, %v2455
  %v2457 = vpop.f32.mrb[0].mxu0
  %2458 = vmatprep.mubr.bf16.mxu0 %v2023
  %2459 = vmatmul.mubr.bf16.gmra.mrb[0].mxu0 %v2022
  %v2460 = vpop.f32.mrb[0].mxu0
  %v2461 = vadd.f32 %v2312, %v2460
  %v2462 = vpop.f32.mrb[0].mxu0
  %v2463 = vpop.f32.mrb[0].mxu0
  %v2464 = vadd.f32 %v2312, %v2463
  %v2465 = vpop.f32.mrb[0].mxu0
  %2466 = vmatprep.mubr.bf16.mxu0 %v2025
  %2467 = vmatmul.mubr.bf16.gmra.mrb[0].mxu0 %v2024
  %v2468 = vpop.f32.mrb[0].mxu0
  %v2469 = vadd.f32 %v2312, %v2468
  %v2470 = vpop.f32.mrb[0].mxu0
  %v2471 = vpop.f32.mrb[0].mxu0
  %v2472 = vadd.f32 %v2312, %v2471
  %v2473 = vpop.f32.mrb[0].mxu0
  %2474 = vmatprep.mubr.bf16.mxu0 %v2027
  %2475 = vmatmul.mubr.bf16.gmra.mrb[0].mxu0 %v2026
  %v2476 = vpop.f32.mrb[0].mxu0
  %v2477 = vadd.f32 %v2312, %v2476
  %v2478 = vpop.f32.mrb[0].mxu0
  %v2479 = vpop.f32.mrb[0].mxu0
  %v2480 = vadd.f32 %v2312, %v2479
  %v2481 = vpop.f32.mrb[0].mxu0
  %2482 = vmatprep.mubr.bf16.mxu0 %v2029
  %2483 = vmatmul.mubr.bf16.gmra.mrb[0].mxu0 %v2028
  %v2484 = vpop.f32.mrb[0].mxu0
  %v2485 = vadd.f32 %v2312, %v2484
  %v2486 = vpop.f32.mrb[0].mxu0
  %v2487 = vpop.f32.mrb[0].mxu0
  %v2488 = vadd.f32 %v2312, %v2487
  %v2489 = vpop.f32.mrb[0].mxu0
  %2490 = vmatprep.mubr.bf16.mxu0 %v2031
  %2491 = vmatmul.mubr.bf16.gmra.mrb[0].mxu0 %v2030
  %v2492 = vpop.f32.mrb[0].mxu0
  %v2493 = vadd.f32 %v2312, %v2492
  %v2494 = vpop.f32.mrb[0].mxu0
  %v2495 = vpop.f32.mrb[0].mxu0
  %v2496 = vadd.f32 %v2312, %v2495
  %v2497 = vpop.f32.mrb[0].mxu0
  %2498 = vmatprep.mubr.bf16.mxu0 %v2033
  %2499 = vmatmul.mubr.bf16.gmra.mrb[0].mxu0 %v2032
  %v2500 = vpop.f32.mrb[0].mxu0
  %v2501 = vadd.f32 %v2312, %v2500
  %v2502 = vpop.f32.mrb[0].mxu0
  %v2503 = vpop.f32.mrb[0].mxu0
  %v2504 = vadd.f32 %v2312, %v2503
  %v2505 = vpop.f32.mrb[0].mxu0
  %2506 = vmatprep.mubr.bf16.mxu0 %v2035
  %2507 = vmatmul.mubr.bf16.gmra.mrb[0].mxu0 %v2034
  %v2508 = vpop.f32.mrb[0].mxu0
  %v2509 = vadd.f32 %v2312, %v2508
  %v2510 = vpop.f32.mrb[0].mxu0
  %v2511 = vpop.f32.mrb[0].mxu0
  %v2512 = vadd.f32 %v2312, %v2511
  %v2513 = vpop.f32.mrb[0].mxu0
  %2514 = vmatprep.mubr.bf16.mxu0 %v2037
  %2515 = vmatmul.mubr.bf16.gmra.mrb[0].mxu0 %v2036
  %v2516 = vpop.f32.mrb[0].mxu0
  %v2517 = vadd.f32 %v2312, %v2516
  %v2518 = vpop.f32.mrb[0].mxu0
  %v2519 = vpop.f32.mrb[0].mxu0
  %v2520 = vadd.f32 %v2312, %v2519
  %v2521 = vpop.f32.mrb[0].mxu0
  %2522 = vmatprep.mubr.bf16.mxu0 %v2039
  %2523 = vmatmul.mubr.bf16.gmra.mrb[0].mxu0 %v2038
  %v2524 = vpop.f32.mrb[0].mxu0
  %v2525 = vadd.f32 %v2312, %v2524
  %v2526 = vpop.f32.mrb[0].mxu0
  %v2527 = vpop.f32.mrb[0].mxu0
  %v2528 = vadd.f32 %v2312, %v2527
  %v2529 = vpop.f32.mrb[0].mxu0
  %2530 = vmatprep.mubr.bf16.mxu0 %v2041
  %2531 = vmatmul.mubr.bf16.gmra.mrb[0].mxu0 %v2040
  %v2532 = vpop.f32.mrb[0].mxu0
  %v2533 = vadd.f32 %v2312, %v2532
  %v2534 = vpop.f32.mrb[0].mxu0
  %v2535 = vpop.f32.mrb[0].mxu0
  %v2536 = vadd.f32 %v2312, %v2535
  %v2537 = vpop.f32.mrb[0].mxu0
  %2538 = vmatprep.mubr.bf16.mxu0 %v2043
  %2539 = vmatmul.mubr.bf16.gmra.mrb[0].mxu0 %v2042
  %v2540 = vpop.f32.mrb[0].mxu0
  %v2541 = vadd.f32 %v2312, %v2540
  %v2542 = vpop.f32.mrb[0].mxu0
  %v2543 = vpop.f32.mrb[0].mxu0
  %v2544 = vadd.f32 %v2312, %v2543
  %v2545 = vpop.f32.mrb[0].mxu0
  %2546 = vmatprep.mubr.bf16.mxu0 %v2045
  %2547 = vmatmul.mubr.bf16.gmra.mrb[0].mxu0 %v2044
  %v2548 = vpop.f32.mrb[0].mxu0
  %v2549 = vadd.f32 %v2312, %v2548
  %v2550 = vpop.f32.mrb[0].mxu0
  %v2551 = vpop.f32.mrb[0].mxu0
  %v2552 = vadd.f32 %v2312, %v2551
  %v2553 = vpop.f32.mrb[0].mxu0
  %2554 = vmatprep.mubr.bf16.mxu0 %v2047
  %2555 = vmatmul.mubr.bf16.gmra.mrb[0].mxu0 %v2046
  %v2556 = vpop.f32.mrb[0].mxu0
  %v2557 = vadd.f32 %v2312, %v2556
  %v2558 = vpop.f32.mrb[0].mxu0
  %v2559 = vpop.f32.mrb[0].mxu0
  %v2560 = vadd.f32 %v2312, %v2559
  %v2561 = vpop.f32.mrb[0].mxu0
  %2562 = vmatprep.mubr.bf16.mxu0 %v2049
  %2563 = vmatmul.mubr.bf16.gmra.mrb[0].mxu0 %v2048
  %v2564 = vpop.f32.mrb[0].mxu0
  %v2565 = vadd.f32 %v2312, %v2564
  %v2566 = vpop.f32.mrb[0].mxu0
  %v2567 = vpop.f32.mrb[0].mxu0
  %v2568 = vadd.f32 %v2312, %v2567
  %v2569 = vpop.f32.mrb[0].mxu0
  %2570 = vdwg.mxu0
  %v2571 = vmax.f32 %v2445, 0.0
  %v2572 = vmax.f32 %v2448, 0.0
  %v2573 = vmax.f32 %v2453, 0.0
  %v2574 = vmax.f32 %v2456, 0.0
  %v2575 = vmax.f32 %v2461, 0.0
  %v2576 = vmax.f32 %v2464, 0.0
  %v2577 = vmax.f32 %v2469, 0.0
  %v2578 = vmax.f32 %v2472, 0.0
  %v2579 = vmax.f32 %v2477, 0.0
  %v2580 = vmax.f32 %v2480, 0.0
  %v2581 = vmax.f32 %v2485, 0.0
  %v2582 = vmax.f32 %v2488, 0.0
  %v2583 = vmax.f32 %v2493, 0.0
  %v2584 = vmax.f32 %v2496, 0.0
  %v2585 = vmax.f32 %v2501, 0.0
  %v2586 = vmax.f32 %v2504, 0.0
  %v2587 = vmax.f32 %v2509, 0.0
  %v2588 = vmax.f32 %v2512, 0.0
  %v2589 = vmax.f32 %v2517, 0.0
  %v2590 = vmax.f32 %v2520, 0.0
  %v2591 = vmax.f32 %v2525, 0.0
  %v2592 = vmax.f32 %v2528, 0.0
  %v2593 = vmax.f32 %v2533, 0.0
  %v2594 = vmax.f32 %v2536, 0.0
  %v2595 = vmax.f32 %v2541, 0.0
  %v2596 = vmax.f32 %v2544, 0.0
  %v2597 = vmax.f32 %v2549, 0.0
  %v2598 = vmax.f32 %v2552, 0.0
  %v2599 = vmax.f32 %v2557, 0.0
  %v2600 = vmax.f32 %v2560, 0.0
  %v2601 = vmax.f32 %v2565, 0.0
  %v2602 = vmax.f32 %v2568, 0.0
  %v2603 = vld [vmem:[%s11] sm:$0xf]
  %v2604 = vld [vmem:[%s11 + $0x4] sm:$0xf]
  %v2605 = vld [vmem:[%s11 + $0x8] sm:$0xf]
  %v2606 = vld [vmem:[%s11 + $0xc] sm:$0xf]
  %v2607 = vld [vmem:[%s11 + $0x10] sm:$0xf]
  %v2608 = vld [vmem:[%s11 + $0x14] sm:$0xf]
  %v2609 = vld [vmem:[%s11 + $0x18] sm:$0xf]
  %v2610 = vld [vmem:[%s11 + $0x1c] sm:$0xf]
  %v2611 = vld [vmem:[%s11 + $0x20] sm:$0xf]
  %v2612 = vld [vmem:[%s11 + $0x24] sm:$0xf]
  %v2613 = vld [vmem:[%s11 + $0x28] sm:$0xf]
  %v2614 = vld [vmem:[%s11 + $0x2c] sm:$0xf]
  %v2615 = vld [vmem:[%s11 + $0x30] sm:$0xf]
  %v2616 = vld [vmem:[%s11 + $0x34] sm:$0xf]
  %v2617 = vld [vmem:[%s11 + $0x38] sm:$0xf]
  %v2618 = vld [vmem:[%s11 + $0x3c] sm:$0xf]
  %v2619 = vld [vmem:[%s11 + $0x40] sm:$0xf]
  %v2620 = vld [vmem:[%s11 + $0x44] sm:$0xf]
  %v2621 = vld [vmem:[%s11 + $0x48] sm:$0xf]
  %v2622 = vld [vmem:[%s11 + $0x4c] sm:$0xf]
  %v2623 = vld [vmem:[%s11 + $0x50] sm:$0xf]
  %v2624 = vld [vmem:[%s11 + $0x54] sm:$0xf]
  %v2625 = vld [vmem:[%s11 + $0x58] sm:$0xf]
  %v2626 = vld [vmem:[%s11 + $0x5c] sm:$0xf]
  %v2627 = vld [vmem:[%s11 + $0x60] sm:$0xf]
  %v2628 = vld [vmem:[%s11 + $0x64] sm:$0xf]
  %v2629 = vld [vmem:[%s11 + $0x68] sm:$0xf]
  %v2630 = vld [vmem:[%s11 + $0x6c] sm:$0xf]
  %v2631 = vld [vmem:[%s11 + $0x70] sm:$0xf]
  %v2632 = vld [vmem:[%s11 + $0x74] sm:$0xf]
  %v2633 = vld [vmem:[%s11 + $0x78] sm:$0xf]
  %v2634 = vld [vmem:[%s11 + $0x7c] sm:$0xf]
  %v2635 = vld [vmem:[%s15] sm:$0x1]
  %v2637 = vlaneseq
  %v2638 = vshrl.u32 %v2637, 7
  %v2639 = vsub.s32 0, %v2638
  %v2640 = vrot.slane %v2635, %v2639
  %v2674 = vunpack.c.l.b16 %v2603
  %v2675 = vunpack.c.l.b16 %v2604
  %v2676 = vunpack.c.l.b16 %v2605
  %v2677 = vunpack.c.l.b16 %v2606
  %v2678 = vunpack.c.l.b16 %v2607
  %v2679 = vunpack.c.l.b16 %v2608
  %v2680 = vunpack.c.l.b16 %v2609
  %v2681 = vunpack.c.l.b16 %v2610
  %v2682 = vunpack.c.l.b16 %v2611
  %v2683 = vunpack.c.l.b16 %v2612
  %v2684 = vunpack.c.l.b16 %v2613
  %v2685 = vunpack.c.l.b16 %v2614
  %v2686 = vunpack.c.l.b16 %v2615
  %v2687 = vunpack.c.l.b16 %v2616
  %v2688 = vunpack.c.l.b16 %v2617
  %v2689 = vunpack.c.l.b16 %v2618
  %v2690 = vunpack.c.l.b16 %v2619
  %v2691 = vunpack.c.l.b16 %v2620
  %v2692 = vunpack.c.l.b16 %v2621
  %v2693 = vunpack.c.l.b16 %v2622
  %v2694 = vunpack.c.l.b16 %v2623
  %v2695 = vunpack.c.l.b16 %v2624
  %v2696 = vunpack.c.l.b16 %v2625
  %v2697 = vunpack.c.l.b16 %v2626
  %v2698 = vunpack.c.l.b16 %v2627
  %v2699 = vunpack.c.l.b16 %v2628
  %v2700 = vunpack.c.l.b16 %v2629
  %v2701 = vunpack.c.l.b16 %v2630
  %v2702 = vunpack.c.l.b16 %v2631
  %v2703 = vunpack.c.l.b16 %v2632
  %v2704 = vunpack.c.l.b16 %v2633
  %v2705 = vunpack.c.l.b16 %v2634
  %v2706 = vpack.c.b16 %v2675, %v2674
  %v2707 = vpack.c.b16 %v2677, %v2676
  %v2708 = vpack.c.b16 %v2679, %v2678
  %v2709 = vpack.c.b16 %v2681, %v2680
  %v2710 = vpack.c.b16 %v2683, %v2682
  %v2711 = vpack.c.b16 %v2685, %v2684
  %v2712 = vpack.c.b16 %v2687, %v2686
  %v2713 = vpack.c.b16 %v2689, %v2688
  %v2714 = vpack.c.b16 %v2691, %v2690
  %v2715 = vpack.c.b16 %v2693, %v2692
  %v2716 = vpack.c.b16 %v2695, %v2694
  %v2717 = vpack.c.b16 %v2697, %v2696
  %v2718 = vpack.c.b16 %v2699, %v2698
  %v2719 = vpack.c.b16 %v2701, %v2700
  %v2720 = vpack.c.b16 %v2703, %v2702
  %v2721 = vpack.c.b16 %v2705, %v2704
  %2738 = vmatprep.subr.bf16.mxu0 0
  %2739 = vmatpush1.bf16.msra.mxu0 %v2706
  %2740 = vmatprep.subr.bf16.mxu0 0
  %2741 = vmatpush1.bf16.msra.mxu0 %v2707
  %2742 = vmatprep.subr.bf16.mxu0 0
  %2743 = vmatpush1.bf16.msra.mxu0 %v2708
  %2744 = vmatprep.subr.bf16.mxu0 0
  %2745 = vmatpush1.bf16.msra.mxu0 %v2709
  %2746 = vmatprep.subr.bf16.mxu0 0
  %2747 = vmatpush1.bf16.msra.mxu0 %v2710
  %2748 = vmatprep.subr.bf16.mxu0 0
  %2749 = vmatpush1.bf16.msra.mxu0 %v2711
  %2750 = vmatprep.subr.bf16.mxu0 0
  %2751 = vmatpush1.bf16.msra.mxu0 %v2712
  %2752 = vmatprep.subr.bf16.mxu0 0
  %2753 = vmatpush1.bf16.msra.mxu0 %v2713
  %2754 = vmatprep.subr.bf16.mxu0 0
  %2755 = vmatpush1.bf16.msra.mxu0 %v2714
  %2756 = vmatprep.subr.bf16.mxu0 0
  %2757 = vmatpush1.bf16.msra.mxu0 %v2715
  %2758 = vmatprep.subr.bf16.mxu0 0
  %2759 = vmatpush1.bf16.msra.mxu0 %v2716
  %2760 = vmatprep.subr.bf16.mxu0 0
  %2761 = vmatpush1.bf16.msra.mxu0 %v2717
  %2762 = vmatprep.subr.bf16.mxu0 0
  %2763 = vmatpush1.bf16.msra.mxu0 %v2718
  %2764 = vmatprep.subr.bf16.mxu0 0
  %2765 = vmatpush1.bf16.msra.mxu0 %v2719
  %2766 = vmatprep.subr.bf16.mxu0 0
  %2767 = vmatpush1.bf16.msra.mxu0 %v2720
  %2768 = vmatprep.subr.bf16.mxu0 0
  %2769 = vmatpush1.bf16.msra.mxu0 %v2721
  %2770 = vmatprep.mubr.bf16.mxu0 %v2244
  %2771 = vmatmul.mubr.bf16.gmra.mrb[0].mxu0 %v2243
  %v2772 = vpop.f32.mrb[0].mxu0
  %v2773 = vadd.f32 %v2640, %v2772
  %v2774 = vpop.f32.mrb[0].mxu0
  %v2775 = vpop.f32.mrb[0].mxu0
  %v2776 = vadd.f32 %v2640, %v2775
  %v2777 = vpop.f32.mrb[0].mxu0
  %2778 = vmatprep.mubr.bf16.mxu0 %v2246
  %2779 = vmatmul.mubr.bf16.gmra.mrb[0].mxu0 %v2245
  %v2780 = vpop.f32.mrb[0].mxu0
  %v2781 = vadd.f32 %v2640, %v2780
  %v2782 = vpop.f32.mrb[0].mxu0
  %v2783 = vpop.f32.mrb[0].mxu0
  %v2784 = vadd.f32 %v2640, %v2783
  %v2785 = vpop.f32.mrb[0].mxu0
  %2786 = vmatprep.mubr.bf16.mxu0 %v2248
  %2787 = vmatmul.mubr.bf16.gmra.mrb[0].mxu0 %v2247
  %v2788 = vpop.f32.mrb[0].mxu0
  %v2789 = vadd.f32 %v2640, %v2788
  %v2790 = vpop.f32.mrb[0].mxu0
  %v2791 = vpop.f32.mrb[0].mxu0
  %v2792 = vadd.f32 %v2640, %v2791
  %v2793 = vpop.f32.mrb[0].mxu0
  %2794 = vmatprep.mubr.bf16.mxu0 %v2250
  %2795 = vmatmul.mubr.bf16.gmra.mrb[0].mxu0 %v2249
  %v2796 = vpop.f32.mrb[0].mxu0
  %v2797 = vadd.f32 %v2640, %v2796
  %v2798 = vpop.f32.mrb[0].mxu0
  %v2799 = vpop.f32.mrb[0].mxu0
  %v2800 = vadd.f32 %v2640, %v2799
  %v2801 = vpop.f32.mrb[0].mxu0
  %2802 = vmatprep.mubr.bf16.mxu0 %v2252
  %2803 = vmatmul.mubr.bf16.gmra.mrb[0].mxu0 %v2251
  %v2804 = vpop.f32.mrb[0].mxu0
  %v2805 = vadd.f32 %v2640, %v2804
  %v2806 = vpop.f32.mrb[0].mxu0
  %v2807 = vpop.f32.mrb[0].mxu0
  %v2808 = vadd.f32 %v2640, %v2807
  %v2809 = vpop.f32.mrb[0].mxu0
  %2810 = vmatprep.mubr.bf16.mxu0 %v2254
  %2811 = vmatmul.mubr.bf16.gmra.mrb[0].mxu0 %v2253
  %v2812 = vpop.f32.mrb[0].mxu0
  %v2813 = vadd.f32 %v2640, %v2812
  %v2814 = vpop.f32.mrb[0].mxu0
  %v2815 = vpop.f32.mrb[0].mxu0
  %v2816 = vadd.f32 %v2640, %v2815
  %v2817 = vpop.f32.mrb[0].mxu0
  %2818 = vmatprep.mubr.bf16.mxu0 %v2256
  %2819 = vmatmul.mubr.bf16.gmra.mrb[0].mxu0 %v2255
  %v2820 = vpop.f32.mrb[0].mxu0
  %v2821 = vadd.f32 %v2640, %v2820
  %v2822 = vpop.f32.mrb[0].mxu0
  %v2823 = vpop.f32.mrb[0].mxu0
  %v2824 = vadd.f32 %v2640, %v2823
  %v2825 = vpop.f32.mrb[0].mxu0
  %2826 = vmatprep.mubr.bf16.mxu0 %v2258
  %2827 = vmatmul.mubr.bf16.gmra.mrb[0].mxu0 %v2257
  %v2828 = vpop.f32.mrb[0].mxu0
  %v2829 = vadd.f32 %v2640, %v2828
  %v2830 = vpop.f32.mrb[0].mxu0
  %v2831 = vpop.f32.mrb[0].mxu0
  %v2832 = vadd.f32 %v2640, %v2831
  %v2833 = vpop.f32.mrb[0].mxu0
  %2834 = vmatprep.mubr.bf16.mxu0 %v2260
  %2835 = vmatmul.mubr.bf16.gmra.mrb[0].mxu0 %v2259
  %v2836 = vpop.f32.mrb[0].mxu0
  %v2837 = vadd.f32 %v2640, %v2836
  %v2838 = vpop.f32.mrb[0].mxu0
  %v2839 = vpop.f32.mrb[0].mxu0
  %v2840 = vadd.f32 %v2640, %v2839
  %v2841 = vpop.f32.mrb[0].mxu0
  %2842 = vmatprep.mubr.bf16.mxu0 %v2262
  %2843 = vmatmul.mubr.bf16.gmra.mrb[0].mxu0 %v2261
  %v2844 = vpop.f32.mrb[0].mxu0
  %v2845 = vadd.f32 %v2640, %v2844
  %v2846 = vpop.f32.mrb[0].mxu0
  %v2847 = vpop.f32.mrb[0].mxu0
  %v2848 = vadd.f32 %v2640, %v2847
  %v2849 = vpop.f32.mrb[0].mxu0
  %2850 = vmatprep.mubr.bf16.mxu0 %v2264
  %2851 = vmatmul.mubr.bf16.gmra.mrb[0].mxu0 %v2263
  %v2852 = vpop.f32.mrb[0].mxu0
  %v2853 = vadd.f32 %v2640, %v2852
  %v2854 = vpop.f32.mrb[0].mxu0
  %v2855 = vpop.f32.mrb[0].mxu0
  %v2856 = vadd.f32 %v2640, %v2855
  %v2857 = vpop.f32.mrb[0].mxu0
  %2858 = vmatprep.mubr.bf16.mxu0 %v2266
  %2859 = vmatmul.mubr.bf16.gmra.mrb[0].mxu0 %v2265
  %v2860 = vpop.f32.mrb[0].mxu0
  %v2861 = vadd.f32 %v2640, %v2860
  %v2862 = vpop.f32.mrb[0].mxu0
  %v2863 = vpop.f32.mrb[0].mxu0
  %v2864 = vadd.f32 %v2640, %v2863
  %v2865 = vpop.f32.mrb[0].mxu0
  %2866 = vmatprep.mubr.bf16.mxu0 %v2268
  %2867 = vmatmul.mubr.bf16.gmra.mrb[0].mxu0 %v2267
  %v2868 = vpop.f32.mrb[0].mxu0
  %v2869 = vadd.f32 %v2640, %v2868
  %v2870 = vpop.f32.mrb[0].mxu0
  %v2871 = vpop.f32.mrb[0].mxu0
  %v2872 = vadd.f32 %v2640, %v2871
  %v2873 = vpop.f32.mrb[0].mxu0
  %2874 = vmatprep.mubr.bf16.mxu0 %v2270
  %2875 = vmatmul.mubr.bf16.gmra.mrb[0].mxu0 %v2269
  %v2876 = vpop.f32.mrb[0].mxu0
  %v2877 = vadd.f32 %v2640, %v2876
  %v2878 = vpop.f32.mrb[0].mxu0
  %v2879 = vpop.f32.mrb[0].mxu0
  %v2880 = vadd.f32 %v2640, %v2879
  %v2881 = vpop.f32.mrb[0].mxu0
  %2882 = vmatprep.mubr.bf16.mxu0 %v2272
  %2883 = vmatmul.mubr.bf16.gmra.mrb[0].mxu0 %v2271
  %v2884 = vpop.f32.mrb[0].mxu0
  %v2885 = vadd.f32 %v2640, %v2884
  %v2886 = vpop.f32.mrb[0].mxu0
  %v2887 = vpop.f32.mrb[0].mxu0
  %v2888 = vadd.f32 %v2640, %v2887
  %v2889 = vpop.f32.mrb[0].mxu0
  %2890 = vmatprep.mubr.bf16.mxu0 %v2274
  %2891 = vmatmul.mubr.bf16.gmra.mrb[0].mxu0 %v2273
  %v2892 = vpop.f32.mrb[0].mxu0
  %v2893 = vadd.f32 %v2640, %v2892
  %v2894 = vpop.f32.mrb[0].mxu0
  %v2895 = vpop.f32.mrb[0].mxu0
  %v2896 = vadd.f32 %v2640, %v2895
  %v2897 = vpop.f32.mrb[0].mxu0
  %2898 = vdwg.mxu0
  %v2899 = vmax.f32 %v2773, 0.0
  %v2900 = vmax.f32 %v2776, 0.0
  %v2901 = vmax.f32 %v2781, 0.0
  %v2902 = vmax.f32 %v2784, 0.0
  %v2903 = vmax.f32 %v2789, 0.0
  %v2904 = vmax.f32 %v2792, 0.0
  %v2905 = vmax.f32 %v2797, 0.0
  %v2906 = vmax.f32 %v2800, 0.0
  %v2907 = vmax.f32 %v2805, 0.0
  %v2908 = vmax.f32 %v2808, 0.0
  %v2909 = vmax.f32 %v2813, 0.0
  %v2910 = vmax.f32 %v2816, 0.0
  %v2911 = vmax.f32 %v2821, 0.0
  %v2912 = vmax.f32 %v2824, 0.0
  %v2913 = vmax.f32 %v2829, 0.0
  %v2914 = vmax.f32 %v2832, 0.0
  %v2915 = vmax.f32 %v2837, 0.0
  %v2916 = vmax.f32 %v2840, 0.0
  %v2917 = vmax.f32 %v2845, 0.0
  %v2918 = vmax.f32 %v2848, 0.0
  %v2919 = vmax.f32 %v2853, 0.0
  %v2920 = vmax.f32 %v2856, 0.0
  %v2921 = vmax.f32 %v2861, 0.0
  %v2922 = vmax.f32 %v2864, 0.0
  %v2923 = vmax.f32 %v2869, 0.0
  %v2924 = vmax.f32 %v2872, 0.0
  %v2925 = vmax.f32 %v2877, 0.0
  %v2926 = vmax.f32 %v2880, 0.0
  %v2927 = vmax.f32 %v2885, 0.0
  %v2928 = vmax.f32 %v2888, 0.0
  %v2929 = vmax.f32 %v2893, 0.0
  %v2930 = vmax.f32 %v2896, 0.0
  %v2931 = vld [vmem:[%s13] sm:$0x1]
  %v2932 = vld [vmem:[%s14] sm:$0x1]
  %2933 = vadd.xlane.f32.xlu0 %v2571
  %v2934 = vpop.xlane.xlu0 %2933
  %2935 = vadd.xlane.f32.xlu0 %v2572
  %v2936 = vpop.xlane.xlu0 %2935
  %2937 = vadd.xlane.f32.xlu0 %v2573
  %v2938 = vpop.xlane.xlu0 %2937
  %2939 = vadd.xlane.f32.xlu0 %v2574
  %v2940 = vpop.xlane.xlu0 %2939
  %2941 = vadd.xlane.f32.xlu0 %v2575
  %v2942 = vpop.xlane.xlu0 %2941
  %2943 = vadd.xlane.f32.xlu0 %v2576
  %v2944 = vpop.xlane.xlu0 %2943
  %2945 = vadd.xlane.f32.xlu0 %v2577
  %v2946 = vpop.xlane.xlu0 %2945
  %2947 = vadd.xlane.f32.xlu0 %v2578
  %v2948 = vpop.xlane.xlu0 %2947
  %2949 = vadd.xlane.f32.xlu0 %v2579
  %v2950 = vpop.xlane.xlu0 %2949
  %2951 = vadd.xlane.f32.xlu0 %v2580
  %v2952 = vpop.xlane.xlu0 %2951
  %2953 = vadd.xlane.f32.xlu0 %v2581
  %v2954 = vpop.xlane.xlu0 %2953
  %2955 = vadd.xlane.f32.xlu0 %v2582
  %v2956 = vpop.xlane.xlu0 %2955
  %2957 = vadd.xlane.f32.xlu0 %v2583
  %v2958 = vpop.xlane.xlu0 %2957
  %2959 = vadd.xlane.f32.xlu0 %v2584
  %v2960 = vpop.xlane.xlu0 %2959
  %2961 = vadd.xlane.f32.xlu0 %v2585
  %v2962 = vpop.xlane.xlu0 %2961
  %2963 = vadd.xlane.f32.xlu0 %v2586
  %v2964 = vpop.xlane.xlu0 %2963
  %2965 = vadd.xlane.f32.xlu0 %v2587
  %v2966 = vpop.xlane.xlu0 %2965
  %2967 = vadd.xlane.f32.xlu0 %v2588
  %v2968 = vpop.xlane.xlu0 %2967
  %2969 = vadd.xlane.f32.xlu0 %v2589
  %v2970 = vpop.xlane.xlu0 %2969
  %2971 = vadd.xlane.f32.xlu0 %v2590
  %v2972 = vpop.xlane.xlu0 %2971
  %2973 = vadd.xlane.f32.xlu0 %v2591
  %v2974 = vpop.xlane.xlu0 %2973
  %2975 = vadd.xlane.f32.xlu0 %v2592
  %v2976 = vpop.xlane.xlu0 %2975
  %2977 = vadd.xlane.f32.xlu0 %v2593
  %v2978 = vpop.xlane.xlu0 %2977
  %2979 = vadd.xlane.f32.xlu0 %v2594
  %v2980 = vpop.xlane.xlu0 %2979
  %2981 = vadd.xlane.f32.xlu0 %v2595
  %v2982 = vpop.xlane.xlu0 %2981
  %2983 = vadd.xlane.f32.xlu0 %v2596
  %v2984 = vpop.xlane.xlu0 %2983
  %2985 = vadd.xlane.f32.xlu0 %v2597
  %v2986 = vpop.xlane.xlu0 %2985
  %2987 = vadd.xlane.f32.xlu0 %v2598
  %v2988 = vpop.xlane.xlu0 %2987
  %2989 = vadd.xlane.f32.xlu0 %v2599
  %v2990 = vpop.xlane.xlu0 %2989
  %2991 = vadd.xlane.f32.xlu0 %v2600
  %v2992 = vpop.xlane.xlu0 %2991
  %2993 = vadd.xlane.f32.xlu0 %v2601
  %v2994 = vpop.xlane.xlu0 %2993
  %2995 = vadd.xlane.f32.xlu0 %v2602
  %v2996 = vpop.xlane.xlu0 %2995
  %v2997 = vmul.f32 %v2934, 0.03125
  %v2998 = vmul.f32 %v2936, 0.03125
  %v2999 = vmul.f32 %v2938, 0.03125
  %v3000 = vmul.f32 %v2940, 0.03125
  %v3001 = vmul.f32 %v2942, 0.03125
  %v3002 = vmul.f32 %v2944, 0.03125
  %v3003 = vmul.f32 %v2946, 0.03125
  %v3004 = vmul.f32 %v2948, 0.03125
  %v3005 = vmul.f32 %v2950, 0.03125
  %v3006 = vmul.f32 %v2952, 0.03125
  %v3007 = vmul.f32 %v2954, 0.03125
  %v3008 = vmul.f32 %v2956, 0.03125
  %v3009 = vmul.f32 %v2958, 0.03125
  %v3010 = vmul.f32 %v2960, 0.03125
  %v3011 = vmul.f32 %v2962, 0.03125
  %v3012 = vmul.f32 %v2964, 0.03125
  %v3013 = vmul.f32 %v2966, 0.03125
  %v3014 = vmul.f32 %v2968, 0.03125
  %v3015 = vmul.f32 %v2970, 0.03125
  %v3016 = vmul.f32 %v2972, 0.03125
  %v3017 = vmul.f32 %v2974, 0.03125
  %v3018 = vmul.f32 %v2976, 0.03125
  %v3019 = vmul.f32 %v2978, 0.03125
  %v3020 = vmul.f32 %v2980, 0.03125
  %v3021 = vmul.f32 %v2982, 0.03125
  %v3022 = vmul.f32 %v2984, 0.03125
  %v3023 = vmul.f32 %v2986, 0.03125
  %v3024 = vmul.f32 %v2988, 0.03125
  %v3025 = vmul.f32 %v2990, 0.03125
  %v3026 = vmul.f32 %v2992, 0.03125
  %v3027 = vmul.f32 %v2994, 0.03125
  %v3028 = vmul.f32 %v2996, 0.03125
  %v3029 = vsub.f32 %v2571, %v2997
  %v3030 = vsub.f32 %v2572, %v2998
  %v3031 = vsub.f32 %v2573, %v2999
  %v3032 = vsub.f32 %v2574, %v3000
  %v3033 = vsub.f32 %v2575, %v3001
  %v3034 = vsub.f32 %v2576, %v3002
  %v3035 = vsub.f32 %v2577, %v3003
  %v3036 = vsub.f32 %v2578, %v3004
  %v3037 = vsub.f32 %v2579, %v3005
  %v3038 = vsub.f32 %v2580, %v3006
  %v3039 = vsub.f32 %v2581, %v3007
  %v3040 = vsub.f32 %v2582, %v3008
  %v3041 = vsub.f32 %v2583, %v3009
  %v3042 = vsub.f32 %v2584, %v3010
  %v3043 = vsub.f32 %v2585, %v3011
  %v3044 = vsub.f32 %v2586, %v3012
  %v3045 = vsub.f32 %v2587, %v3013
  %v3046 = vsub.f32 %v2588, %v3014
  %v3047 = vsub.f32 %v2589, %v3015
  %v3048 = vsub.f32 %v2590, %v3016
  %v3049 = vsub.f32 %v2591, %v3017
  %v3050 = vsub.f32 %v2592, %v3018
  %v3051 = vsub.f32 %v2593, %v3019
  %v3052 = vsub.f32 %v2594, %v3020
  %v3053 = vsub.f32 %v2595, %v3021
  %v3054 = vsub.f32 %v2596, %v3022
  %v3055 = vsub.f32 %v2597, %v3023
  %v3056 = vsub.f32 %v2598, %v3024
  %v3057 = vsub.f32 %v2599, %v3025
  %v3058 = vsub.f32 %v2600, %v3026
  %v3059 = vsub.f32 %v2601, %v3027
  %v3060 = vsub.f32 %v2602, %v3028
  %v3061 = vsel %vm1223, %v3029, 0.0
  %v3062 = vsel %vm1223, %v3030, 0.0
  %v3063 = vsel %vm1223, %v3031, 0.0
  %v3064 = vsel %vm1223, %v3032, 0.0
  %v3065 = vsel %vm1223, %v3033, 0.0
  %v3066 = vsel %vm1223, %v3034, 0.0
  %v3067 = vsel %vm1223, %v3035, 0.0
  %v3068 = vsel %vm1223, %v3036, 0.0
  %v3069 = vsel %vm1223, %v3037, 0.0
  %v3070 = vsel %vm1223, %v3038, 0.0
  %v3071 = vsel %vm1223, %v3039, 0.0
  %v3072 = vsel %vm1223, %v3040, 0.0
  %v3073 = vsel %vm1223, %v3041, 0.0
  %v3074 = vsel %vm1223, %v3042, 0.0
  %v3075 = vsel %vm1223, %v3043, 0.0
  %v3076 = vsel %vm1223, %v3044, 0.0
  %v3077 = vsel %vm1223, %v3045, 0.0
  %v3078 = vsel %vm1223, %v3046, 0.0
  %v3079 = vsel %vm1223, %v3047, 0.0
  %v3080 = vsel %vm1223, %v3048, 0.0
  %v3081 = vsel %vm1223, %v3049, 0.0
  %v3082 = vsel %vm1223, %v3050, 0.0
  %v3083 = vsel %vm1223, %v3051, 0.0
  %v3084 = vsel %vm1223, %v3052, 0.0
  %v3085 = vsel %vm1223, %v3053, 0.0
  %v3086 = vsel %vm1223, %v3054, 0.0
  %v3087 = vsel %vm1223, %v3055, 0.0
  %v3088 = vsel %vm1223, %v3056, 0.0
  %v3089 = vsel %vm1223, %v3057, 0.0
  %v3090 = vsel %vm1223, %v3058, 0.0
  %v3091 = vsel %vm1223, %v3059, 0.0
  %v3092 = vsel %vm1223, %v3060, 0.0
  %v3093 = vmul.f32 %v3061, %v3061
  %v3094 = vmul.f32 %v3062, %v3062
  %v3095 = vmul.f32 %v3063, %v3063
  %v3096 = vmul.f32 %v3064, %v3064
  %v3097 = vmul.f32 %v3065, %v3065
  %v3098 = vmul.f32 %v3066, %v3066
  %v3099 = vmul.f32 %v3067, %v3067
  %v3100 = vmul.f32 %v3068, %v3068
  %v3101 = vmul.f32 %v3069, %v3069
  %v3102 = vmul.f32 %v3070, %v3070
  %v3103 = vmul.f32 %v3071, %v3071
  %v3104 = vmul.f32 %v3072, %v3072
  %v3105 = vmul.f32 %v3073, %v3073
  %v3106 = vmul.f32 %v3074, %v3074
  %v3107 = vmul.f32 %v3075, %v3075
  %v3108 = vmul.f32 %v3076, %v3076
  %v3109 = vmul.f32 %v3077, %v3077
  %v3110 = vmul.f32 %v3078, %v3078
  %v3111 = vmul.f32 %v3079, %v3079
  %v3112 = vmul.f32 %v3080, %v3080
  %v3113 = vmul.f32 %v3081, %v3081
  %v3114 = vmul.f32 %v3082, %v3082
  %v3115 = vmul.f32 %v3083, %v3083
  %v3116 = vmul.f32 %v3084, %v3084
  %v3117 = vmul.f32 %v3085, %v3085
  %v3118 = vmul.f32 %v3086, %v3086
  %v3119 = vmul.f32 %v3087, %v3087
  %v3120 = vmul.f32 %v3088, %v3088
  %v3121 = vmul.f32 %v3089, %v3089
  %v3122 = vmul.f32 %v3090, %v3090
  %v3123 = vmul.f32 %v3091, %v3091
  %v3124 = vmul.f32 %v3092, %v3092
  %3125 = vadd.xlane.f32.xlu0 %v3093
  %v3126 = vpop.xlane.xlu0 %3125
  %3127 = vadd.xlane.f32.xlu0 %v3094
  %v3128 = vpop.xlane.xlu0 %3127
  %3129 = vadd.xlane.f32.xlu0 %v3095
  %v3130 = vpop.xlane.xlu0 %3129
  %3131 = vadd.xlane.f32.xlu0 %v3096
  %v3132 = vpop.xlane.xlu0 %3131
  %3133 = vadd.xlane.f32.xlu0 %v3097
  %v3134 = vpop.xlane.xlu0 %3133
  %3135 = vadd.xlane.f32.xlu0 %v3098
  %v3136 = vpop.xlane.xlu0 %3135
  %3137 = vadd.xlane.f32.xlu0 %v3099
  %v3138 = vpop.xlane.xlu0 %3137
  %3139 = vadd.xlane.f32.xlu0 %v3100
  %v3140 = vpop.xlane.xlu0 %3139
  %3141 = vadd.xlane.f32.xlu0 %v3101
  %v3142 = vpop.xlane.xlu0 %3141
  %3143 = vadd.xlane.f32.xlu0 %v3102
  %v3144 = vpop.xlane.xlu0 %3143
  %3145 = vadd.xlane.f32.xlu0 %v3103
  %v3146 = vpop.xlane.xlu0 %3145
  %3147 = vadd.xlane.f32.xlu0 %v3104
  %v3148 = vpop.xlane.xlu0 %3147
  %3149 = vadd.xlane.f32.xlu0 %v3105
  %v3150 = vpop.xlane.xlu0 %3149
  %3151 = vadd.xlane.f32.xlu0 %v3106
  %v3152 = vpop.xlane.xlu0 %3151
  %3153 = vadd.xlane.f32.xlu0 %v3107
  %v3154 = vpop.xlane.xlu0 %3153
  %3155 = vadd.xlane.f32.xlu0 %v3108
  %v3156 = vpop.xlane.xlu0 %3155
  %3157 = vadd.xlane.f32.xlu0 %v3109
  %v3158 = vpop.xlane.xlu0 %3157
  %3159 = vadd.xlane.f32.xlu0 %v3110
  %v3160 = vpop.xlane.xlu0 %3159
  %3161 = vadd.xlane.f32.xlu0 %v3111
  %v3162 = vpop.xlane.xlu0 %3161
  %3163 = vadd.xlane.f32.xlu0 %v3112
  %v3164 = vpop.xlane.xlu0 %3163
  %3165 = vadd.xlane.f32.xlu0 %v3113
  %v3166 = vpop.xlane.xlu0 %3165
  %3167 = vadd.xlane.f32.xlu0 %v3114
  %v3168 = vpop.xlane.xlu0 %3167
  %3169 = vadd.xlane.f32.xlu0 %v3115
  %v3170 = vpop.xlane.xlu0 %3169
  %3171 = vadd.xlane.f32.xlu0 %v3116
  %v3172 = vpop.xlane.xlu0 %3171
  %3173 = vadd.xlane.f32.xlu0 %v3117
  %v3174 = vpop.xlane.xlu0 %3173
  %3175 = vadd.xlane.f32.xlu0 %v3118
  %v3176 = vpop.xlane.xlu0 %3175
  %3177 = vadd.xlane.f32.xlu0 %v3119
  %v3178 = vpop.xlane.xlu0 %3177
  %3179 = vadd.xlane.f32.xlu0 %v3120
  %v3180 = vpop.xlane.xlu0 %3179
  %3181 = vadd.xlane.f32.xlu0 %v3121
  %v3182 = vpop.xlane.xlu0 %3181
  %3183 = vadd.xlane.f32.xlu0 %v3122
  %v3184 = vpop.xlane.xlu0 %3183
  %3185 = vadd.xlane.f32.xlu0 %v3123
  %v3186 = vpop.xlane.xlu0 %3185
  %3187 = vadd.xlane.f32.xlu0 %v3124
  %v3188 = vpop.xlane.xlu0 %3187
  %v3189 = vmul.f32 %v3126, 0.03125
  %v3190 = vmul.f32 %v3128, 0.03125
  %v3191 = vmul.f32 %v3130, 0.03125
  %v3192 = vmul.f32 %v3132, 0.03125
  %v3193 = vmul.f32 %v3134, 0.03125
  %v3194 = vmul.f32 %v3136, 0.03125
  %v3195 = vmul.f32 %v3138, 0.03125
  %v3196 = vmul.f32 %v3140, 0.03125
  %v3197 = vmul.f32 %v3142, 0.03125
  %v3198 = vmul.f32 %v3144, 0.03125
  %v3199 = vmul.f32 %v3146, 0.03125
  %v3200 = vmul.f32 %v3148, 0.03125
  %v3201 = vmul.f32 %v3150, 0.03125
  %v3202 = vmul.f32 %v3152, 0.03125
  %v3203 = vmul.f32 %v3154, 0.03125
  %v3204 = vmul.f32 %v3156, 0.03125
  %v3205 = vmul.f32 %v3158, 0.03125
  %v3206 = vmul.f32 %v3160, 0.03125
  %v3207 = vmul.f32 %v3162, 0.03125
  %v3208 = vmul.f32 %v3164, 0.03125
  %v3209 = vmul.f32 %v3166, 0.03125
  %v3210 = vmul.f32 %v3168, 0.03125
  %v3211 = vmul.f32 %v3170, 0.03125
  %v3212 = vmul.f32 %v3172, 0.03125
  %v3213 = vmul.f32 %v3174, 0.03125
  %v3214 = vmul.f32 %v3176, 0.03125
  %v3215 = vmul.f32 %v3178, 0.03125
  %v3216 = vmul.f32 %v3180, 0.03125
  %v3217 = vmul.f32 %v3182, 0.03125
  %v3218 = vmul.f32 %v3184, 0.03125
  %v3219 = vmul.f32 %v3186, 0.03125
  %v3220 = vmul.f32 %v3188, 0.03125
  %v3221 = vadd.f32 %v3189, 1e-09
  %v3222 = vadd.f32 %v3190, 1e-09
  %v3223 = vadd.f32 %v3191, 1e-09
  %v3224 = vadd.f32 %v3192, 1e-09
  %v3225 = vadd.f32 %v3193, 1e-09
  %v3226 = vadd.f32 %v3194, 1e-09
  %v3227 = vadd.f32 %v3195, 1e-09
  %v3228 = vadd.f32 %v3196, 1e-09
  %v3229 = vadd.f32 %v3197, 1e-09
  %v3230 = vadd.f32 %v3198, 1e-09
  %v3231 = vadd.f32 %v3199, 1e-09
  %v3232 = vadd.f32 %v3200, 1e-09
  %v3233 = vadd.f32 %v3201, 1e-09
  %v3234 = vadd.f32 %v3202, 1e-09
  %v3235 = vadd.f32 %v3203, 1e-09
  %v3236 = vadd.f32 %v3204, 1e-09
  %v3237 = vadd.f32 %v3205, 1e-09
  %v3238 = vadd.f32 %v3206, 1e-09
  %v3239 = vadd.f32 %v3207, 1e-09
  %v3240 = vadd.f32 %v3208, 1e-09
  %v3241 = vadd.f32 %v3209, 1e-09
  %v3242 = vadd.f32 %v3210, 1e-09
  %v3243 = vadd.f32 %v3211, 1e-09
  %v3244 = vadd.f32 %v3212, 1e-09
  %v3245 = vadd.f32 %v3213, 1e-09
  %v3246 = vadd.f32 %v3214, 1e-09
  %v3247 = vadd.f32 %v3215, 1e-09
  %v3248 = vadd.f32 %v3216, 1e-09
  %v3249 = vadd.f32 %v3217, 1e-09
  %v3250 = vadd.f32 %v3218, 1e-09
  %v3251 = vadd.f32 %v3219, 1e-09
  %v3252 = vadd.f32 %v3220, 1e-09
  %v3254 = vlaneseq
  %v3255 = vshrl.u32 %v3254, 7
  %v3256 = vsub.s32 0, %v3255
  %v3257 = vrot.slane %v2931, %v3256
  %v3259 = vmul.f32 %v3029, %v3257
  %v3260 = vmul.f32 %v3030, %v3257
  %v3261 = vmul.f32 %v3031, %v3257
  %v3262 = vmul.f32 %v3032, %v3257
  %v3263 = vmul.f32 %v3033, %v3257
  %v3264 = vmul.f32 %v3034, %v3257
  %v3265 = vmul.f32 %v3035, %v3257
  %v3266 = vmul.f32 %v3036, %v3257
  %v3267 = vmul.f32 %v3037, %v3257
  %v3268 = vmul.f32 %v3038, %v3257
  %v3269 = vmul.f32 %v3039, %v3257
  %v3270 = vmul.f32 %v3040, %v3257
  %v3271 = vmul.f32 %v3041, %v3257
  %v3272 = vmul.f32 %v3042, %v3257
  %v3273 = vmul.f32 %v3043, %v3257
  %v3274 = vmul.f32 %v3044, %v3257
  %v3275 = vmul.f32 %v3045, %v3257
  %v3276 = vmul.f32 %v3046, %v3257
  %v3277 = vmul.f32 %v3047, %v3257
  %v3278 = vmul.f32 %v3048, %v3257
  %v3279 = vmul.f32 %v3049, %v3257
  %v3280 = vmul.f32 %v3050, %v3257
  %v3281 = vmul.f32 %v3051, %v3257
  %v3282 = vmul.f32 %v3052, %v3257
  %v3283 = vmul.f32 %v3053, %v3257
  %v3284 = vmul.f32 %v3054, %v3257
  %v3285 = vmul.f32 %v3055, %v3257
  %v3286 = vmul.f32 %v3056, %v3257
  %v3287 = vmul.f32 %v3057, %v3257
  %v3288 = vmul.f32 %v3058, %v3257
  %v3289 = vmul.f32 %v3059, %v3257
  %v3290 = vmul.f32 %v3060, %v3257
  %v3291 = vrsqrt.pop %v3221
  %v3292 = vrsqrt.pop %v3222
  %v3293 = vrsqrt.pop %v3223
  %v3294 = vrsqrt.pop %v3224
  %v3295 = vrsqrt.pop %v3225
  %v3296 = vrsqrt.pop %v3226
  %v3297 = vrsqrt.pop %v3227
  %v3298 = vrsqrt.pop %v3228
  %v3299 = vrsqrt.pop %v3229
  %v3300 = vrsqrt.pop %v3230
  %v3301 = vrsqrt.pop %v3231
  %v3302 = vrsqrt.pop %v3232
  %v3303 = vrsqrt.pop %v3233
  %v3304 = vrsqrt.pop %v3234
  %v3305 = vrsqrt.pop %v3235
  %v3306 = vrsqrt.pop %v3236
  %v3307 = vrsqrt.pop %v3237
  %v3308 = vrsqrt.pop %v3238
  %v3309 = vrsqrt.pop %v3239
  %v3310 = vrsqrt.pop %v3240
  %v3311 = vrsqrt.pop %v3241
  %v3312 = vrsqrt.pop %v3242
  %v3313 = vrsqrt.pop %v3243
  %v3314 = vrsqrt.pop %v3244
  %v3315 = vrsqrt.pop %v3245
  %v3316 = vrsqrt.pop %v3246
  %v3317 = vrsqrt.pop %v3247
  %v3318 = vrsqrt.pop %v3248
  %v3319 = vrsqrt.pop %v3249
  %v3320 = vrsqrt.pop %v3250
  %v3321 = vrsqrt.pop %v3251
  %v3322 = vrsqrt.pop %v3252
  %v3323 = vmul.f32 %v3259, %v3291
  %v3324 = vmul.f32 %v3260, %v3292
  %v3325 = vmul.f32 %v3261, %v3293
  %v3326 = vmul.f32 %v3262, %v3294
  %v3327 = vmul.f32 %v3263, %v3295
  %v3328 = vmul.f32 %v3264, %v3296
  %v3329 = vmul.f32 %v3265, %v3297
  %v3330 = vmul.f32 %v3266, %v3298
  %v3331 = vmul.f32 %v3267, %v3299
  %v3332 = vmul.f32 %v3268, %v3300
  %v3333 = vmul.f32 %v3269, %v3301
  %v3334 = vmul.f32 %v3270, %v3302
  %v3335 = vmul.f32 %v3271, %v3303
  %v3336 = vmul.f32 %v3272, %v3304
  %v3337 = vmul.f32 %v3273, %v3305
  %v3338 = vmul.f32 %v3274, %v3306
  %v3339 = vmul.f32 %v3275, %v3307
  %v3340 = vmul.f32 %v3276, %v3308
  %v3341 = vmul.f32 %v3277, %v3309
  %v3342 = vmul.f32 %v3278, %v3310
  %v3343 = vmul.f32 %v3279, %v3311
  %v3344 = vmul.f32 %v3280, %v3312
  %v3345 = vmul.f32 %v3281, %v3313
  %v3346 = vmul.f32 %v3282, %v3314
  %v3347 = vmul.f32 %v3283, %v3315
  %v3348 = vmul.f32 %v3284, %v3316
  %v3349 = vmul.f32 %v3285, %v3317
  %v3350 = vmul.f32 %v3286, %v3318
  %v3351 = vmul.f32 %v3287, %v3319
  %v3352 = vmul.f32 %v3288, %v3320
  %v3353 = vmul.f32 %v3289, %v3321
  %v3354 = vmul.f32 %v3290, %v3322
  %v3356 = vlaneseq
  %v3357 = vshrl.u32 %v3356, 7
  %v3358 = vsub.s32 0, %v3357
  %v3359 = vrot.slane %v2932, %v3358
  %v3361 = vadd.f32 %v3323, %v3359
  %v3362 = vadd.f32 %v3324, %v3359
  %v3363 = vadd.f32 %v3325, %v3359
  %v3364 = vadd.f32 %v3326, %v3359
  %v3365 = vadd.f32 %v3327, %v3359
  %v3366 = vadd.f32 %v3328, %v3359
  %v3367 = vadd.f32 %v3329, %v3359
  %v3368 = vadd.f32 %v3330, %v3359
  %v3369 = vadd.f32 %v3331, %v3359
  %v3370 = vadd.f32 %v3332, %v3359
  %v3371 = vadd.f32 %v3333, %v3359
  %v3372 = vadd.f32 %v3334, %v3359
  %v3373 = vadd.f32 %v3335, %v3359
  %v3374 = vadd.f32 %v3336, %v3359
  %v3375 = vadd.f32 %v3337, %v3359
  %v3376 = vadd.f32 %v3338, %v3359
  %v3377 = vadd.f32 %v3339, %v3359
  %v3378 = vadd.f32 %v3340, %v3359
  %v3379 = vadd.f32 %v3341, %v3359
  %v3380 = vadd.f32 %v3342, %v3359
  %v3381 = vadd.f32 %v3343, %v3359
  %v3382 = vadd.f32 %v3344, %v3359
  %v3383 = vadd.f32 %v3345, %v3359
  %v3384 = vadd.f32 %v3346, %v3359
  %v3385 = vadd.f32 %v3347, %v3359
  %v3386 = vadd.f32 %v3348, %v3359
  %v3387 = vadd.f32 %v3349, %v3359
  %v3388 = vadd.f32 %v3350, %v3359
  %v3389 = vadd.f32 %v3351, %v3359
  %v3390 = vadd.f32 %v3352, %v3359
  %v3391 = vadd.f32 %v3353, %v3359
  %v3392 = vadd.f32 %v3354, %v3359
  %v3393 = vld [vmem:[%s16] sm:$0x1]
  %v3394 = vld [vmem:[%s17] sm:$0x1]
  %3395 = vadd.xlane.f32.xlu0 %v2899
  %v3396 = vpop.xlane.xlu0 %3395
  %3397 = vadd.xlane.f32.xlu0 %v2900
  %v3398 = vpop.xlane.xlu0 %3397
  %3399 = vadd.xlane.f32.xlu0 %v2901
  %v3400 = vpop.xlane.xlu0 %3399
  %3401 = vadd.xlane.f32.xlu0 %v2902
  %v3402 = vpop.xlane.xlu0 %3401
  %3403 = vadd.xlane.f32.xlu0 %v2903
  %v3404 = vpop.xlane.xlu0 %3403
  %3405 = vadd.xlane.f32.xlu0 %v2904
  %v3406 = vpop.xlane.xlu0 %3405
  %3407 = vadd.xlane.f32.xlu0 %v2905
  %v3408 = vpop.xlane.xlu0 %3407
  %3409 = vadd.xlane.f32.xlu0 %v2906
  %v3410 = vpop.xlane.xlu0 %3409
  %3411 = vadd.xlane.f32.xlu0 %v2907
  %v3412 = vpop.xlane.xlu0 %3411
  %3413 = vadd.xlane.f32.xlu0 %v2908
  %v3414 = vpop.xlane.xlu0 %3413
  %3415 = vadd.xlane.f32.xlu0 %v2909
  %v3416 = vpop.xlane.xlu0 %3415
  %3417 = vadd.xlane.f32.xlu0 %v2910
  %v3418 = vpop.xlane.xlu0 %3417
  %3419 = vadd.xlane.f32.xlu0 %v2911
  %v3420 = vpop.xlane.xlu0 %3419
  %3421 = vadd.xlane.f32.xlu0 %v2912
  %v3422 = vpop.xlane.xlu0 %3421
  %3423 = vadd.xlane.f32.xlu0 %v2913
  %v3424 = vpop.xlane.xlu0 %3423
  %3425 = vadd.xlane.f32.xlu0 %v2914
  %v3426 = vpop.xlane.xlu0 %3425
  %3427 = vadd.xlane.f32.xlu0 %v2915
  %v3428 = vpop.xlane.xlu0 %3427
  %3429 = vadd.xlane.f32.xlu0 %v2916
  %v3430 = vpop.xlane.xlu0 %3429
  %3431 = vadd.xlane.f32.xlu0 %v2917
  %v3432 = vpop.xlane.xlu0 %3431
  %3433 = vadd.xlane.f32.xlu0 %v2918
  %v3434 = vpop.xlane.xlu0 %3433
  %3435 = vadd.xlane.f32.xlu0 %v2919
  %v3436 = vpop.xlane.xlu0 %3435
  %3437 = vadd.xlane.f32.xlu0 %v2920
  %v3438 = vpop.xlane.xlu0 %3437
  %3439 = vadd.xlane.f32.xlu0 %v2921
  %v3440 = vpop.xlane.xlu0 %3439
  %3441 = vadd.xlane.f32.xlu0 %v2922
  %v3442 = vpop.xlane.xlu0 %3441
  %3443 = vadd.xlane.f32.xlu0 %v2923
  %v3444 = vpop.xlane.xlu0 %3443
  %3445 = vadd.xlane.f32.xlu0 %v2924
  %v3446 = vpop.xlane.xlu0 %3445
  %3447 = vadd.xlane.f32.xlu0 %v2925
  %v3448 = vpop.xlane.xlu0 %3447
  %3449 = vadd.xlane.f32.xlu0 %v2926
  %v3450 = vpop.xlane.xlu0 %3449
  %3451 = vadd.xlane.f32.xlu0 %v2927
  %v3452 = vpop.xlane.xlu0 %3451
  %3453 = vadd.xlane.f32.xlu0 %v2928
  %v3454 = vpop.xlane.xlu0 %3453
  %3455 = vadd.xlane.f32.xlu0 %v2929
  %v3456 = vpop.xlane.xlu0 %3455
  %3457 = vadd.xlane.f32.xlu0 %v2930
  %v3458 = vpop.xlane.xlu0 %3457
  %v3459 = vmul.f32 %v3396, 0.03125
  %v3460 = vmul.f32 %v3398, 0.03125
  %v3461 = vmul.f32 %v3400, 0.03125
  %v3462 = vmul.f32 %v3402, 0.03125
  %v3463 = vmul.f32 %v3404, 0.03125
  %v3464 = vmul.f32 %v3406, 0.03125
  %v3465 = vmul.f32 %v3408, 0.03125
  %v3466 = vmul.f32 %v3410, 0.03125
  %v3467 = vmul.f32 %v3412, 0.03125
  %v3468 = vmul.f32 %v3414, 0.03125
  %v3469 = vmul.f32 %v3416, 0.03125
  %v3470 = vmul.f32 %v3418, 0.03125
  %v3471 = vmul.f32 %v3420, 0.03125
  %v3472 = vmul.f32 %v3422, 0.03125
  %v3473 = vmul.f32 %v3424, 0.03125
  %v3474 = vmul.f32 %v3426, 0.03125
  %v3475 = vmul.f32 %v3428, 0.03125
  %v3476 = vmul.f32 %v3430, 0.03125
  %v3477 = vmul.f32 %v3432, 0.03125
  %v3478 = vmul.f32 %v3434, 0.03125
  %v3479 = vmul.f32 %v3436, 0.03125
  %v3480 = vmul.f32 %v3438, 0.03125
  %v3481 = vmul.f32 %v3440, 0.03125
  %v3482 = vmul.f32 %v3442, 0.03125
  %v3483 = vmul.f32 %v3444, 0.03125
  %v3484 = vmul.f32 %v3446, 0.03125
  %v3485 = vmul.f32 %v3448, 0.03125
  %v3486 = vmul.f32 %v3450, 0.03125
  %v3487 = vmul.f32 %v3452, 0.03125
  %v3488 = vmul.f32 %v3454, 0.03125
  %v3489 = vmul.f32 %v3456, 0.03125
  %v3490 = vmul.f32 %v3458, 0.03125
  %v3491 = vsub.f32 %v2899, %v3459
  %v3492 = vsub.f32 %v2900, %v3460
  %v3493 = vsub.f32 %v2901, %v3461
  %v3494 = vsub.f32 %v2902, %v3462
  %v3495 = vsub.f32 %v2903, %v3463
  %v3496 = vsub.f32 %v2904, %v3464
  %v3497 = vsub.f32 %v2905, %v3465
  %v3498 = vsub.f32 %v2906, %v3466
  %v3499 = vsub.f32 %v2907, %v3467
  %v3500 = vsub.f32 %v2908, %v3468
  %v3501 = vsub.f32 %v2909, %v3469
  %v3502 = vsub.f32 %v2910, %v3470
  %v3503 = vsub.f32 %v2911, %v3471
  %v3504 = vsub.f32 %v2912, %v3472
  %v3505 = vsub.f32 %v2913, %v3473
  %v3506 = vsub.f32 %v2914, %v3474
  %v3507 = vsub.f32 %v2915, %v3475
  %v3508 = vsub.f32 %v2916, %v3476
  %v3509 = vsub.f32 %v2917, %v3477
  %v3510 = vsub.f32 %v2918, %v3478
  %v3511 = vsub.f32 %v2919, %v3479
  %v3512 = vsub.f32 %v2920, %v3480
  %v3513 = vsub.f32 %v2921, %v3481
  %v3514 = vsub.f32 %v2922, %v3482
  %v3515 = vsub.f32 %v2923, %v3483
  %v3516 = vsub.f32 %v2924, %v3484
  %v3517 = vsub.f32 %v2925, %v3485
  %v3518 = vsub.f32 %v2926, %v3486
  %v3519 = vsub.f32 %v2927, %v3487
  %v3520 = vsub.f32 %v2928, %v3488
  %v3521 = vsub.f32 %v2929, %v3489
  %v3522 = vsub.f32 %v2930, %v3490
  %v3523 = vsel %vm1223, %v3491, 0.0
  %v3524 = vsel %vm1223, %v3492, 0.0
  %v3525 = vsel %vm1223, %v3493, 0.0
  %v3526 = vsel %vm1223, %v3494, 0.0
  %v3527 = vsel %vm1223, %v3495, 0.0
  %v3528 = vsel %vm1223, %v3496, 0.0
  %v3529 = vsel %vm1223, %v3497, 0.0
  %v3530 = vsel %vm1223, %v3498, 0.0
  %v3531 = vsel %vm1223, %v3499, 0.0
  %v3532 = vsel %vm1223, %v3500, 0.0
  %v3533 = vsel %vm1223, %v3501, 0.0
  %v3534 = vsel %vm1223, %v3502, 0.0
  %v3535 = vsel %vm1223, %v3503, 0.0
  %v3536 = vsel %vm1223, %v3504, 0.0
  %v3537 = vsel %vm1223, %v3505, 0.0
  %v3538 = vsel %vm1223, %v3506, 0.0
  %v3539 = vsel %vm1223, %v3507, 0.0
  %v3540 = vsel %vm1223, %v3508, 0.0
  %v3541 = vsel %vm1223, %v3509, 0.0
  %v3542 = vsel %vm1223, %v3510, 0.0
  %v3543 = vsel %vm1223, %v3511, 0.0
  %v3544 = vsel %vm1223, %v3512, 0.0
  %v3545 = vsel %vm1223, %v3513, 0.0
  %v3546 = vsel %vm1223, %v3514, 0.0
  %v3547 = vsel %vm1223, %v3515, 0.0
  %v3548 = vsel %vm1223, %v3516, 0.0
  %v3549 = vsel %vm1223, %v3517, 0.0
  %v3550 = vsel %vm1223, %v3518, 0.0
  %v3551 = vsel %vm1223, %v3519, 0.0
  %v3552 = vsel %vm1223, %v3520, 0.0
  %v3553 = vsel %vm1223, %v3521, 0.0
  %v3554 = vsel %vm1223, %v3522, 0.0
  %v3555 = vmul.f32 %v3523, %v3523
  %v3556 = vmul.f32 %v3524, %v3524
  %v3557 = vmul.f32 %v3525, %v3525
  %v3558 = vmul.f32 %v3526, %v3526
  %v3559 = vmul.f32 %v3527, %v3527
  %v3560 = vmul.f32 %v3528, %v3528
  %v3561 = vmul.f32 %v3529, %v3529
  %v3562 = vmul.f32 %v3530, %v3530
  %v3563 = vmul.f32 %v3531, %v3531
  %v3564 = vmul.f32 %v3532, %v3532
  %v3565 = vmul.f32 %v3533, %v3533
  %v3566 = vmul.f32 %v3534, %v3534
  %v3567 = vmul.f32 %v3535, %v3535
  %v3568 = vmul.f32 %v3536, %v3536
  %v3569 = vmul.f32 %v3537, %v3537
  %v3570 = vmul.f32 %v3538, %v3538
  %v3571 = vmul.f32 %v3539, %v3539
  %v3572 = vmul.f32 %v3540, %v3540
  %v3573 = vmul.f32 %v3541, %v3541
  %v3574 = vmul.f32 %v3542, %v3542
  %v3575 = vmul.f32 %v3543, %v3543
  %v3576 = vmul.f32 %v3544, %v3544
  %v3577 = vmul.f32 %v3545, %v3545
  %v3578 = vmul.f32 %v3546, %v3546
  %v3579 = vmul.f32 %v3547, %v3547
  %v3580 = vmul.f32 %v3548, %v3548
  %v3581 = vmul.f32 %v3549, %v3549
  %v3582 = vmul.f32 %v3550, %v3550
  %v3583 = vmul.f32 %v3551, %v3551
  %v3584 = vmul.f32 %v3552, %v3552
  %v3585 = vmul.f32 %v3553, %v3553
  %v3586 = vmul.f32 %v3554, %v3554
  %3587 = vadd.xlane.f32.xlu0 %v3555
  %v3588 = vpop.xlane.xlu0 %3587
  %3589 = vadd.xlane.f32.xlu0 %v3556
  %v3590 = vpop.xlane.xlu0 %3589
  %3591 = vadd.xlane.f32.xlu0 %v3557
  %v3592 = vpop.xlane.xlu0 %3591
  %3593 = vadd.xlane.f32.xlu0 %v3558
  %v3594 = vpop.xlane.xlu0 %3593
  %3595 = vadd.xlane.f32.xlu0 %v3559
  %v3596 = vpop.xlane.xlu0 %3595
  %3597 = vadd.xlane.f32.xlu0 %v3560
  %v3598 = vpop.xlane.xlu0 %3597
  %3599 = vadd.xlane.f32.xlu0 %v3561
  %v3600 = vpop.xlane.xlu0 %3599
  %3601 = vadd.xlane.f32.xlu0 %v3562
  %v3602 = vpop.xlane.xlu0 %3601
  %3603 = vadd.xlane.f32.xlu0 %v3563
  %v3604 = vpop.xlane.xlu0 %3603
  %3605 = vadd.xlane.f32.xlu0 %v3564
  %v3606 = vpop.xlane.xlu0 %3605
  %3607 = vadd.xlane.f32.xlu0 %v3565
  %v3608 = vpop.xlane.xlu0 %3607
  %3609 = vadd.xlane.f32.xlu0 %v3566
  %v3610 = vpop.xlane.xlu0 %3609
  %3611 = vadd.xlane.f32.xlu0 %v3567
  %v3612 = vpop.xlane.xlu0 %3611
  %3613 = vadd.xlane.f32.xlu0 %v3568
  %v3614 = vpop.xlane.xlu0 %3613
  %3615 = vadd.xlane.f32.xlu0 %v3569
  %v3616 = vpop.xlane.xlu0 %3615
  %3617 = vadd.xlane.f32.xlu0 %v3570
  %v3618 = vpop.xlane.xlu0 %3617
  %3619 = vadd.xlane.f32.xlu0 %v3571
  %v3620 = vpop.xlane.xlu0 %3619
  %3621 = vadd.xlane.f32.xlu0 %v3572
  %v3622 = vpop.xlane.xlu0 %3621
  %3623 = vadd.xlane.f32.xlu0 %v3573
  %v3624 = vpop.xlane.xlu0 %3623
  %3625 = vadd.xlane.f32.xlu0 %v3574
  %v3626 = vpop.xlane.xlu0 %3625
  %3627 = vadd.xlane.f32.xlu0 %v3575
  %v3628 = vpop.xlane.xlu0 %3627
  %3629 = vadd.xlane.f32.xlu0 %v3576
  %v3630 = vpop.xlane.xlu0 %3629
  %3631 = vadd.xlane.f32.xlu0 %v3577
  %v3632 = vpop.xlane.xlu0 %3631
  %3633 = vadd.xlane.f32.xlu0 %v3578
  %v3634 = vpop.xlane.xlu0 %3633
  %3635 = vadd.xlane.f32.xlu0 %v3579
  %v3636 = vpop.xlane.xlu0 %3635
  %3637 = vadd.xlane.f32.xlu0 %v3580
  %v3638 = vpop.xlane.xlu0 %3637
  %3639 = vadd.xlane.f32.xlu0 %v3581
  %v3640 = vpop.xlane.xlu0 %3639
  %3641 = vadd.xlane.f32.xlu0 %v3582
  %v3642 = vpop.xlane.xlu0 %3641
  %3643 = vadd.xlane.f32.xlu0 %v3583
  %v3644 = vpop.xlane.xlu0 %3643
  %3645 = vadd.xlane.f32.xlu0 %v3584
  %v3646 = vpop.xlane.xlu0 %3645
  %3647 = vadd.xlane.f32.xlu0 %v3585
  %v3648 = vpop.xlane.xlu0 %3647
  %3649 = vadd.xlane.f32.xlu0 %v3586
  %v3650 = vpop.xlane.xlu0 %3649
  %v3651 = vmul.f32 %v3588, 0.03125
  %v3652 = vmul.f32 %v3590, 0.03125
  %v3653 = vmul.f32 %v3592, 0.03125
  %v3654 = vmul.f32 %v3594, 0.03125
  %v3655 = vmul.f32 %v3596, 0.03125
  %v3656 = vmul.f32 %v3598, 0.03125
  %v3657 = vmul.f32 %v3600, 0.03125
  %v3658 = vmul.f32 %v3602, 0.03125
  %v3659 = vmul.f32 %v3604, 0.03125
  %v3660 = vmul.f32 %v3606, 0.03125
  %v3661 = vmul.f32 %v3608, 0.03125
  %v3662 = vmul.f32 %v3610, 0.03125
  %v3663 = vmul.f32 %v3612, 0.03125
  %v3664 = vmul.f32 %v3614, 0.03125
  %v3665 = vmul.f32 %v3616, 0.03125
  %v3666 = vmul.f32 %v3618, 0.03125
  %v3667 = vmul.f32 %v3620, 0.03125
  %v3668 = vmul.f32 %v3622, 0.03125
  %v3669 = vmul.f32 %v3624, 0.03125
  %v3670 = vmul.f32 %v3626, 0.03125
  %v3671 = vmul.f32 %v3628, 0.03125
  %v3672 = vmul.f32 %v3630, 0.03125
  %v3673 = vmul.f32 %v3632, 0.03125
  %v3674 = vmul.f32 %v3634, 0.03125
  %v3675 = vmul.f32 %v3636, 0.03125
  %v3676 = vmul.f32 %v3638, 0.03125
  %v3677 = vmul.f32 %v3640, 0.03125
  %v3678 = vmul.f32 %v3642, 0.03125
  %v3679 = vmul.f32 %v3644, 0.03125
  %v3680 = vmul.f32 %v3646, 0.03125
  %v3681 = vmul.f32 %v3648, 0.03125
  %v3682 = vmul.f32 %v3650, 0.03125
  %v3683 = vadd.f32 %v3651, 1e-09
  %v3684 = vadd.f32 %v3652, 1e-09
  %v3685 = vadd.f32 %v3653, 1e-09
  %v3686 = vadd.f32 %v3654, 1e-09
  %v3687 = vadd.f32 %v3655, 1e-09
  %v3688 = vadd.f32 %v3656, 1e-09
  %v3689 = vadd.f32 %v3657, 1e-09
  %v3690 = vadd.f32 %v3658, 1e-09
  %v3691 = vadd.f32 %v3659, 1e-09
  %v3692 = vadd.f32 %v3660, 1e-09
  %v3693 = vadd.f32 %v3661, 1e-09
  %v3694 = vadd.f32 %v3662, 1e-09
  %v3695 = vadd.f32 %v3663, 1e-09
  %v3696 = vadd.f32 %v3664, 1e-09
  %v3697 = vadd.f32 %v3665, 1e-09
  %v3698 = vadd.f32 %v3666, 1e-09
  %v3699 = vadd.f32 %v3667, 1e-09
  %v3700 = vadd.f32 %v3668, 1e-09
  %v3701 = vadd.f32 %v3669, 1e-09
  %v3702 = vadd.f32 %v3670, 1e-09
  %v3703 = vadd.f32 %v3671, 1e-09
  %v3704 = vadd.f32 %v3672, 1e-09
  %v3705 = vadd.f32 %v3673, 1e-09
  %v3706 = vadd.f32 %v3674, 1e-09
  %v3707 = vadd.f32 %v3675, 1e-09
  %v3708 = vadd.f32 %v3676, 1e-09
  %v3709 = vadd.f32 %v3677, 1e-09
  %v3710 = vadd.f32 %v3678, 1e-09
  %v3711 = vadd.f32 %v3679, 1e-09
  %v3712 = vadd.f32 %v3680, 1e-09
  %v3713 = vadd.f32 %v3681, 1e-09
  %v3714 = vadd.f32 %v3682, 1e-09
  %v3716 = vlaneseq
  %v3717 = vshrl.u32 %v3716, 7
  %v3718 = vsub.s32 0, %v3717
  %v3719 = vrot.slane %v3393, %v3718
  %v3721 = vmul.f32 %v3491, %v3719
  %v3722 = vmul.f32 %v3492, %v3719
  %v3723 = vmul.f32 %v3493, %v3719
  %v3724 = vmul.f32 %v3494, %v3719
  %v3725 = vmul.f32 %v3495, %v3719
  %v3726 = vmul.f32 %v3496, %v3719
  %v3727 = vmul.f32 %v3497, %v3719
  %v3728 = vmul.f32 %v3498, %v3719
  %v3729 = vmul.f32 %v3499, %v3719
  %v3730 = vmul.f32 %v3500, %v3719
  %v3731 = vmul.f32 %v3501, %v3719
  %v3732 = vmul.f32 %v3502, %v3719
  %v3733 = vmul.f32 %v3503, %v3719
  %v3734 = vmul.f32 %v3504, %v3719
  %v3735 = vmul.f32 %v3505, %v3719
  %v3736 = vmul.f32 %v3506, %v3719
  %v3737 = vmul.f32 %v3507, %v3719
  %v3738 = vmul.f32 %v3508, %v3719
  %v3739 = vmul.f32 %v3509, %v3719
  %v3740 = vmul.f32 %v3510, %v3719
  %v3741 = vmul.f32 %v3511, %v3719
  %v3742 = vmul.f32 %v3512, %v3719
  %v3743 = vmul.f32 %v3513, %v3719
  %v3744 = vmul.f32 %v3514, %v3719
  %v3745 = vmul.f32 %v3515, %v3719
  %v3746 = vmul.f32 %v3516, %v3719
  %v3747 = vmul.f32 %v3517, %v3719
  %v3748 = vmul.f32 %v3518, %v3719
  %v3749 = vmul.f32 %v3519, %v3719
  %v3750 = vmul.f32 %v3520, %v3719
  %v3751 = vmul.f32 %v3521, %v3719
  %v3752 = vmul.f32 %v3522, %v3719
  %v3753 = vrsqrt.pop %v3683
  %v3754 = vrsqrt.pop %v3684
  %v3755 = vrsqrt.pop %v3685
  %v3756 = vrsqrt.pop %v3686
  %v3757 = vrsqrt.pop %v3687
  %v3758 = vrsqrt.pop %v3688
  %v3759 = vrsqrt.pop %v3689
  %v3760 = vrsqrt.pop %v3690
  %v3761 = vrsqrt.pop %v3691
  %v3762 = vrsqrt.pop %v3692
  %v3763 = vrsqrt.pop %v3693
  %v3764 = vrsqrt.pop %v3694
  %v3765 = vrsqrt.pop %v3695
  %v3766 = vrsqrt.pop %v3696
  %v3767 = vrsqrt.pop %v3697
  %v3768 = vrsqrt.pop %v3698
  %v3769 = vrsqrt.pop %v3699
  %v3770 = vrsqrt.pop %v3700
  %v3771 = vrsqrt.pop %v3701
  %v3772 = vrsqrt.pop %v3702
  %v3773 = vrsqrt.pop %v3703
  %v3774 = vrsqrt.pop %v3704
  %v3775 = vrsqrt.pop %v3705
  %v3776 = vrsqrt.pop %v3706
  %v3777 = vrsqrt.pop %v3707
  %v3778 = vrsqrt.pop %v3708
  %v3779 = vrsqrt.pop %v3709
  %v3780 = vrsqrt.pop %v3710
  %v3781 = vrsqrt.pop %v3711
  %v3782 = vrsqrt.pop %v3712
  %v3783 = vrsqrt.pop %v3713
  %v3784 = vrsqrt.pop %v3714
  %v3785 = vmul.f32 %v3721, %v3753
  %v3786 = vmul.f32 %v3722, %v3754
  %v3787 = vmul.f32 %v3723, %v3755
  %v3788 = vmul.f32 %v3724, %v3756
  %v3789 = vmul.f32 %v3725, %v3757
  %v3790 = vmul.f32 %v3726, %v3758
  %v3791 = vmul.f32 %v3727, %v3759
  %v3792 = vmul.f32 %v3728, %v3760
  %v3793 = vmul.f32 %v3729, %v3761
  %v3794 = vmul.f32 %v3730, %v3762
  %v3795 = vmul.f32 %v3731, %v3763
  %v3796 = vmul.f32 %v3732, %v3764
  %v3797 = vmul.f32 %v3733, %v3765
  %v3798 = vmul.f32 %v3734, %v3766
  %v3799 = vmul.f32 %v3735, %v3767
  %v3800 = vmul.f32 %v3736, %v3768
  %v3801 = vmul.f32 %v3737, %v3769
  %v3802 = vmul.f32 %v3738, %v3770
  %v3803 = vmul.f32 %v3739, %v3771
  %v3804 = vmul.f32 %v3740, %v3772
  %v3805 = vmul.f32 %v3741, %v3773
  %v3806 = vmul.f32 %v3742, %v3774
  %v3807 = vmul.f32 %v3743, %v3775
  %v3808 = vmul.f32 %v3744, %v3776
  %v3809 = vmul.f32 %v3745, %v3777
  %v3810 = vmul.f32 %v3746, %v3778
  %v3811 = vmul.f32 %v3747, %v3779
  %v3812 = vmul.f32 %v3748, %v3780
  %v3813 = vmul.f32 %v3749, %v3781
  %v3814 = vmul.f32 %v3750, %v3782
  %v3815 = vmul.f32 %v3751, %v3783
  %v3816 = vmul.f32 %v3752, %v3784
  %v3818 = vlaneseq
  %v3819 = vshrl.u32 %v3818, 7
  %v3820 = vsub.s32 0, %v3819
  %v3821 = vrot.slane %v3394, %v3820
  %v3823 = vadd.f32 %v3785, %v3821
  %v3824 = vadd.f32 %v3786, %v3821
  %v3825 = vadd.f32 %v3787, %v3821
  %v3826 = vadd.f32 %v3788, %v3821
  %v3827 = vadd.f32 %v3789, %v3821
  %v3828 = vadd.f32 %v3790, %v3821
  %v3829 = vadd.f32 %v3791, %v3821
  %v3830 = vadd.f32 %v3792, %v3821
  %v3831 = vadd.f32 %v3793, %v3821
  %v3832 = vadd.f32 %v3794, %v3821
  %v3833 = vadd.f32 %v3795, %v3821
  %v3834 = vadd.f32 %v3796, %v3821
  %v3835 = vadd.f32 %v3797, %v3821
  %v3836 = vadd.f32 %v3798, %v3821
  %v3837 = vadd.f32 %v3799, %v3821
  %v3838 = vadd.f32 %v3800, %v3821
  %v3839 = vadd.f32 %v3801, %v3821
  %v3840 = vadd.f32 %v3802, %v3821
  %v3841 = vadd.f32 %v3803, %v3821
  %v3842 = vadd.f32 %v3804, %v3821
  %v3843 = vadd.f32 %v3805, %v3821
  %v3844 = vadd.f32 %v3806, %v3821
  %v3845 = vadd.f32 %v3807, %v3821
  %v3846 = vadd.f32 %v3808, %v3821
  %v3847 = vadd.f32 %v3809, %v3821
  %v3848 = vadd.f32 %v3810, %v3821
  %v3849 = vadd.f32 %v3811, %v3821
  %v3850 = vadd.f32 %v3812, %v3821
  %v3851 = vadd.f32 %v3813, %v3821
  %v3852 = vadd.f32 %v3814, %v3821
  %v3853 = vadd.f32 %v3815, %v3821
  %v3854 = vadd.f32 %v3816, %v3821
  %v3855 = vld [vmem:[%s18] sm:$0xf]
  %v3856 = vld [vmem:[%s18 + $0x4] sm:$0xf]
  %v3857 = vld [vmem:[%s18 + $0x8] sm:$0xf]
  %v3858 = vld [vmem:[%s18 + $0xc] sm:$0xf]
  %v3859 = vld [vmem:[%s18 + $0x10] sm:$0xf]
  %v3860 = vld [vmem:[%s18 + $0x14] sm:$0xf]
  %v3861 = vld [vmem:[%s18 + $0x18] sm:$0xf]
  %v3862 = vld [vmem:[%s18 + $0x1c] sm:$0xf]
  %v3863 = vld [vmem:[%s18 + $0x20] sm:$0xf]
  %v3864 = vld [vmem:[%s18 + $0x24] sm:$0xf]
  %v3865 = vld [vmem:[%s18 + $0x28] sm:$0xf]
  %v3866 = vld [vmem:[%s18 + $0x2c] sm:$0xf]
  %v3867 = vld [vmem:[%s18 + $0x30] sm:$0xf]
  %v3868 = vld [vmem:[%s18 + $0x34] sm:$0xf]
  %v3869 = vld [vmem:[%s18 + $0x38] sm:$0xf]
  %v3870 = vld [vmem:[%s18 + $0x3c] sm:$0xf]
  %v3871 = vld [vmem:[%s18 + $0x40] sm:$0xf]
  %v3872 = vld [vmem:[%s18 + $0x44] sm:$0xf]
  %v3873 = vld [vmem:[%s18 + $0x48] sm:$0xf]
  %v3874 = vld [vmem:[%s18 + $0x4c] sm:$0xf]
  %v3875 = vld [vmem:[%s18 + $0x50] sm:$0xf]
  %v3876 = vld [vmem:[%s18 + $0x54] sm:$0xf]
  %v3877 = vld [vmem:[%s18 + $0x58] sm:$0xf]
  %v3878 = vld [vmem:[%s18 + $0x5c] sm:$0xf]
  %v3879 = vld [vmem:[%s18 + $0x60] sm:$0xf]
  %v3880 = vld [vmem:[%s18 + $0x64] sm:$0xf]
  %v3881 = vld [vmem:[%s18 + $0x68] sm:$0xf]
  %v3882 = vld [vmem:[%s18 + $0x6c] sm:$0xf]
  %v3883 = vld [vmem:[%s18 + $0x70] sm:$0xf]
  %v3884 = vld [vmem:[%s18 + $0x74] sm:$0xf]
  %v3885 = vld [vmem:[%s18 + $0x78] sm:$0xf]
  %v3886 = vld [vmem:[%s18 + $0x7c] sm:$0xf]
  %v3887 = vld [vmem:[%s19] sm:$0x1]
  %v3888 = vmul.f32 %v3361, %v3361
  %v3889 = vmul.f32 %v3362, %v3362
  %v3890 = vmul.f32 %v3363, %v3363
  %v3891 = vmul.f32 %v3364, %v3364
  %v3892 = vmul.f32 %v3365, %v3365
  %v3893 = vmul.f32 %v3366, %v3366
  %v3894 = vmul.f32 %v3367, %v3367
  %v3895 = vmul.f32 %v3368, %v3368
  %v3896 = vmul.f32 %v3369, %v3369
  %v3897 = vmul.f32 %v3370, %v3370
  %v3898 = vmul.f32 %v3371, %v3371
  %v3899 = vmul.f32 %v3372, %v3372
  %v3900 = vmul.f32 %v3373, %v3373
  %v3901 = vmul.f32 %v3374, %v3374
  %v3902 = vmul.f32 %v3375, %v3375
  %v3903 = vmul.f32 %v3376, %v3376
  %v3904 = vmul.f32 %v3377, %v3377
  %v3905 = vmul.f32 %v3378, %v3378
  %v3906 = vmul.f32 %v3379, %v3379
  %v3907 = vmul.f32 %v3380, %v3380
  %v3908 = vmul.f32 %v3381, %v3381
  %v3909 = vmul.f32 %v3382, %v3382
  %v3910 = vmul.f32 %v3383, %v3383
  %v3911 = vmul.f32 %v3384, %v3384
  %v3912 = vmul.f32 %v3385, %v3385
  %v3913 = vmul.f32 %v3386, %v3386
  %v3914 = vmul.f32 %v3387, %v3387
  %v3915 = vmul.f32 %v3388, %v3388
  %v3916 = vmul.f32 %v3389, %v3389
  %v3917 = vmul.f32 %v3390, %v3390
  %v3918 = vmul.f32 %v3391, %v3391
  %v3919 = vmul.f32 %v3392, %v3392
  %3920 = vadd.xlane.f32.xlu0 %v3888
  %v3921 = vpop.xlane.xlu0 %3920
  %3922 = vadd.xlane.f32.xlu0 %v3889
  %v3923 = vpop.xlane.xlu0 %3922
  %3924 = vadd.xlane.f32.xlu0 %v3890
  %v3925 = vpop.xlane.xlu0 %3924
  %3926 = vadd.xlane.f32.xlu0 %v3891
  %v3927 = vpop.xlane.xlu0 %3926
  %3928 = vadd.xlane.f32.xlu0 %v3892
  %v3929 = vpop.xlane.xlu0 %3928
  %3930 = vadd.xlane.f32.xlu0 %v3893
  %v3931 = vpop.xlane.xlu0 %3930
  %3932 = vadd.xlane.f32.xlu0 %v3894
  %v3933 = vpop.xlane.xlu0 %3932
  %3934 = vadd.xlane.f32.xlu0 %v3895
  %v3935 = vpop.xlane.xlu0 %3934
  %3936 = vadd.xlane.f32.xlu0 %v3896
  %v3937 = vpop.xlane.xlu0 %3936
  %3938 = vadd.xlane.f32.xlu0 %v3897
  %v3939 = vpop.xlane.xlu0 %3938
  %3940 = vadd.xlane.f32.xlu0 %v3898
  %v3941 = vpop.xlane.xlu0 %3940
  %3942 = vadd.xlane.f32.xlu0 %v3899
  %v3943 = vpop.xlane.xlu0 %3942
  %3944 = vadd.xlane.f32.xlu0 %v3900
  %v3945 = vpop.xlane.xlu0 %3944
  %3946 = vadd.xlane.f32.xlu0 %v3901
  %v3947 = vpop.xlane.xlu0 %3946
  %3948 = vadd.xlane.f32.xlu0 %v3902
  %v3949 = vpop.xlane.xlu0 %3948
  %3950 = vadd.xlane.f32.xlu0 %v3903
  %v3951 = vpop.xlane.xlu0 %3950
  %3952 = vadd.xlane.f32.xlu0 %v3904
  %v3953 = vpop.xlane.xlu0 %3952
  %3954 = vadd.xlane.f32.xlu0 %v3905
  %v3955 = vpop.xlane.xlu0 %3954
  %3956 = vadd.xlane.f32.xlu0 %v3906
  %v3957 = vpop.xlane.xlu0 %3956
  %3958 = vadd.xlane.f32.xlu0 %v3907
  %v3959 = vpop.xlane.xlu0 %3958
  %3960 = vadd.xlane.f32.xlu0 %v3908
  %v3961 = vpop.xlane.xlu0 %3960
  %3962 = vadd.xlane.f32.xlu0 %v3909
  %v3963 = vpop.xlane.xlu0 %3962
  %3964 = vadd.xlane.f32.xlu0 %v3910
  %v3965 = vpop.xlane.xlu0 %3964
  %3966 = vadd.xlane.f32.xlu0 %v3911
  %v3967 = vpop.xlane.xlu0 %3966
  %3968 = vadd.xlane.f32.xlu0 %v3912
  %v3969 = vpop.xlane.xlu0 %3968
  %3970 = vadd.xlane.f32.xlu0 %v3913
  %v3971 = vpop.xlane.xlu0 %3970
  %3972 = vadd.xlane.f32.xlu0 %v3914
  %v3973 = vpop.xlane.xlu0 %3972
  %3974 = vadd.xlane.f32.xlu0 %v3915
  %v3975 = vpop.xlane.xlu0 %3974
  %3976 = vadd.xlane.f32.xlu0 %v3916
  %v3977 = vpop.xlane.xlu0 %3976
  %3978 = vadd.xlane.f32.xlu0 %v3917
  %v3979 = vpop.xlane.xlu0 %3978
  %3980 = vadd.xlane.f32.xlu0 %v3918
  %v3981 = vpop.xlane.xlu0 %3980
  %3982 = vadd.xlane.f32.xlu0 %v3919
  %v3983 = vpop.xlane.xlu0 %3982
  %v3984 = vmul.f32 %v3823, %v3823
  %v3985 = vmul.f32 %v3824, %v3824
  %v3986 = vmul.f32 %v3825, %v3825
  %v3987 = vmul.f32 %v3826, %v3826
  %v3988 = vmul.f32 %v3827, %v3827
  %v3989 = vmul.f32 %v3828, %v3828
  %v3990 = vmul.f32 %v3829, %v3829
  %v3991 = vmul.f32 %v3830, %v3830
  %v3992 = vmul.f32 %v3831, %v3831
  %v3993 = vmul.f32 %v3832, %v3832
  %v3994 = vmul.f32 %v3833, %v3833
  %v3995 = vmul.f32 %v3834, %v3834
  %v3996 = vmul.f32 %v3835, %v3835
  %v3997 = vmul.f32 %v3836, %v3836
  %v3998 = vmul.f32 %v3837, %v3837
  %v3999 = vmul.f32 %v3838, %v3838
  %v4000 = vmul.f32 %v3839, %v3839
  %v4001 = vmul.f32 %v3840, %v3840
  %v4002 = vmul.f32 %v3841, %v3841
  %v4003 = vmul.f32 %v3842, %v3842
  %v4004 = vmul.f32 %v3843, %v3843
  %v4005 = vmul.f32 %v3844, %v3844
  %v4006 = vmul.f32 %v3845, %v3845
  %v4007 = vmul.f32 %v3846, %v3846
  %v4008 = vmul.f32 %v3847, %v3847
  %v4009 = vmul.f32 %v3848, %v3848
  %v4010 = vmul.f32 %v3849, %v3849
  %v4011 = vmul.f32 %v3850, %v3850
  %v4012 = vmul.f32 %v3851, %v3851
  %v4013 = vmul.f32 %v3852, %v3852
  %v4014 = vmul.f32 %v3853, %v3853
  %v4015 = vmul.f32 %v3854, %v3854
  %4016 = vadd.xlane.f32.xlu0 %v3984
  %v4017 = vpop.xlane.xlu0 %4016
  %4018 = vadd.xlane.f32.xlu0 %v3985
  %v4019 = vpop.xlane.xlu0 %4018
  %4020 = vadd.xlane.f32.xlu0 %v3986
  %v4021 = vpop.xlane.xlu0 %4020
  %4022 = vadd.xlane.f32.xlu0 %v3987
  %v4023 = vpop.xlane.xlu0 %4022
  %4024 = vadd.xlane.f32.xlu0 %v3988
  %v4025 = vpop.xlane.xlu0 %4024
  %4026 = vadd.xlane.f32.xlu0 %v3989
  %v4027 = vpop.xlane.xlu0 %4026
  %4028 = vadd.xlane.f32.xlu0 %v3990
  %v4029 = vpop.xlane.xlu0 %4028
  %4030 = vadd.xlane.f32.xlu0 %v3991
  %v4031 = vpop.xlane.xlu0 %4030
  %4032 = vadd.xlane.f32.xlu0 %v3992
  %v4033 = vpop.xlane.xlu0 %4032
  %4034 = vadd.xlane.f32.xlu0 %v3993
  %v4035 = vpop.xlane.xlu0 %4034
  %4036 = vadd.xlane.f32.xlu0 %v3994
  %v4037 = vpop.xlane.xlu0 %4036
  %4038 = vadd.xlane.f32.xlu0 %v3995
  %v4039 = vpop.xlane.xlu0 %4038
  %4040 = vadd.xlane.f32.xlu0 %v3996
  %v4041 = vpop.xlane.xlu0 %4040
  %4042 = vadd.xlane.f32.xlu0 %v3997
  %v4043 = vpop.xlane.xlu0 %4042
  %4044 = vadd.xlane.f32.xlu0 %v3998
  %v4045 = vpop.xlane.xlu0 %4044
  %4046 = vadd.xlane.f32.xlu0 %v3999
  %v4047 = vpop.xlane.xlu0 %4046
  %4048 = vadd.xlane.f32.xlu0 %v4000
  %v4049 = vpop.xlane.xlu0 %4048
  %4050 = vadd.xlane.f32.xlu0 %v4001
  %v4051 = vpop.xlane.xlu0 %4050
  %4052 = vadd.xlane.f32.xlu0 %v4002
  %v4053 = vpop.xlane.xlu0 %4052
  %4054 = vadd.xlane.f32.xlu0 %v4003
  %v4055 = vpop.xlane.xlu0 %4054
  %4056 = vadd.xlane.f32.xlu0 %v4004
  %v4057 = vpop.xlane.xlu0 %4056
  %4058 = vadd.xlane.f32.xlu0 %v4005
  %v4059 = vpop.xlane.xlu0 %4058
  %4060 = vadd.xlane.f32.xlu0 %v4006
  %v4061 = vpop.xlane.xlu0 %4060
  %4062 = vadd.xlane.f32.xlu0 %v4007
  %v4063 = vpop.xlane.xlu0 %4062
  %4064 = vadd.xlane.f32.xlu0 %v4008
  %v4065 = vpop.xlane.xlu0 %4064
  %4066 = vadd.xlane.f32.xlu0 %v4009
  %v4067 = vpop.xlane.xlu0 %4066
  %4068 = vadd.xlane.f32.xlu0 %v4010
  %v4069 = vpop.xlane.xlu0 %4068
  %4070 = vadd.xlane.f32.xlu0 %v4011
  %v4071 = vpop.xlane.xlu0 %4070
  %4072 = vadd.xlane.f32.xlu0 %v4012
  %v4073 = vpop.xlane.xlu0 %4072
  %4074 = vadd.xlane.f32.xlu0 %v4013
  %v4075 = vpop.xlane.xlu0 %4074
  %4076 = vadd.xlane.f32.xlu0 %v4014
  %v4077 = vpop.xlane.xlu0 %4076
  %4078 = vadd.xlane.f32.xlu0 %v4015
  %v4079 = vpop.xlane.xlu0 %4078
  %v4080 = vadd.f32 %v3921, %v4017
  %v4081 = vadd.f32 %v3923, %v4019
  %v4082 = vadd.f32 %v3925, %v4021
  %v4083 = vadd.f32 %v3927, %v4023
  %v4084 = vadd.f32 %v3929, %v4025
  %v4085 = vadd.f32 %v3931, %v4027
  %v4086 = vadd.f32 %v3933, %v4029
  %v4087 = vadd.f32 %v3935, %v4031
  %v4088 = vadd.f32 %v3937, %v4033
  %v4089 = vadd.f32 %v3939, %v4035
  %v4090 = vadd.f32 %v3941, %v4037
  %v4091 = vadd.f32 %v3943, %v4039
  %v4092 = vadd.f32 %v3945, %v4041
  %v4093 = vadd.f32 %v3947, %v4043
  %v4094 = vadd.f32 %v3949, %v4045
  %v4095 = vadd.f32 %v3951, %v4047
  %v4096 = vadd.f32 %v3953, %v4049
  %v4097 = vadd.f32 %v3955, %v4051
  %v4098 = vadd.f32 %v3957, %v4053
  %v4099 = vadd.f32 %v3959, %v4055
  %v4100 = vadd.f32 %v3961, %v4057
  %v4101 = vadd.f32 %v3963, %v4059
  %v4102 = vadd.f32 %v3965, %v4061
  %v4103 = vadd.f32 %v3967, %v4063
  %v4104 = vadd.f32 %v3969, %v4065
  %v4105 = vadd.f32 %v3971, %v4067
  %v4106 = vadd.f32 %v3973, %v4069
  %v4107 = vadd.f32 %v3975, %v4071
  %v4108 = vadd.f32 %v3977, %v4073
  %v4109 = vadd.f32 %v3979, %v4075
  %v4110 = vadd.f32 %v3981, %v4077
  %v4111 = vadd.f32 %v3983, %v4079
  %v4112 = vmax.f32 %v4080, 1e-24
  %v4113 = vmax.f32 %v4081, 1e-24
  %v4114 = vmax.f32 %v4082, 1e-24
  %v4115 = vmax.f32 %v4083, 1e-24
  %v4116 = vmax.f32 %v4084, 1e-24
  %v4117 = vmax.f32 %v4085, 1e-24
  %v4118 = vmax.f32 %v4086, 1e-24
  %v4119 = vmax.f32 %v4087, 1e-24
  %v4120 = vmax.f32 %v4088, 1e-24
  %v4121 = vmax.f32 %v4089, 1e-24
  %v4122 = vmax.f32 %v4090, 1e-24
  %v4123 = vmax.f32 %v4091, 1e-24
  %v4124 = vmax.f32 %v4092, 1e-24
  %v4125 = vmax.f32 %v4093, 1e-24
  %v4126 = vmax.f32 %v4094, 1e-24
  %v4127 = vmax.f32 %v4095, 1e-24
  %v4128 = vmax.f32 %v4096, 1e-24
  %v4129 = vmax.f32 %v4097, 1e-24
  %v4130 = vmax.f32 %v4098, 1e-24
  %v4131 = vmax.f32 %v4099, 1e-24
  %v4132 = vmax.f32 %v4100, 1e-24
  %v4133 = vmax.f32 %v4101, 1e-24
  %v4134 = vmax.f32 %v4102, 1e-24
  %v4135 = vmax.f32 %v4103, 1e-24
  %v4136 = vmax.f32 %v4104, 1e-24
  %v4137 = vmax.f32 %v4105, 1e-24
  %v4138 = vmax.f32 %v4106, 1e-24
  %v4139 = vmax.f32 %v4107, 1e-24
  %v4140 = vmax.f32 %v4108, 1e-24
  %v4141 = vmax.f32 %v4109, 1e-24
  %v4142 = vmax.f32 %v4110, 1e-24
  %v4143 = vmax.f32 %v4111, 1e-24
  %v4144 = vrsqrt.pop %v4112
  %v4145 = vrsqrt.pop %v4113
  %v4146 = vrsqrt.pop %v4114
  %v4147 = vrsqrt.pop %v4115
  %v4148 = vrsqrt.pop %v4116
  %v4149 = vrsqrt.pop %v4117
  %v4150 = vrsqrt.pop %v4118
  %v4151 = vrsqrt.pop %v4119
  %v4152 = vrsqrt.pop %v4120
  %v4153 = vrsqrt.pop %v4121
  %v4154 = vrsqrt.pop %v4122
  %v4155 = vrsqrt.pop %v4123
  %v4156 = vrsqrt.pop %v4124
  %v4157 = vrsqrt.pop %v4125
  %v4158 = vrsqrt.pop %v4126
  %v4159 = vrsqrt.pop %v4127
  %v4160 = vrsqrt.pop %v4128
  %v4161 = vrsqrt.pop %v4129
  %v4162 = vrsqrt.pop %v4130
  %v4163 = vrsqrt.pop %v4131
  %v4164 = vrsqrt.pop %v4132
  %v4165 = vrsqrt.pop %v4133
  %v4166 = vrsqrt.pop %v4134
  %v4167 = vrsqrt.pop %v4135
  %v4168 = vrsqrt.pop %v4136
  %v4169 = vrsqrt.pop %v4137
  %v4170 = vrsqrt.pop %v4138
  %v4171 = vrsqrt.pop %v4139
  %v4172 = vrsqrt.pop %v4140
  %v4173 = vrsqrt.pop %v4141
  %v4174 = vrsqrt.pop %v4142
  %v4175 = vrsqrt.pop %v4143
  %v4176 = vmul.f32 %v3361, %v4144
  %v4177 = vmul.f32 %v3362, %v4145
  %v4178 = vmul.f32 %v3363, %v4146
  %v4179 = vmul.f32 %v3364, %v4147
  %v4180 = vmul.f32 %v3365, %v4148
  %v4181 = vmul.f32 %v3366, %v4149
  %v4182 = vmul.f32 %v3367, %v4150
  %v4183 = vmul.f32 %v3368, %v4151
  %v4184 = vmul.f32 %v3369, %v4152
  %v4185 = vmul.f32 %v3370, %v4153
  %v4186 = vmul.f32 %v3371, %v4154
  %v4187 = vmul.f32 %v3372, %v4155
  %v4188 = vmul.f32 %v3373, %v4156
  %v4189 = vmul.f32 %v3374, %v4157
  %v4190 = vmul.f32 %v3375, %v4158
  %v4191 = vmul.f32 %v3376, %v4159
  %v4192 = vmul.f32 %v3377, %v4160
  %v4193 = vmul.f32 %v3378, %v4161
  %v4194 = vmul.f32 %v3379, %v4162
  %v4195 = vmul.f32 %v3380, %v4163
  %v4196 = vmul.f32 %v3381, %v4164
  %v4197 = vmul.f32 %v3382, %v4165
  %v4198 = vmul.f32 %v3383, %v4166
  %v4199 = vmul.f32 %v3384, %v4167
  %v4200 = vmul.f32 %v3385, %v4168
  %v4201 = vmul.f32 %v3386, %v4169
  %v4202 = vmul.f32 %v3387, %v4170
  %v4203 = vmul.f32 %v3388, %v4171
  %v4204 = vmul.f32 %v3389, %v4172
  %v4205 = vmul.f32 %v3390, %v4173
  %v4206 = vmul.f32 %v3391, %v4174
  %v4207 = vmul.f32 %v3392, %v4175
  %v4208 = vpack.c.bf16 %v4177, %v4176
  %v4209 = vpack.c.bf16 %v4179, %v4178
  %v4210 = vpack.c.bf16 %v4181, %v4180
  %v4211 = vpack.c.bf16 %v4183, %v4182
  %v4212 = vpack.c.bf16 %v4185, %v4184
  %v4213 = vpack.c.bf16 %v4187, %v4186
  %v4214 = vpack.c.bf16 %v4189, %v4188
  %v4215 = vpack.c.bf16 %v4191, %v4190
  %v4216 = vpack.c.bf16 %v4193, %v4192
  %v4217 = vpack.c.bf16 %v4195, %v4194
  %v4218 = vpack.c.bf16 %v4197, %v4196
  %v4219 = vpack.c.bf16 %v4199, %v4198
  %v4220 = vpack.c.bf16 %v4201, %v4200
  %v4221 = vpack.c.bf16 %v4203, %v4202
  %v4222 = vpack.c.bf16 %v4205, %v4204
  %v4223 = vpack.c.bf16 %v4207, %v4206
  %v4224 = vmul.f32 %v3823, %v4144
  %v4225 = vmul.f32 %v3824, %v4145
  %v4226 = vmul.f32 %v3825, %v4146
  %v4227 = vmul.f32 %v3826, %v4147
  %v4228 = vmul.f32 %v3827, %v4148
  %v4229 = vmul.f32 %v3828, %v4149
  %v4230 = vmul.f32 %v3829, %v4150
  %v4231 = vmul.f32 %v3830, %v4151
  %v4232 = vmul.f32 %v3831, %v4152
  %v4233 = vmul.f32 %v3832, %v4153
  %v4234 = vmul.f32 %v3833, %v4154
  %v4235 = vmul.f32 %v3834, %v4155
  %v4236 = vmul.f32 %v3835, %v4156
  %v4237 = vmul.f32 %v3836, %v4157
  %v4238 = vmul.f32 %v3837, %v4158
  %v4239 = vmul.f32 %v3838, %v4159
  %v4240 = vmul.f32 %v3839, %v4160
  %v4241 = vmul.f32 %v3840, %v4161
  %v4242 = vmul.f32 %v3841, %v4162
  %v4243 = vmul.f32 %v3842, %v4163
  %v4244 = vmul.f32 %v3843, %v4164
  %v4245 = vmul.f32 %v3844, %v4165
  %v4246 = vmul.f32 %v3845, %v4166
  %v4247 = vmul.f32 %v3846, %v4167
  %v4248 = vmul.f32 %v3847, %v4168
  %v4249 = vmul.f32 %v3848, %v4169
  %v4250 = vmul.f32 %v3849, %v4170
  %v4251 = vmul.f32 %v3850, %v4171
  %v4252 = vmul.f32 %v3851, %v4172
  %v4253 = vmul.f32 %v3852, %v4173
  %v4254 = vmul.f32 %v3853, %v4174
  %v4255 = vmul.f32 %v3854, %v4175
  %v4256 = vpack.c.bf16 %v4225, %v4224
  %v4257 = vpack.c.bf16 %v4227, %v4226
  %v4258 = vpack.c.bf16 %v4229, %v4228
  %v4259 = vpack.c.bf16 %v4231, %v4230
  %v4260 = vpack.c.bf16 %v4233, %v4232
  %v4261 = vpack.c.bf16 %v4235, %v4234
  %v4262 = vpack.c.bf16 %v4237, %v4236
  %v4263 = vpack.c.bf16 %v4239, %v4238
  %v4264 = vpack.c.bf16 %v4241, %v4240
  %v4265 = vpack.c.bf16 %v4243, %v4242
  %v4266 = vpack.c.bf16 %v4245, %v4244
  %v4267 = vpack.c.bf16 %v4247, %v4246
  %v4268 = vpack.c.bf16 %v4249, %v4248
  %v4269 = vpack.c.bf16 %v4251, %v4250
  %v4270 = vpack.c.bf16 %v4253, %v4252
  %v4271 = vpack.c.bf16 %v4255, %v4254
  %v4288 = vunpack.c.l.b16 %v3871
  %v4289 = vunpack.c.l.b16 %v3872
  %v4290 = vunpack.c.l.b16 %v3873
  %v4291 = vunpack.c.l.b16 %v3874
  %v4292 = vunpack.c.l.b16 %v3875
  %v4293 = vunpack.c.l.b16 %v3876
  %v4294 = vunpack.c.l.b16 %v3877
  %v4295 = vunpack.c.l.b16 %v3878
  %v4296 = vunpack.c.l.b16 %v3879
  %v4297 = vunpack.c.l.b16 %v3880
  %v4298 = vunpack.c.l.b16 %v3881
  %v4299 = vunpack.c.l.b16 %v3882
  %v4300 = vunpack.c.l.b16 %v3883
  %v4301 = vunpack.c.l.b16 %v3884
  %v4302 = vunpack.c.l.b16 %v3885
  %v4303 = vunpack.c.l.b16 %v3886
  %v4304 = vpack.c.b16 %v4289, %v4288
  %v4305 = vpack.c.b16 %v4291, %v4290
  %v4306 = vpack.c.b16 %v4293, %v4292
  %v4307 = vpack.c.b16 %v4295, %v4294
  %v4308 = vpack.c.b16 %v4297, %v4296
  %v4309 = vpack.c.b16 %v4299, %v4298
  %v4310 = vpack.c.b16 %v4301, %v4300
  %v4311 = vpack.c.b16 %v4303, %v4302
  %4320 = vmatprep.subr.bf16.mxu0 0
  %4321 = vmatpush1.bf16.msra.mxu0 %v4304
  %4322 = vmatprep.subr.bf16.mxu0 0
  %4323 = vmatpush1.bf16.msra.mxu0 %v4305
  %4324 = vmatprep.subr.bf16.mxu0 0
  %4325 = vmatpush1.bf16.msra.mxu0 %v4306
  %4326 = vmatprep.subr.bf16.mxu0 0
  %4327 = vmatpush1.bf16.msra.mxu0 %v4307
  %4328 = vmatprep.subr.bf16.mxu0 0
  %4329 = vmatpush1.bf16.msra.mxu0 %v4308
  %4330 = vmatprep.subr.bf16.mxu0 0
  %4331 = vmatpush1.bf16.msra.mxu0 %v4309
  %4332 = vmatprep.subr.bf16.mxu0 0
  %4333 = vmatpush1.bf16.msra.mxu0 %v4310
  %4334 = vmatprep.subr.bf16.mxu0 0
  %4335 = vmatpush1.bf16.msra.mxu0 %v4311
  %4336 = vmatprep.subr.bf16.mxu0 0
  %4337 = vmatpush1.bf16.msra.mxu0 0
  %4338 = vmatprep.subr.bf16.mxu0 0
  %4339 = vmatpush1.bf16.msra.mxu0 0
  %4340 = vmatprep.subr.bf16.mxu0 0
  %4341 = vmatpush1.bf16.msra.mxu0 0
  %4342 = vmatprep.subr.bf16.mxu0 0
  %4343 = vmatpush1.bf16.msra.mxu0 0
  %4344 = vmatprep.subr.bf16.mxu0 0
  %4345 = vmatpush1.bf16.msra.mxu0 0
  %4346 = vmatprep.subr.bf16.mxu0 0
  %4347 = vmatpush1.bf16.msra.mxu0 0
  %4348 = vmatprep.subr.bf16.mxu0 0
  %4349 = vmatpush1.bf16.msra.mxu0 0
  %4350 = vmatprep.subr.bf16.mxu0 0
  %4351 = vmatpush1.bf16.msra.mxu0 0
  %4352 = vmatprep.mubr.bf16.mxu0 0
  %4353 = vmatmul.mubr.bf16.gmra.mrb[0].mxu0 %v4256
  %v4354 = vpop.f32.mrb[0].mxu0
  %v4355 = vadd.f32 0.0, %v4354
  %v4356 = vpop.f32.mrb[0].mxu0
  %v4357 = vpop.f32.mrb[0].mxu0
  %v4358 = vadd.f32 0.0, %v4357
  %v4359 = vpop.f32.mrb[0].mxu0
  %4360 = vmatprep.mubr.bf16.mxu0 0
  %4361 = vmatmul.mubr.bf16.gmra.mrb[0].mxu0 %v4257
  %v4362 = vpop.f32.mrb[0].mxu0
  %v4363 = vadd.f32 0.0, %v4362
  %v4364 = vpop.f32.mrb[0].mxu0
  %v4365 = vpop.f32.mrb[0].mxu0
  %v4366 = vadd.f32 0.0, %v4365
  %v4367 = vpop.f32.mrb[0].mxu0
  %4368 = vmatprep.mubr.bf16.mxu0 0
  %4369 = vmatmul.mubr.bf16.gmra.mrb[0].mxu0 %v4258
  %v4370 = vpop.f32.mrb[0].mxu0
  %v4371 = vadd.f32 0.0, %v4370
  %v4372 = vpop.f32.mrb[0].mxu0
  %v4373 = vpop.f32.mrb[0].mxu0
  %v4374 = vadd.f32 0.0, %v4373
  %v4375 = vpop.f32.mrb[0].mxu0
  %4376 = vmatprep.mubr.bf16.mxu0 0
  %4377 = vmatmul.mubr.bf16.gmra.mrb[0].mxu0 %v4259
  %v4378 = vpop.f32.mrb[0].mxu0
  %v4379 = vadd.f32 0.0, %v4378
  %v4380 = vpop.f32.mrb[0].mxu0
  %v4381 = vpop.f32.mrb[0].mxu0
  %v4382 = vadd.f32 0.0, %v4381
  %v4383 = vpop.f32.mrb[0].mxu0
  %4384 = vmatprep.mubr.bf16.mxu0 0
  %4385 = vmatmul.mubr.bf16.gmra.mrb[0].mxu0 %v4260
  %v4386 = vpop.f32.mrb[0].mxu0
  %v4387 = vadd.f32 0.0, %v4386
  %v4388 = vpop.f32.mrb[0].mxu0
  %v4389 = vpop.f32.mrb[0].mxu0
  %v4390 = vadd.f32 0.0, %v4389
  %v4391 = vpop.f32.mrb[0].mxu0
  %4392 = vmatprep.mubr.bf16.mxu0 0
  %4393 = vmatmul.mubr.bf16.gmra.mrb[0].mxu0 %v4261
  %v4394 = vpop.f32.mrb[0].mxu0
  %v4395 = vadd.f32 0.0, %v4394
  %v4396 = vpop.f32.mrb[0].mxu0
  %v4397 = vpop.f32.mrb[0].mxu0
  %v4398 = vadd.f32 0.0, %v4397
  %v4399 = vpop.f32.mrb[0].mxu0
  %4400 = vmatprep.mubr.bf16.mxu0 0
  %4401 = vmatmul.mubr.bf16.gmra.mrb[0].mxu0 %v4262
  %v4402 = vpop.f32.mrb[0].mxu0
  %v4403 = vadd.f32 0.0, %v4402
  %v4404 = vpop.f32.mrb[0].mxu0
  %v4405 = vpop.f32.mrb[0].mxu0
  %v4406 = vadd.f32 0.0, %v4405
  %v4407 = vpop.f32.mrb[0].mxu0
  %4408 = vmatprep.mubr.bf16.mxu0 0
  %4409 = vmatmul.mubr.bf16.gmra.mrb[0].mxu0 %v4263
  %v4410 = vpop.f32.mrb[0].mxu0
  %v4411 = vadd.f32 0.0, %v4410
  %v4412 = vpop.f32.mrb[0].mxu0
  %v4413 = vpop.f32.mrb[0].mxu0
  %v4414 = vadd.f32 0.0, %v4413
  %v4415 = vpop.f32.mrb[0].mxu0
  %4416 = vmatprep.mubr.bf16.mxu0 0
  %4417 = vmatmul.mubr.bf16.gmra.mrb[0].mxu0 %v4264
  %v4418 = vpop.f32.mrb[0].mxu0
  %v4419 = vadd.f32 0.0, %v4418
  %v4420 = vpop.f32.mrb[0].mxu0
  %v4421 = vpop.f32.mrb[0].mxu0
  %v4422 = vadd.f32 0.0, %v4421
  %v4423 = vpop.f32.mrb[0].mxu0
  %4424 = vmatprep.mubr.bf16.mxu0 0
  %4425 = vmatmul.mubr.bf16.gmra.mrb[0].mxu0 %v4265
  %v4426 = vpop.f32.mrb[0].mxu0
  %v4427 = vadd.f32 0.0, %v4426
  %v4428 = vpop.f32.mrb[0].mxu0
  %v4429 = vpop.f32.mrb[0].mxu0
  %v4430 = vadd.f32 0.0, %v4429
  %v4431 = vpop.f32.mrb[0].mxu0
  %4432 = vmatprep.mubr.bf16.mxu0 0
  %4433 = vmatmul.mubr.bf16.gmra.mrb[0].mxu0 %v4266
  %v4434 = vpop.f32.mrb[0].mxu0
  %v4435 = vadd.f32 0.0, %v4434
  %v4436 = vpop.f32.mrb[0].mxu0
  %v4437 = vpop.f32.mrb[0].mxu0
  %v4438 = vadd.f32 0.0, %v4437
  %v4439 = vpop.f32.mrb[0].mxu0
  %4440 = vmatprep.mubr.bf16.mxu0 0
  %4441 = vmatmul.mubr.bf16.gmra.mrb[0].mxu0 %v4267
  %v4442 = vpop.f32.mrb[0].mxu0
  %v4443 = vadd.f32 0.0, %v4442
  %v4444 = vpop.f32.mrb[0].mxu0
  %v4445 = vpop.f32.mrb[0].mxu0
  %v4446 = vadd.f32 0.0, %v4445
  %v4447 = vpop.f32.mrb[0].mxu0
  %4448 = vmatprep.mubr.bf16.mxu0 0
  %4449 = vmatmul.mubr.bf16.gmra.mrb[0].mxu0 %v4268
  %v4450 = vpop.f32.mrb[0].mxu0
  %v4451 = vadd.f32 0.0, %v4450
  %v4452 = vpop.f32.mrb[0].mxu0
  %v4453 = vpop.f32.mrb[0].mxu0
  %v4454 = vadd.f32 0.0, %v4453
  %v4455 = vpop.f32.mrb[0].mxu0
  %4456 = vmatprep.mubr.bf16.mxu0 0
  %4457 = vmatmul.mubr.bf16.gmra.mrb[0].mxu0 %v4269
  %v4458 = vpop.f32.mrb[0].mxu0
  %v4459 = vadd.f32 0.0, %v4458
  %v4460 = vpop.f32.mrb[0].mxu0
  %v4461 = vpop.f32.mrb[0].mxu0
  %v4462 = vadd.f32 0.0, %v4461
  %v4463 = vpop.f32.mrb[0].mxu0
  %4464 = vmatprep.mubr.bf16.mxu0 0
  %4465 = vmatmul.mubr.bf16.gmra.mrb[0].mxu0 %v4270
  %v4466 = vpop.f32.mrb[0].mxu0
  %v4467 = vadd.f32 0.0, %v4466
  %v4468 = vpop.f32.mrb[0].mxu0
  %v4469 = vpop.f32.mrb[0].mxu0
  %v4470 = vadd.f32 0.0, %v4469
  %v4471 = vpop.f32.mrb[0].mxu0
  %4472 = vmatprep.mubr.bf16.mxu0 0
  %4473 = vmatmul.mubr.bf16.gmra.mrb[0].mxu0 %v4271
  %v4474 = vpop.f32.mrb[0].mxu0
  %v4475 = vadd.f32 0.0, %v4474
  %v4476 = vpop.f32.mrb[0].mxu0
  %v4477 = vpop.f32.mrb[0].mxu0
  %v4478 = vadd.f32 0.0, %v4477
  %v4479 = vpop.f32.mrb[0].mxu0
  %4480 = vdwg.mxu0
  %v4497 = vunpack.c.l.b16 %v3855
  %v4498 = vunpack.c.l.b16 %v3856
  %v4499 = vunpack.c.l.b16 %v3857
  %v4500 = vunpack.c.l.b16 %v3858
  %v4501 = vunpack.c.l.b16 %v3859
  %v4502 = vunpack.c.l.b16 %v3860
  %v4503 = vunpack.c.l.b16 %v3861
  %v4504 = vunpack.c.l.b16 %v3862
  %v4505 = vunpack.c.l.b16 %v3863
  %v4506 = vunpack.c.l.b16 %v3864
  %v4507 = vunpack.c.l.b16 %v3865
  %v4508 = vunpack.c.l.b16 %v3866
  %v4509 = vunpack.c.l.b16 %v3867
  %v4510 = vunpack.c.l.b16 %v3868
  %v4511 = vunpack.c.l.b16 %v3869
  %v4512 = vunpack.c.l.b16 %v3870
  %v4513 = vpack.c.b16 %v4498, %v4497
  %v4514 = vpack.c.b16 %v4500, %v4499
  %v4515 = vpack.c.b16 %v4502, %v4501
  %v4516 = vpack.c.b16 %v4504, %v4503
  %v4517 = vpack.c.b16 %v4506, %v4505
  %v4518 = vpack.c.b16 %v4508, %v4507
  %v4519 = vpack.c.b16 %v4510, %v4509
  %v4520 = vpack.c.b16 %v4512, %v4511
  %4529 = vmatprep.subr.bf16.mxu0 0
  %4530 = vmatpush1.bf16.msra.mxu0 %v4513
  %4531 = vmatprep.subr.bf16.mxu0 0
  %4532 = vmatpush1.bf16.msra.mxu0 %v4514
  %4533 = vmatprep.subr.bf16.mxu0 0
  %4534 = vmatpush1.bf16.msra.mxu0 %v4515
  %4535 = vmatprep.subr.bf16.mxu0 0
  %4536 = vmatpush1.bf16.msra.mxu0 %v4516
  %4537 = vmatprep.subr.bf16.mxu0 0
  %4538 = vmatpush1.bf16.msra.mxu0 %v4517
  %4539 = vmatprep.subr.bf16.mxu0 0
  %4540 = vmatpush1.bf16.msra.mxu0 %v4518
  %4541 = vmatprep.subr.bf16.mxu0 0
  %4542 = vmatpush1.bf16.msra.mxu0 %v4519
  %4543 = vmatprep.subr.bf16.mxu0 0
  %4544 = vmatpush1.bf16.msra.mxu0 %v4520
  %4545 = vmatprep.subr.bf16.mxu0 0
  %4546 = vmatpush1.bf16.msra.mxu0 0
  %4547 = vmatprep.subr.bf16.mxu0 0
  %4548 = vmatpush1.bf16.msra.mxu0 0
  %4549 = vmatprep.subr.bf16.mxu0 0
  %4550 = vmatpush1.bf16.msra.mxu0 0
  %4551 = vmatprep.subr.bf16.mxu0 0
  %4552 = vmatpush1.bf16.msra.mxu0 0
  %4553 = vmatprep.subr.bf16.mxu0 0
  %4554 = vmatpush1.bf16.msra.mxu0 0
  %4555 = vmatprep.subr.bf16.mxu0 0
  %4556 = vmatpush1.bf16.msra.mxu0 0
  %4557 = vmatprep.subr.bf16.mxu0 0
  %4558 = vmatpush1.bf16.msra.mxu0 0
  %4559 = vmatprep.subr.bf16.mxu0 0
  %4560 = vmatpush1.bf16.msra.mxu0 0
  %4561 = vmatprep.mubr.bf16.mxu0 0
  %4562 = vmatmul.mubr.bf16.gmra.mrb[0].mxu0 %v4208
  %v4563 = vpop.f32.mrb[0].mxu0
  %v4564 = vadd.f32 %v4355, %v4563
  %v4565 = vpop.f32.mrb[0].mxu0
  %v4566 = vpop.f32.mrb[0].mxu0
  %v4567 = vadd.f32 %v4358, %v4566
  %v4568 = vpop.f32.mrb[0].mxu0
  %4569 = vmatprep.mubr.bf16.mxu0 0
  %4570 = vmatmul.mubr.bf16.gmra.mrb[0].mxu0 %v4209
  %v4571 = vpop.f32.mrb[0].mxu0
  %v4572 = vadd.f32 %v4363, %v4571
  %v4573 = vpop.f32.mrb[0].mxu0
  %v4574 = vpop.f32.mrb[0].mxu0
  %v4575 = vadd.f32 %v4366, %v4574
  %v4576 = vpop.f32.mrb[0].mxu0
  %4577 = vmatprep.mubr.bf16.mxu0 0
  %4578 = vmatmul.mubr.bf16.gmra.mrb[0].mxu0 %v4210
  %v4579 = vpop.f32.mrb[0].mxu0
  %v4580 = vadd.f32 %v4371, %v4579
  %v4581 = vpop.f32.mrb[0].mxu0
  %v4582 = vpop.f32.mrb[0].mxu0
  %v4583 = vadd.f32 %v4374, %v4582
  %v4584 = vpop.f32.mrb[0].mxu0
  %4585 = vmatprep.mubr.bf16.mxu0 0
  %4586 = vmatmul.mubr.bf16.gmra.mrb[0].mxu0 %v4211
  %v4587 = vpop.f32.mrb[0].mxu0
  %v4588 = vadd.f32 %v4379, %v4587
  %v4589 = vpop.f32.mrb[0].mxu0
  %v4590 = vpop.f32.mrb[0].mxu0
  %v4591 = vadd.f32 %v4382, %v4590
  %v4592 = vpop.f32.mrb[0].mxu0
  %4593 = vmatprep.mubr.bf16.mxu0 0
  %4594 = vmatmul.mubr.bf16.gmra.mrb[0].mxu0 %v4212
  %v4595 = vpop.f32.mrb[0].mxu0
  %v4596 = vadd.f32 %v4387, %v4595
  %v4597 = vpop.f32.mrb[0].mxu0
  %v4598 = vpop.f32.mrb[0].mxu0
  %v4599 = vadd.f32 %v4390, %v4598
  %v4600 = vpop.f32.mrb[0].mxu0
  %4601 = vmatprep.mubr.bf16.mxu0 0
  %4602 = vmatmul.mubr.bf16.gmra.mrb[0].mxu0 %v4213
  %v4603 = vpop.f32.mrb[0].mxu0
  %v4604 = vadd.f32 %v4395, %v4603
  %v4605 = vpop.f32.mrb[0].mxu0
  %v4606 = vpop.f32.mrb[0].mxu0
  %v4607 = vadd.f32 %v4398, %v4606
  %v4608 = vpop.f32.mrb[0].mxu0
  %4609 = vmatprep.mubr.bf16.mxu0 0
  %4610 = vmatmul.mubr.bf16.gmra.mrb[0].mxu0 %v4214
  %v4611 = vpop.f32.mrb[0].mxu0
  %v4612 = vadd.f32 %v4403, %v4611
  %v4613 = vpop.f32.mrb[0].mxu0
  %v4614 = vpop.f32.mrb[0].mxu0
  %v4615 = vadd.f32 %v4406, %v4614
  %v4616 = vpop.f32.mrb[0].mxu0
  %4617 = vmatprep.mubr.bf16.mxu0 0
  %4618 = vmatmul.mubr.bf16.gmra.mrb[0].mxu0 %v4215
  %v4619 = vpop.f32.mrb[0].mxu0
  %v4620 = vadd.f32 %v4411, %v4619
  %v4621 = vpop.f32.mrb[0].mxu0
  %v4622 = vpop.f32.mrb[0].mxu0
  %v4623 = vadd.f32 %v4414, %v4622
  %v4624 = vpop.f32.mrb[0].mxu0
  %4625 = vmatprep.mubr.bf16.mxu0 0
  %4626 = vmatmul.mubr.bf16.gmra.mrb[0].mxu0 %v4216
  %v4627 = vpop.f32.mrb[0].mxu0
  %v4628 = vadd.f32 %v4419, %v4627
  %v4629 = vpop.f32.mrb[0].mxu0
  %v4630 = vpop.f32.mrb[0].mxu0
  %v4631 = vadd.f32 %v4422, %v4630
  %v4632 = vpop.f32.mrb[0].mxu0
  %4633 = vmatprep.mubr.bf16.mxu0 0
  %4634 = vmatmul.mubr.bf16.gmra.mrb[0].mxu0 %v4217
  %v4635 = vpop.f32.mrb[0].mxu0
  %v4636 = vadd.f32 %v4427, %v4635
  %v4637 = vpop.f32.mrb[0].mxu0
  %v4638 = vpop.f32.mrb[0].mxu0
  %v4639 = vadd.f32 %v4430, %v4638
  %v4640 = vpop.f32.mrb[0].mxu0
  %4641 = vmatprep.mubr.bf16.mxu0 0
  %4642 = vmatmul.mubr.bf16.gmra.mrb[0].mxu0 %v4218
  %v4643 = vpop.f32.mrb[0].mxu0
  %v4644 = vadd.f32 %v4435, %v4643
  %v4645 = vpop.f32.mrb[0].mxu0
  %v4646 = vpop.f32.mrb[0].mxu0
  %v4647 = vadd.f32 %v4438, %v4646
  %v4648 = vpop.f32.mrb[0].mxu0
  %4649 = vmatprep.mubr.bf16.mxu0 0
  %4650 = vmatmul.mubr.bf16.gmra.mrb[0].mxu0 %v4219
  %v4651 = vpop.f32.mrb[0].mxu0
  %v4652 = vadd.f32 %v4443, %v4651
  %v4653 = vpop.f32.mrb[0].mxu0
  %v4654 = vpop.f32.mrb[0].mxu0
  %v4655 = vadd.f32 %v4446, %v4654
  %v4656 = vpop.f32.mrb[0].mxu0
  %4657 = vmatprep.mubr.bf16.mxu0 0
  %4658 = vmatmul.mubr.bf16.gmra.mrb[0].mxu0 %v4220
  %v4659 = vpop.f32.mrb[0].mxu0
  %v4660 = vadd.f32 %v4451, %v4659
  %v4661 = vpop.f32.mrb[0].mxu0
  %v4662 = vpop.f32.mrb[0].mxu0
  %v4663 = vadd.f32 %v4454, %v4662
  %v4664 = vpop.f32.mrb[0].mxu0
  %4665 = vmatprep.mubr.bf16.mxu0 0
  %4666 = vmatmul.mubr.bf16.gmra.mrb[0].mxu0 %v4221
  %v4667 = vpop.f32.mrb[0].mxu0
  %v4668 = vadd.f32 %v4459, %v4667
  %v4669 = vpop.f32.mrb[0].mxu0
  %v4670 = vpop.f32.mrb[0].mxu0
  %v4671 = vadd.f32 %v4462, %v4670
  %v4672 = vpop.f32.mrb[0].mxu0
  %4673 = vmatprep.mubr.bf16.mxu0 0
  %4674 = vmatmul.mubr.bf16.gmra.mrb[0].mxu0 %v4222
  %v4675 = vpop.f32.mrb[0].mxu0
  %v4676 = vadd.f32 %v4467, %v4675
  %v4677 = vpop.f32.mrb[0].mxu0
  %v4678 = vpop.f32.mrb[0].mxu0
  %v4679 = vadd.f32 %v4470, %v4678
  %v4680 = vpop.f32.mrb[0].mxu0
  %4681 = vmatprep.mubr.bf16.mxu0 0
  %4682 = vmatmul.mubr.bf16.gmra.mrb[0].mxu0 %v4223
  %v4683 = vpop.f32.mrb[0].mxu0
  %v4684 = vadd.f32 %v4475, %v4683
  %v4685 = vpop.f32.mrb[0].mxu0
  %v4686 = vpop.f32.mrb[0].mxu0
  %v4687 = vadd.f32 %v4478, %v4686
  %v4688 = vpop.f32.mrb[0].mxu0
  %4689 = vdwg.mxu0
  %v4691 = vlaneseq
  %v4692 = vshrl.u32 %v4691, 7
  %v4693 = vsub.s32 0, %v4692
  %v4694 = vrot.slane %v3887, %v4693
  %v4696 = vadd.f32 %v4564, %v4694
  %v4697 = vadd.f32 %v4567, %v4694
  %v4698 = vadd.f32 %v4572, %v4694
  %v4699 = vadd.f32 %v4575, %v4694
  %v4700 = vadd.f32 %v4580, %v4694
  %v4701 = vadd.f32 %v4583, %v4694
  %v4702 = vadd.f32 %v4588, %v4694
  %v4703 = vadd.f32 %v4591, %v4694
  %v4704 = vadd.f32 %v4596, %v4694
  %v4705 = vadd.f32 %v4599, %v4694
  %v4706 = vadd.f32 %v4604, %v4694
  %v4707 = vadd.f32 %v4607, %v4694
  %v4708 = vadd.f32 %v4612, %v4694
  %v4709 = vadd.f32 %v4615, %v4694
  %v4710 = vadd.f32 %v4620, %v4694
  %v4711 = vadd.f32 %v4623, %v4694
  %v4712 = vadd.f32 %v4628, %v4694
  %v4713 = vadd.f32 %v4631, %v4694
  %v4714 = vadd.f32 %v4636, %v4694
  %v4715 = vadd.f32 %v4639, %v4694
  %v4716 = vadd.f32 %v4644, %v4694
  %v4717 = vadd.f32 %v4647, %v4694
  %v4718 = vadd.f32 %v4652, %v4694
  %v4719 = vadd.f32 %v4655, %v4694
  %v4720 = vadd.f32 %v4660, %v4694
  %v4721 = vadd.f32 %v4663, %v4694
  %v4722 = vadd.f32 %v4668, %v4694
  %v4723 = vadd.f32 %v4671, %v4694
  %v4724 = vadd.f32 %v4676, %v4694
  %v4725 = vadd.f32 %v4679, %v4694
  %v4726 = vadd.f32 %v4684, %v4694
  %v4727 = vadd.f32 %v4687, %v4694
  %4728 = vst [vmem:[%s20] sm:$0xff] %v4696
  %4729 = vst [vmem:[%s20 + $0x8] sm:$0xff] %v4697
  %4730 = vst [vmem:[%s20 + $0x10] sm:$0xff] %v4698
  %4731 = vst [vmem:[%s20 + $0x18] sm:$0xff] %v4699
  %4732 = vst [vmem:[%s20 + $0x20] sm:$0xff] %v4700
  %4733 = vst [vmem:[%s20 + $0x28] sm:$0xff] %v4701
  %4734 = vst [vmem:[%s20 + $0x30] sm:$0xff] %v4702
  %4735 = vst [vmem:[%s20 + $0x38] sm:$0xff] %v4703
  %4736 = vst [vmem:[%s20 + $0x40] sm:$0xff] %v4704
  %4737 = vst [vmem:[%s20 + $0x48] sm:$0xff] %v4705
  %4738 = vst [vmem:[%s20 + $0x50] sm:$0xff] %v4706
  %4739 = vst [vmem:[%s20 + $0x58] sm:$0xff] %v4707
  %4740 = vst [vmem:[%s20 + $0x60] sm:$0xff] %v4708
  %4741 = vst [vmem:[%s20 + $0x68] sm:$0xff] %v4709
  %4742 = vst [vmem:[%s20 + $0x70] sm:$0xff] %v4710
  %4743 = vst [vmem:[%s20 + $0x78] sm:$0xff] %v4711
  %4744 = vst [vmem:[%s20 + $0x80] sm:$0xff] %v4712
  %4745 = vst [vmem:[%s20 + $0x88] sm:$0xff] %v4713
  %4746 = vst [vmem:[%s20 + $0x90] sm:$0xff] %v4714
  %4747 = vst [vmem:[%s20 + $0x98] sm:$0xff] %v4715
  %4748 = vst [vmem:[%s20 + $0xa0] sm:$0xff] %v4716
  %4749 = vst [vmem:[%s20 + $0xa8] sm:$0xff] %v4717
  %4750 = vst [vmem:[%s20 + $0xb0] sm:$0xff] %v4718
  %4751 = vst [vmem:[%s20 + $0xb8] sm:$0xff] %v4719
  %4752 = vst [vmem:[%s20 + $0xc0] sm:$0xff] %v4720
  %4753 = vst [vmem:[%s20 + $0xc8] sm:$0xff] %v4721
  %4754 = vst [vmem:[%s20 + $0xd0] sm:$0xff] %v4722
  %4755 = vst [vmem:[%s20 + $0xd8] sm:$0xff] %v4723
  %4756 = vst [vmem:[%s20 + $0xe0] sm:$0xff] %v4724
  %4757 = vst [vmem:[%s20 + $0xe8] sm:$0xff] %v4725
  %4758 = vst [vmem:[%s20 + $0xf0] sm:$0xff] %v4726
  %4759 = vst [vmem:[%s20 + $0xf8] sm:$0xff] %v4727
  // Predicated region
  $region82: #{graphsaint_forward.1} parent=0 // pred_check
    _
  $region83: #{graphsaint_forward.1} parent=0 // pred_check_branch
    %4761 = sbr.rel (0) target = $region85
  $region84: #{graphsaint_forward.1} parent=0 // pred_region
    _
  $region85: #{graphsaint_forward.1} parent=0 // pred_fallthru
    _
  // Predicated region
  $region86: #{graphsaint_forward.1} parent=0 // pred_check
    _
  $region87: #{graphsaint_forward.1} parent=0 // pred_check_branch
    %4763 = sbr.rel (0) target = $region89
  $region88: #{graphsaint_forward.1} parent=0 // pred_region
    _
  $region89: #{graphsaint_forward.1} parent=0 // pred_fallthru
    _

</llo_original>
